<compile_context>
chip_gen: v6e
topology: v6e:2x2x1
jax: 0.10.0
libtpu: 0.0.40
codegen_flags: <defaults>
</compile_context>

<pallas_src>
import math

import jax
import jax.numpy as jnp
from jax.experimental import pallas as pl
from jax.experimental.pallas import tpu as pltpu

GATE_PAD = 128  # lane-aligned per-gate width (>= hidden_size)


def gru_decoder_kernel(x0_ref, h0_ref, wi_ref, wh_ref, bi_ref, bh_ref,
                       wfc_ref, bfc_ref, out_ref):
    """Whole GRU-decoder recurrence in one kernel invocation.

    Refs (all VMEM, f32):
      x0_ref : [B, I]        initial decoder input
      h0_ref : [B, HP]       initial hidden state, zero-padded H -> HP = 128
      wi_ref : [I, 3*HP]     fused input-to-hidden weights  (r | z | n), lane-padded
      wh_ref : [HP, 3*HP]    fused hidden-to-hidden weights (r | z | n), padded
      bi_ref : [1, 3*HP]     r/z blocks hold b_ir+b_hr and b_iz+b_hz; n block b_in
      bh_ref : [1, 3*HP]     r/z blocks are zero; n block holds b_hn
      wfc_ref: [HP, I]       fc weight, transposed, rows zero-padded
      bfc_ref: [1, I]        fc bias
      out_ref: [S, B, I]     decoder outputs, already in reversed order
    """
    seq_len = out_ref.shape[0]
    hp = h0_ref.shape[1]

    x = x0_ref[...]
    h = h0_ref[...]

    # Static unroll: seq_len is a compile-time constant.
    for step in range(seq_len):
        # Two fused gate matmuls per step instead of six.
        gi = jnp.dot(x, wi_ref[...], preferred_element_type=jnp.float32) + bi_ref[...]
        gh = jnp.dot(h, wh_ref[...], preferred_element_type=jnp.float32) + bh_ref[...]
        # Lane-aligned 128-wide gate slices, gate order (r, z, n) — PyTorch GRUCell:
        #   r  = sigmoid(x W_ir + b_ir + h W_hr + b_hr)
        #   z  = sigmoid(x W_iz + b_iz + h W_hz + b_hz)
        #   n  = tanh  (x W_in + b_in + r * (h W_hn + b_hn))
        #   h' = (1 - z) * n + z * h
        r = jax.nn.sigmoid(gi[:, 0 * hp:1 * hp] + gh[:, 0 * hp:1 * hp])
        z = jax.nn.sigmoid(gi[:, 1 * hp:2 * hp] + gh[:, 1 * hp:2 * hp])
        n = jnp.tanh(gi[:, 2 * hp:3 * hp] + r * gh[:, 2 * hp:3 * hp])
        h = (1.0 - z) * n + z * h                         # padded lanes stay 0
        # fc: hidden_size -> input_size; becomes next step's input.
        x = jnp.dot(h, wfc_ref[...], preferred_element_type=jnp.float32) + bfc_ref[...]
        # dec_outputs[::-1]: step `step` lands at static index seq_len-1-step.
        out_ref[seq_len - 1 - step] = x.astype(out_ref.dtype)


def gru_decoder(inputs, h_0, seq_len, kernel_params):
    """Pallas wrapper. Returns [batch, seq_len, input_size] (same as PyTorch)."""
    B, I = inputs.shape
    wi, wh, bi, bh, wfc, bfc = kernel_params
    HP = wh.shape[0]
    h0_p = jnp.pad(h_0, ((0, 0), (0, HP - h_0.shape[1])))
    vmem = pl.BlockSpec(memory_space=pltpu.MemorySpace.VMEM)
    out = pl.pallas_call(
        gru_decoder_kernel,
        out_shape=jax.ShapeDtypeStruct((seq_len, B, I), jnp.float32),
        in_specs=[vmem] * 8,
        out_specs=vmem,
    )(inputs, h0_p, wi, wh, bi, bh, wfc, bfc)
    # TODO(synk): for many independent decoders (HSML multi-task) add a leading
    # grid axis with dimension_semantics=("parallel", ...) to use both v7x TCs.
    return jnp.transpose(out, (1, 0, 2))


def init_params(key, input_size, hidden_size):
    """Deterministic init mimicking nn.GRUCell / nn.Linear default uniform init.

    Returns PyTorch-layout params:
      weight_ih [3H, I], weight_hh [3H, H], bias_ih [3H], bias_hh [3H],
      fc_weight [I, H], fc_bias [I], gate order (r, z, n).
    """
    k = jax.random.split(key, 6)
    bound = 1.0 / math.sqrt(hidden_size)
    weight_ih = jax.random.uniform(k[0], (3 * hidden_size, input_size),
                                   jnp.float32, -bound, bound)
    weight_hh = jax.random.uniform(k[1], (3 * hidden_size, hidden_size),
                                   jnp.float32, -bound, bound)
    bias_ih = jax.random.uniform(k[2], (3 * hidden_size,), jnp.float32,
                                 -bound, bound)
    bias_hh = jax.random.uniform(k[3], (3 * hidden_size,), jnp.float32,
                                 -bound, bound)
    fc_weight = jax.random.uniform(k[4], (input_size, hidden_size), jnp.float32,
                                   -bound, bound)
    fc_bias = jax.random.uniform(k[5], (input_size,), jnp.float32,
                                 -bound, bound)
    return (weight_ih, weight_hh, bias_ih, bias_hh, fc_weight, fc_bias)


def pack_params(torch_style, input_size, hidden_size, gate_pad=GATE_PAD):
    """Repack PyTorch-layout params into the fused, lane-padded kernel layout."""
    weight_ih, weight_hh, bias_ih, bias_hh, fc_weight, fc_bias = torch_style
    H, HP = hidden_size, gate_pad
    assert HP >= H and HP % 128 == 0

    def gate(w, g):            # [3H, cols] -> transposed gate block [cols, H]
        return w[g * H:(g + 1) * H].T

    def pad_cols(w):           # [rows, H] -> [rows, HP]
        return jnp.pad(w, ((0, 0), (0, HP - H)))

    def pad_vec(v):            # [H] -> [HP]
        return jnp.pad(v, (0, HP - H))

    # Fused input-to-hidden weights: [I, 3*HP], gate order (r, z, n).
    wi = jnp.concatenate([pad_cols(gate(weight_ih, g)) for g in range(3)], axis=1)
    # Fused hidden-to-hidden weights: [HP, 3*HP] (rows beyond H are zero).
    wh = jnp.concatenate([pad_cols(gate(weight_hh, g)) for g in range(3)], axis=1)
    wh = jnp.pad(wh, ((0, HP - H), (0, 0)))
    # Biases: pre-fuse r/z input+hidden biases; keep n-gate hidden bias separate.
    b_i = [bias_ih[g * H:(g + 1) * H] for g in range(3)]
    b_h = [bias_hh[g * H:(g + 1) * H] for g in range(3)]
    bi = jnp.concatenate([pad_vec(b_i[0] + b_h[0]),
                          pad_vec(b_i[1] + b_h[1]),
                          pad_vec(b_i[2])]).reshape(1, 3 * HP)
    bh = jnp.concatenate([jnp.zeros((2 * HP,), jnp.float32),
                          pad_vec(b_h[2])]).reshape(1, 3 * HP)
    # fc weight transposed, rows padded: [HP, I].
    wfc = jnp.pad(fc_weight.T, ((0, HP - H), (0, 0)))
    bfc = fc_bias.reshape(1, input_size)
    return (wi, wh, bi, bh, wfc, bfc)


def gru_decoder_reference(inputs, h_0, seq_len, torch_style):
    """Pure-JAX reference reproducing the PyTorch forward exactly."""
    weight_ih, weight_hh, bias_ih, bias_hh, fc_weight, fc_bias = torch_style
    H = h_0.shape[1]
    x, h = inputs, h_0
    outs = []
    for _ in range(seq_len):
        gi = x @ weight_ih.T + bias_ih
        gh = h @ weight_hh.T + bias_hh
        i_r, i_z, i_n = gi[:, :H], gi[:, H:2 * H], gi[:, 2 * H:]
        h_r, h_z, h_n = gh[:, :H], gh[:, H:2 * H], gh[:, 2 * H:]
        r = jax.nn.sigmoid(i_r + h_r)
        z = jax.nn.sigmoid(i_z + h_z)
        n = jnp.tanh(i_n + r * h_n)
        h = (1.0 - z) * n + z * h
        x = x = h @ fc_weight.T + fc_bias
        outs.append(x)
    outs = outs[::-1]
    return jnp.stack(outs, axis=1)


if __name__ == "__main__":
    batch = 2
    input_size = 32    # corresponds to N + 64 in the paper (small here)
    hidden_size = 64
    seq_len = 8        # NK

    key = jax.random.PRNGKey(0)
    kp, kx, kh = jax.random.split(key, 3)
    torch_style = init_params(kp, input_size, hidden_size)
    kernel_params = pack_params(torch_style, input_size, hidden_size)

    # Typically torch.zeros as init input; use random to exercise all paths.
    inputs = jax.random.normal(kx, (batch, input_size), jnp.float32)
    h_0 = jax.random.normal(kh, (batch, hidden_size), jnp.float32)

    out = gru_decoder(inputs, h_0, seq_len, kernel_params)
    out = jax.block_until_ready(out)

    ref = gru_decoder_reference(inputs, h_0, seq_len, torch_style)
    assert out.shape == (batch, seq_len, input_size), out.shape
    err = float(jnp.max(jnp.abs(out - ref)))
    assert jnp.allclose(out, ref, atol=1e-5, rtol=1e-5), err

    print("KERNEL_OK")
</pallas_src>

<mosaic_0001>
module attributes {stable_mosaic.version = 11 : i64} {
  func.func @gru_decoder_kernel(%arg0: memref<2x32xf32, #tpu.memory_space<vmem>>, %arg1: memref<2x128xf32, #tpu.memory_space<vmem>>, %arg2: memref<32x384xf32, #tpu.memory_space<vmem>>, %arg3: memref<128x384xf32, #tpu.memory_space<vmem>>, %arg4: memref<1x384xf32, #tpu.memory_space<vmem>>, %arg5: memref<1x384xf32, #tpu.memory_space<vmem>>, %arg6: memref<128x32xf32, #tpu.memory_space<vmem>>, %arg7: memref<1x32xf32, #tpu.memory_space<vmem>>, %arg8: memref<8x2x32xf32, #tpu.memory_space<vmem>>) attributes {dimension_semantics = [], scalar_prefetch = 0 : i64, scratch_operands = 0 : i64, tpu.core_type = #tpu.core_type<tc>} {
    %c0 = arith.constant 0 : index
    %c0_0 = arith.constant 0 : index
    %0 = vector.load %arg0[%c0, %c0_0] : memref<2x32xf32, #tpu.memory_space<vmem>>, vector<2x32xf32>
    %c0_1 = arith.constant 0 : index
    %c0_2 = arith.constant 0 : index
    %1 = vector.load %arg1[%c0_1, %c0_2] : memref<2x128xf32, #tpu.memory_space<vmem>>, vector<2x128xf32>
    %c0_3 = arith.constant 0 : index
    %c0_4 = arith.constant 0 : index
    %2 = vector.load %arg2[%c0_3, %c0_4] : memref<32x384xf32, #tpu.memory_space<vmem>>, vector<32x384xf32>
    %cst = arith.constant dense<0.000000e+00> : vector<2x384xf32>
    %3 = tpu.matmul %0, %2, %cst {dimension_numbers = #tpu.dot_dimension_numbers<[1], [0], [0], [1], [0, 0, 1, 1], [], []>} : vector<2x32xf32>, vector<32x384xf32>, vector<2x384xf32> -> vector<2x384xf32>
    %c0_5 = arith.constant 0 : index
    %c0_6 = arith.constant 0 : index
    %4 = vector.load %arg4[%c0_5, %c0_6] : memref<1x384xf32, #tpu.memory_space<vmem>>, vector<1x384xf32>
    %5 = vector.broadcast %4 : vector<1x384xf32> to vector<2x384xf32>
    %6 = arith.addf %3, %5 : vector<2x384xf32>
    %c0_7 = arith.constant 0 : index
    %c0_8 = arith.constant 0 : index
    %7 = vector.load %arg3[%c0_7, %c0_8] : memref<128x384xf32, #tpu.memory_space<vmem>>, vector<128x384xf32>
    %cst_9 = arith.constant dense<0.000000e+00> : vector<2x384xf32>
    %8 = tpu.matmul %1, %7, %cst_9 {dimension_numbers = #tpu.dot_dimension_numbers<[1], [0], [0], [1], [0, 0, 1, 1], [], []>} : vector<2x128xf32>, vector<128x384xf32>, vector<2x384xf32> -> vector<2x384xf32>
    %c0_10 = arith.constant 0 : index
    %c0_11 = arith.constant 0 : index
    %9 = vector.load %arg5[%c0_10, %c0_11] : memref<1x384xf32, #tpu.memory_space<vmem>>, vector<1x384xf32>
    %10 = vector.broadcast %9 : vector<1x384xf32> to vector<2x384xf32>
    %11 = arith.addf %8, %10 : vector<2x384xf32>
    %12 = vector.extract_strided_slice %6 {offsets = [0, 0], sizes = [2, 128], strides = [1, 1]} : vector<2x384xf32> to vector<2x128xf32>
    %13 = vector.extract_strided_slice %11 {offsets = [0, 0], sizes = [2, 128], strides = [1, 1]} : vector<2x384xf32> to vector<2x128xf32>
    %14 = arith.addf %12, %13 : vector<2x128xf32>
    %15 = arith.negf %14 : vector<2x128xf32>
    %16 = math.exp %15 : vector<2x128xf32>
    %cst_12 = arith.constant 1.000000e+00 : f32
    %17 = vector.broadcast %cst_12 : f32 to vector<2x128xf32>
    %18 = arith.addf %17, %16 : vector<2x128xf32>
    %19 = arith.divf %17, %18 : vector<2x128xf32>
    %20 = vector.extract_strided_slice %6 {offsets = [0, 128], sizes = [2, 128], strides = [1, 1]} : vector<2x384xf32> to vector<2x128xf32>
    %21 = vector.extract_strided_slice %11 {offsets = [0, 128], sizes = [2, 128], strides = [1, 1]} : vector<2x384xf32> to vector<2x128xf32>
    %22 = arith.addf %20, %21 : vector<2x128xf32>
    %23 = arith.negf %22 : vector<2x128xf32>
    %24 = math.exp %23 : vector<2x128xf32>
    %cst_13 = arith.constant 1.000000e+00 : f32
    %25 = vector.broadcast %cst_13 : f32 to vector<2x128xf32>
    %26 = arith.addf %25, %24 : vector<2x128xf32>
    %27 = arith.divf %25, %26 : vector<2x128xf32>
    %28 = vector.extract_strided_slice %6 {offsets = [0, 256], sizes = [2, 128], strides = [1, 1]} : vector<2x384xf32> to vector<2x128xf32>
    %29 = vector.extract_strided_slice %11 {offsets = [0, 256], sizes = [2, 128], strides = [1, 1]} : vector<2x384xf32> to vector<2x128xf32>
    %30 = arith.mulf %19, %29 : vector<2x128xf32>
    %31 = arith.addf %28, %30 : vector<2x128xf32>
    %32 = math.tanh %31 : vector<2x128xf32>
    %cst_14 = arith.constant 1.000000e+00 : f32
    %33 = vector.broadcast %cst_14 : f32 to vector<2x128xf32>
    %34 = arith.subf %33, %27 : vector<2x128xf32>
    %35 = arith.mulf %34, %32 : vector<2x128xf32>
    %36 = arith.mulf %27, %1 : vector<2x128xf32>
    %37 = arith.addf %35, %36 : vector<2x128xf32>
    %c0_15 = arith.constant 0 : index
    %c0_16 = arith.constant 0 : index
    %38 = vector.load %arg6[%c0_15, %c0_16] : memref<128x32xf32, #tpu.memory_space<vmem>>, vector<128x32xf32>
    %cst_17 = arith.constant dense<0.000000e+00> : vector<2x32xf32>
    %39 = tpu.matmul %37, %38, %cst_17 {dimension_numbers = #tpu.dot_dimension_numbers<[1], [0], [0], [1], [0, 0, 1, 1], [], []>} : vector<2x128xf32>, vector<128x32xf32>, vector<2x32xf32> -> vector<2x32xf32>
    %c0_18 = arith.constant 0 : index
    %c0_19 = arith.constant 0 : index
    %40 = vector.load %arg7[%c0_18, %c0_19] : memref<1x32xf32, #tpu.memory_space<vmem>>, vector<1x32xf32>
    %41 = vector.broadcast %40 : vector<1x32xf32> to vector<2x32xf32>
    %42 = arith.addf %39, %41 : vector<2x32xf32>
    %c7 = arith.constant 7 : index
    %c0_20 = arith.constant 0 : index
    %c0_21 = arith.constant 0 : index
    %43 = vector.load %arg8[%c7, %c0_20, %c0_21] : memref<8x2x32xf32, #tpu.memory_space<vmem>>, vector<1x2x32xf32>
    %44 = vector.shape_cast %43 : vector<1x2x32xf32> to vector<2x32xf32>
    %45 = vector.shape_cast %42 : vector<2x32xf32> to vector<1x2x32xf32>
    tpu.vector_store %arg8[%c7, %c0_20, %c0_21], %45 {strides = array<i32>} : memref<8x2x32xf32, #tpu.memory_space<vmem>>, vector<1x2x32xf32>,
    %c0_22 = arith.constant 0 : index
    %c0_23 = arith.constant 0 : index
    %46 = vector.load %arg2[%c0_22, %c0_23] : memref<32x384xf32, #tpu.memory_space<vmem>>, vector<32x384xf32>
    %cst_24 = arith.constant dense<0.000000e+00> : vector<2x384xf32>
    %47 = tpu.matmul %42, %46, %cst_24 {dimension_numbers = #tpu.dot_dimension_numbers<[1], [0], [0], [1], [0, 0, 1, 1], [], []>} : vector<2x32xf32>, vector<32x384xf32>, vector<2x384xf32> -> vector<2x384xf32>
    %c0_25 = arith.constant 0 : index
    %c0_26 = arith.constant 0 : index
    %48 = vector.load %arg4[%c0_25, %c0_26] : memref<1x384xf32, #tpu.memory_space<vmem>>, vector<1x384xf32>
    %49 = vector.broadcast %48 : vector<1x384xf32> to vector<2x384xf32>
    %50 = arith.addf %47, %49 : vector<2x384xf32>
    %c0_27 = arith.constant 0 : index
    %c0_28 = arith.constant 0 : index
    %51 = vector.load %arg3[%c0_27, %c0_28] : memref<128x384xf32, #tpu.memory_space<vmem>>, vector<128x384xf32>
    %cst_29 = arith.constant dense<0.000000e+00> : vector<2x384xf32>
    %52 = tpu.matmul %37, %51, %cst_29 {dimension_numbers = #tpu.dot_dimension_numbers<[1], [0], [0], [1], [0, 0, 1, 1], [], []>} : vector<2x128xf32>, vector<128x384xf32>, vector<2x384xf32> -> vector<2x384xf32>
    %c0_30 = arith.constant 0 : index
    %c0_31 = arith.constant 0 : index
    %53 = vector.load %arg5[%c0_30, %c0_31] : memref<1x384xf32, #tpu.memory_space<vmem>>, vector<1x384xf32>
    %54 = vector.broadcast %53 : vector<1x384xf32> to vector<2x384xf32>
    %55 = arith.addf %52, %54 : vector<2x384xf32>
    %56 = vector.extract_strided_slice %50 {offsets = [0, 0], sizes = [2, 128], strides = [1, 1]} : vector<2x384xf32> to vector<2x128xf32>
    %57 = vector.extract_strided_slice %55 {offsets = [0, 0], sizes = [2, 128], strides = [1, 1]} : vector<2x384xf32> to vector<2x128xf32>
    %58 = arith.addf %56, %57 : vector<2x128xf32>
    %59 = arith.negf %58 : vector<2x128xf32>
    %60 = math.exp %59 : vector<2x128xf32>
    %cst_32 = arith.constant 1.000000e+00 : f32
    %61 = vector.broadcast %cst_32 : f32 to vector<2x128xf32>
    %62 = arith.addf %61, %60 : vector<2x128xf32>
    %63 = arith.divf %61, %62 : vector<2x128xf32>
    %64 = vector.extract_strided_slice %50 {offsets = [0, 128], sizes = [2, 128], strides = [1, 1]} : vector<2x384xf32> to vector<2x128xf32>
    %65 = vector.extract_strided_slice %55 {offsets = [0, 128], sizes = [2, 128], strides = [1, 1]} : vector<2x384xf32> to vector<2x128xf32>
    %66 = arith.addf %64, %65 : vector<2x128xf32>
    %67 = arith.negf %66 : vector<2x128xf32>
    %68 = math.exp %67 : vector<2x128xf32>
    %cst_33 = arith.constant 1.000000e+00 : f32
    %69 = vector.broadcast %cst_33 : f32 to vector<2x128xf32>
    %70 = arith.addf %69, %68 : vector<2x128xf32>
    %71 = arith.divf %69, %70 : vector<2x128xf32>
    %72 = vector.extract_strided_slice %50 {offsets = [0, 256], sizes = [2, 128], strides = [1, 1]} : vector<2x384xf32> to vector<2x128xf32>
    %73 = vector.extract_strided_slice %55 {offsets = [0, 256], sizes = [2, 128], strides = [1, 1]} : vector<2x384xf32> to vector<2x128xf32>
    %74 = arith.mulf %63, %73 : vector<2x128xf32>
    %75 = arith.addf %72, %74 : vector<2x128xf32>
    %76 = math.tanh %75 : vector<2x128xf32>
    %cst_34 = arith.constant 1.000000e+00 : f32
    %77 = vector.broadcast %cst_34 : f32 to vector<2x128xf32>
    %78 = arith.subf %77, %71 : vector<2x128xf32>
    %79 = arith.mulf %78, %76 : vector<2x128xf32>
    %80 = arith.mulf %71, %37 : vector<2x128xf32>
    %81 = arith.addf %79, %80 : vector<2x128xf32>
    %c0_35 = arith.constant 0 : index
    %c0_36 = arith.constant 0 : index
    %82 = vector.load %arg6[%c0_35, %c0_36] : memref<128x32xf32, #tpu.memory_space<vmem>>, vector<128x32xf32>
    %cst_37 = arith.constant dense<0.000000e+00> : vector<2x32xf32>
    %83 = tpu.matmul %81, %82, %cst_37 {dimension_numbers = #tpu.dot_dimension_numbers<[1], [0], [0], [1], [0, 0, 1, 1], [], []>} : vector<2x128xf32>, vector<128x32xf32>, vector<2x32xf32> -> vector<2x32xf32>
    %c0_38 = arith.constant 0 : index
    %c0_39 = arith.constant 0 : index
    %84 = vector.load %arg7[%c0_38, %c0_39] : memref<1x32xf32, #tpu.memory_space<vmem>>, vector<1x32xf32>
    %85 = vector.broadcast %84 : vector<1x32xf32> to vector<2x32xf32>
    %86 = arith.addf %83, %85 : vector<2x32xf32>
    %c6 = arith.constant 6 : index
    %c0_40 = arith.constant 0 : index
    %c0_41 = arith.constant 0 : index
    %87 = vector.load %arg8[%c6, %c0_40, %c0_41] : memref<8x2x32xf32, #tpu.memory_space<vmem>>, vector<1x2x32xf32>
    %88 = vector.shape_cast %87 : vector<1x2x32xf32> to vector<2x32xf32>
    %89 = vector.shape_cast %86 : vector<2x32xf32> to vector<1x2x32xf32>
    tpu.vector_store %arg8[%c6, %c0_40, %c0_41], %89 {strides = array<i32>} : memref<8x2x32xf32, #tpu.memory_space<vmem>>, vector<1x2x32xf32>,
    %c0_42 = arith.constant 0 : index
    %c0_43 = arith.constant 0 : index
    %90 = vector.load %arg2[%c0_42, %c0_43] : memref<32x384xf32, #tpu.memory_space<vmem>>, vector<32x384xf32>
    %cst_44 = arith.constant dense<0.000000e+00> : vector<2x384xf32>
    %91 = tpu.matmul %86, %90, %cst_44 {dimension_numbers = #tpu.dot_dimension_numbers<[1], [0], [0], [1], [0, 0, 1, 1], [], []>} : vector<2x32xf32>, vector<32x384xf32>, vector<2x384xf32> -> vector<2x384xf32>
    %c0_45 = arith.constant 0 : index
    %c0_46 = arith.constant 0 : index
    %92 = vector.load %arg4[%c0_45, %c0_46] : memref<1x384xf32, #tpu.memory_space<vmem>>, vector<1x384xf32>
    %93 = vector.broadcast %92 : vector<1x384xf32> to vector<2x384xf32>
    %94 = arith.addf %91, %93 : vector<2x384xf32>
    %c0_47 = arith.constant 0 : index
    %c0_48 = arith.constant 0 : index
    %95 = vector.load %arg3[%c0_47, %c0_48] : memref<128x384xf32, #tpu.memory_space<vmem>>, vector<128x384xf32>
    %cst_49 = arith.constant dense<0.000000e+00> : vector<2x384xf32>
    %96 = tpu.matmul %81, %95, %cst_49 {dimension_numbers = #tpu.dot_dimension_numbers<[1], [0], [0], [1], [0, 0, 1, 1], [], []>} : vector<2x128xf32>, vector<128x384xf32>, vector<2x384xf32> -> vector<2x384xf32>
    %c0_50 = arith.constant 0 : index
    %c0_51 = arith.constant 0 : index
    %97 = vector.load %arg5[%c0_50, %c0_51] : memref<1x384xf32, #tpu.memory_space<vmem>>, vector<1x384xf32>
    %98 = vector.broadcast %97 : vector<1x384xf32> to vector<2x384xf32>
    %99 = arith.addf %96, %98 : vector<2x384xf32>
    %100 = vector.extract_strided_slice %94 {offsets = [0, 0], sizes = [2, 128], strides = [1, 1]} : vector<2x384xf32> to vector<2x128xf32>
    %101 = vector.extract_strided_slice %99 {offsets = [0, 0], sizes = [2, 128], strides = [1, 1]} : vector<2x384xf32> to vector<2x128xf32>
    %102 = arith.addf %100, %101 : vector<2x128xf32>
    %103 = arith.negf %102 : vector<2x128xf32>
    %104 = math.exp %103 : vector<2x128xf32>
    %cst_52 = arith.constant 1.000000e+00 : f32
    %105 = vector.broadcast %cst_52 : f32 to vector<2x128xf32>
    %106 = arith.addf %105, %104 : vector<2x128xf32>
    %107 = arith.divf %105, %106 : vector<2x128xf32>
    %108 = vector.extract_strided_slice %94 {offsets = [0, 128], sizes = [2, 128], strides = [1, 1]} : vector<2x384xf32> to vector<2x128xf32>
    %109 = vector.extract_strided_slice %99 {offsets = [0, 128], sizes = [2, 128], strides = [1, 1]} : vector<2x384xf32> to vector<2x128xf32>
    %110 = arith.addf %108, %109 : vector<2x128xf32>
    %111 = arith.negf %110 : vector<2x128xf32>
    %112 = math.exp %111 : vector<2x128xf32>
    %cst_53 = arith.constant 1.000000e+00 : f32
    %113 = vector.broadcast %cst_53 : f32 to vector<2x128xf32>
    %114 = arith.addf %113, %112 : vector<2x128xf32>
    %115 = arith.divf %113, %114 : vector<2x128xf32>
    %116 = vector.extract_strided_slice %94 {offsets = [0, 256], sizes = [2, 128], strides = [1, 1]} : vector<2x384xf32> to vector<2x128xf32>
    %117 = vector.extract_strided_slice %99 {offsets = [0, 256], sizes = [2, 128], strides = [1, 1]} : vector<2x384xf32> to vector<2x128xf32>
    %118 = arith.mulf %107, %117 : vector<2x128xf32>
    %119 = arith.addf %116, %118 : vector<2x128xf32>
    %120 = math.tanh %119 : vector<2x128xf32>
    %cst_54 = arith.constant 1.000000e+00 : f32
    %121 = vector.broadcast %cst_54 : f32 to vector<2x128xf32>
    %122 = arith.subf %121, %115 : vector<2x128xf32>
    %123 = arith.mulf %122, %120 : vector<2x128xf32>
    %124 = arith.mulf %115, %81 : vector<2x128xf32>
    %125 = arith.addf %123, %124 : vector<2x128xf32>
    %c0_55 = arith.constant 0 : index
    %c0_56 = arith.constant 0 : index
    %126 = vector.load %arg6[%c0_55, %c0_56] : memref<128x32xf32, #tpu.memory_space<vmem>>, vector<128x32xf32>
    %cst_57 = arith.constant dense<0.000000e+00> : vector<2x32xf32>
    %127 = tpu.matmul %125, %126, %cst_57 {dimension_numbers = #tpu.dot_dimension_numbers<[1], [0], [0], [1], [0, 0, 1, 1], [], []>} : vector<2x128xf32>, vector<128x32xf32>, vector<2x32xf32> -> vector<2x32xf32>
    %c0_58 = arith.constant 0 : index
    %c0_59 = arith.constant 0 : index
    %128 = vector.load %arg7[%c0_58, %c0_59] : memref<1x32xf32, #tpu.memory_space<vmem>>, vector<1x32xf32>
    %129 = vector.broadcast %128 : vector<1x32xf32> to vector<2x32xf32>
    %130 = arith.addf %127, %129 : vector<2x32xf32>
    %c5 = arith.constant 5 : index
    %c0_60 = arith.constant 0 : index
    %c0_61 = arith.constant 0 : index
    %131 = vector.load %arg8[%c5, %c0_60, %c0_61] : memref<8x2x32xf32, #tpu.memory_space<vmem>>, vector<1x2x32xf32>
    %132 = vector.shape_cast %131 : vector<1x2x32xf32> to vector<2x32xf32>
    %133 = vector.shape_cast %130 : vector<2x32xf32> to vector<1x2x32xf32>
    tpu.vector_store %arg8[%c5, %c0_60, %c0_61], %133 {strides = array<i32>} : memref<8x2x32xf32, #tpu.memory_space<vmem>>, vector<1x2x32xf32>,
    %c0_62 = arith.constant 0 : index
    %c0_63 = arith.constant 0 : index
    %134 = vector.load %arg2[%c0_62, %c0_63] : memref<32x384xf32, #tpu.memory_space<vmem>>, vector<32x384xf32>
    %cst_64 = arith.constant dense<0.000000e+00> : vector<2x384xf32>
    %135 = tpu.matmul %130, %134, %cst_64 {dimension_numbers = #tpu.dot_dimension_numbers<[1], [0], [0], [1], [0, 0, 1, 1], [], []>} : vector<2x32xf32>, vector<32x384xf32>, vector<2x384xf32> -> vector<2x384xf32>
    %c0_65 = arith.constant 0 : index
    %c0_66 = arith.constant 0 : index
    %136 = vector.load %arg4[%c0_65, %c0_66] : memref<1x384xf32, #tpu.memory_space<vmem>>, vector<1x384xf32>
    %137 = vector.broadcast %136 : vector<1x384xf32> to vector<2x384xf32>
    %138 = arith.addf %135, %137 : vector<2x384xf32>
    %c0_67 = arith.constant 0 : index
    %c0_68 = arith.constant 0 : index
    %139 = vector.load %arg3[%c0_67, %c0_68] : memref<128x384xf32, #tpu.memory_space<vmem>>, vector<128x384xf32>
    %cst_69 = arith.constant dense<0.000000e+00> : vector<2x384xf32>
    %140 = tpu.matmul %125, %139, %cst_69 {dimension_numbers = #tpu.dot_dimension_numbers<[1], [0], [0], [1], [0, 0, 1, 1], [], []>} : vector<2x128xf32>, vector<128x384xf32>, vector<2x384xf32> -> vector<2x384xf32>
    %c0_70 = arith.constant 0 : index
    %c0_71 = arith.constant 0 : index
    %141 = vector.load %arg5[%c0_70, %c0_71] : memref<1x384xf32, #tpu.memory_space<vmem>>, vector<1x384xf32>
    %142 = vector.broadcast %141 : vector<1x384xf32> to vector<2x384xf32>
    %143 = arith.addf %140, %142 : vector<2x384xf32>
    %144 = vector.extract_strided_slice %138 {offsets = [0, 0], sizes = [2, 128], strides = [1, 1]} : vector<2x384xf32> to vector<2x128xf32>
    %145 = vector.extract_strided_slice %143 {offsets = [0, 0], sizes = [2, 128], strides = [1, 1]} : vector<2x384xf32> to vector<2x128xf32>
    %146 = arith.addf %144, %145 : vector<2x128xf32>
    %147 = arith.negf %146 : vector<2x128xf32>
    %148 = math.exp %147 : vector<2x128xf32>
    %cst_72 = arith.constant 1.000000e+00 : f32
    %149 = vector.broadcast %cst_72 : f32 to vector<2x128xf32>
    %150 = arith.addf %149, %148 : vector<2x128xf32>
    %151 = arith.divf %149, %150 : vector<2x128xf32>
    %152 = vector.extract_strided_slice %138 {offsets = [0, 128], sizes = [2, 128], strides = [1, 1]} : vector<2x384xf32> to vector<2x128xf32>
    %153 = vector.extract_strided_slice %143 {offsets = [0, 128], sizes = [2, 128], strides = [1, 1]} : vector<2x384xf32> to vector<2x128xf32>
    %154 = arith.addf %152, %153 : vector<2x128xf32>
    %155 = arith.negf %154 : vector<2x128xf32>
    %156 = math.exp %155 : vector<2x128xf32>
    %cst_73 = arith.constant 1.000000e+00 : f32
    %157 = vector.broadcast %cst_73 : f32 to vector<2x128xf32>
    %158 = arith.addf %157, %156 : vector<2x128xf32>
    %159 = arith.divf %157, %158 : vector<2x128xf32>
    %160 = vector.extract_strided_slice %138 {offsets = [0, 256], sizes = [2, 128], strides = [1, 1]} : vector<2x384xf32> to vector<2x128xf32>
    %161 = vector.extract_strided_slice %143 {offsets = [0, 256], sizes = [2, 128], strides = [1, 1]} : vector<2x384xf32> to vector<2x128xf32>
    %162 = arith.mulf %151, %161 : vector<2x128xf32>
    %163 = arith.addf %160, %162 : vector<2x128xf32>
    %164 = math.tanh %163 : vector<2x128xf32>
    %cst_74 = arith.constant 1.000000e+00 : f32
    %165 = vector.broadcast %cst_74 : f32 to vector<2x128xf32>
    %166 = arith.subf %165, %159 : vector<2x128xf32>
    %167 = arith.mulf %166, %164 : vector<2x128xf32>
    %168 = arith.mulf %159, %125 : vector<2x128xf32>
    %169 = arith.addf %167, %168 : vector<2x128xf32>
    %c0_75 = arith.constant 0 : index
    %c0_76 = arith.constant 0 : index
    %170 = vector.load %arg6[%c0_75, %c0_76] : memref<128x32xf32, #tpu.memory_space<vmem>>, vector<128x32xf32>
    %cst_77 = arith.constant dense<0.000000e+00> : vector<2x32xf32>
    %171 = tpu.matmul %169, %170, %cst_77 {dimension_numbers = #tpu.dot_dimension_numbers<[1], [0], [0], [1], [0, 0, 1, 1], [], []>} : vector<2x128xf32>, vector<128x32xf32>, vector<2x32xf32> -> vector<2x32xf32>
    %c0_78 = arith.constant 0 : index
    %c0_79 = arith.constant 0 : index
    %172 = vector.load %arg7[%c0_78, %c0_79] : memref<1x32xf32, #tpu.memory_space<vmem>>, vector<1x32xf32>
    %173 = vector.broadcast %172 : vector<1x32xf32> to vector<2x32xf32>
    %174 = arith.addf %171, %173 : vector<2x32xf32>
    %c4 = arith.constant 4 : index
    %c0_80 = arith.constant 0 : index
    %c0_81 = arith.constant 0 : index
    %175 = vector.load %arg8[%c4, %c0_80, %c0_81] : memref<8x2x32xf32, #tpu.memory_space<vmem>>, vector<1x2x32xf32>
    %176 = vector.shape_cast %175 : vector<1x2x32xf32> to vector<2x32xf32>
    %177 = vector.shape_cast %174 : vector<2x32xf32> to vector<1x2x32xf32>
    tpu.vector_store %arg8[%c4, %c0_80, %c0_81], %177 {strides = array<i32>} : memref<8x2x32xf32, #tpu.memory_space<vmem>>, vector<1x2x32xf32>,
    %c0_82 = arith.constant 0 : index
    %c0_83 = arith.constant 0 : index
    %178 = vector.load %arg2[%c0_82, %c0_83] : memref<32x384xf32, #tpu.memory_space<vmem>>, vector<32x384xf32>
    %cst_84 = arith.constant dense<0.000000e+00> : vector<2x384xf32>
    %179 = tpu.matmul %174, %178, %cst_84 {dimension_numbers = #tpu.dot_dimension_numbers<[1], [0], [0], [1], [0, 0, 1, 1], [], []>} : vector<2x32xf32>, vector<32x384xf32>, vector<2x384xf32> -> vector<2x384xf32>
    %c0_85 = arith.constant 0 : index
    %c0_86 = arith.constant 0 : index
    %180 = vector.load %arg4[%c0_85, %c0_86] : memref<1x384xf32, #tpu.memory_space<vmem>>, vector<1x384xf32>
    %181 = vector.broadcast %180 : vector<1x384xf32> to vector<2x384xf32>
    %182 = arith.addf %179, %181 : vector<2x384xf32>
    %c0_87 = arith.constant 0 : index
    %c0_88 = arith.constant 0 : index
    %183 = vector.load %arg3[%c0_87, %c0_88] : memref<128x384xf32, #tpu.memory_space<vmem>>, vector<128x384xf32>
    %cst_89 = arith.constant dense<0.000000e+00> : vector<2x384xf32>
    %184 = tpu.matmul %169, %183, %cst_89 {dimension_numbers = #tpu.dot_dimension_numbers<[1], [0], [0], [1], [0, 0, 1, 1], [], []>} : vector<2x128xf32>, vector<128x384xf32>, vector<2x384xf32> -> vector<2x384xf32>
    %c0_90 = arith.constant 0 : index
    %c0_91 = arith.constant 0 : index
    %185 = vector.load %arg5[%c0_90, %c0_91] : memref<1x384xf32, #tpu.memory_space<vmem>>, vector<1x384xf32>
    %186 = vector.broadcast %185 : vector<1x384xf32> to vector<2x384xf32>
    %187 = arith.addf %184, %186 : vector<2x384xf32>
    %188 = vector.extract_strided_slice %182 {offsets = [0, 0], sizes = [2, 128], strides = [1, 1]} : vector<2x384xf32> to vector<2x128xf32>
    %189 = vector.extract_strided_slice %187 {offsets = [0, 0], sizes = [2, 128], strides = [1, 1]} : vector<2x384xf32> to vector<2x128xf32>
    %190 = arith.addf %188, %189 : vector<2x128xf32>
    %191 = arith.negf %190 : vector<2x128xf32>
    %192 = math.exp %191 : vector<2x128xf32>
    %cst_92 = arith.constant 1.000000e+00 : f32
    %193 = vector.broadcast %cst_92 : f32 to vector<2x128xf32>
    %194 = arith.addf %193, %192 : vector<2x128xf32>
    %195 = arith.divf %193, %194 : vector<2x128xf32>
    %196 = vector.extract_strided_slice %182 {offsets = [0, 128], sizes = [2, 128], strides = [1, 1]} : vector<2x384xf32> to vector<2x128xf32>
    %197 = vector.extract_strided_slice %187 {offsets = [0, 128], sizes = [2, 128], strides = [1, 1]} : vector<2x384xf32> to vector<2x128xf32>
    %198 = arith.addf %196, %197 : vector<2x128xf32>
    %199 = arith.negf %198 : vector<2x128xf32>
    %200 = math.exp %199 : vector<2x128xf32>
    %cst_93 = arith.constant 1.000000e+00 : f32
    %201 = vector.broadcast %cst_93 : f32 to vector<2x128xf32>
    %202 = arith.addf %201, %200 : vector<2x128xf32>
    %203 = arith.divf %201, %202 : vector<2x128xf32>
    %204 = vector.extract_strided_slice %182 {offsets = [0, 256], sizes = [2, 128], strides = [1, 1]} : vector<2x384xf32> to vector<2x128xf32>
    %205 = vector.extract_strided_slice %187 {offsets = [0, 256], sizes = [2, 128], strides = [1, 1]} : vector<2x384xf32> to vector<2x128xf32>
    %206 = arith.mulf %195, %205 : vector<2x128xf32>
    %207 = arith.addf %204, %206 : vector<2x128xf32>
    %208 = math.tanh %207 : vector<2x128xf32>
    %cst_94 = arith.constant 1.000000e+00 : f32
    %209 = vector.broadcast %cst_94 : f32 to vector<2x128xf32>
    %210 = arith.subf %209, %203 : vector<2x128xf32>
    %211 = arith.mulf %210, %208 : vector<2x128xf32>
    %212 = arith.mulf %203, %169 : vector<2x128xf32>
    %213 = arith.addf %211, %212 : vector<2x128xf32>
    %c0_95 = arith.constant 0 : index
    %c0_96 = arith.constant 0 : index
    %214 = vector.load %arg6[%c0_95, %c0_96] : memref<128x32xf32, #tpu.memory_space<vmem>>, vector<128x32xf32>
    %cst_97 = arith.constant dense<0.000000e+00> : vector<2x32xf32>
    %215 = tpu.matmul %213, %214, %cst_97 {dimension_numbers = #tpu.dot_dimension_numbers<[1], [0], [0], [1], [0, 0, 1, 1], [], []>} : vector<2x128xf32>, vector<128x32xf32>, vector<2x32xf32> -> vector<2x32xf32>
    %c0_98 = arith.constant 0 : index
    %c0_99 = arith.constant 0 : index
    %216 = vector.load %arg7[%c0_98, %c0_99] : memref<1x32xf32, #tpu.memory_space<vmem>>, vector<1x32xf32>
    %217 = vector.broadcast %216 : vector<1x32xf32> to vector<2x32xf32>
    %218 = arith.addf %215, %217 : vector<2x32xf32>
    %c3 = arith.constant 3 : index
    %c0_100 = arith.constant 0 : index
    %c0_101 = arith.constant 0 : index
    %219 = vector.load %arg8[%c3, %c0_100, %c0_101] : memref<8x2x32xf32, #tpu.memory_space<vmem>>, vector<1x2x32xf32>
    %220 = vector.shape_cast %219 : vector<1x2x32xf32> to vector<2x32xf32>
    %221 = vector.shape_cast %218 : vector<2x32xf32> to vector<1x2x32xf32>
    tpu.vector_store %arg8[%c3, %c0_100, %c0_101], %221 {strides = array<i32>} : memref<8x2x32xf32, #tpu.memory_space<vmem>>, vector<1x2x32xf32>,
    %c0_102 = arith.constant 0 : index
    %c0_103 = arith.constant 0 : index
    %222 = vector.load %arg2[%c0_102, %c0_103] : memref<32x384xf32, #tpu.memory_space<vmem>>, vector<32x384xf32>
    %cst_104 = arith.constant dense<0.000000e+00> : vector<2x384xf32>
    %223 = tpu.matmul %218, %222, %cst_104 {dimension_numbers = #tpu.dot_dimension_numbers<[1], [0], [0], [1], [0, 0, 1, 1], [], []>} : vector<2x32xf32>, vector<32x384xf32>, vector<2x384xf32> -> vector<2x384xf32>
    %c0_105 = arith.constant 0 : index
    %c0_106 = arith.constant 0 : index
    %224 = vector.load %arg4[%c0_105, %c0_106] : memref<1x384xf32, #tpu.memory_space<vmem>>, vector<1x384xf32>
    %225 = vector.broadcast %224 : vector<1x384xf32> to vector<2x384xf32>
    %226 = arith.addf %223, %225 : vector<2x384xf32>
    %c0_107 = arith.constant 0 : index
    %c0_108 = arith.constant 0 : index
    %227 = vector.load %arg3[%c0_107, %c0_108] : memref<128x384xf32, #tpu.memory_space<vmem>>, vector<128x384xf32>
    %cst_109 = arith.constant dense<0.000000e+00> : vector<2x384xf32>
    %228 = tpu.matmul %213, %227, %cst_109 {dimension_numbers = #tpu.dot_dimension_numbers<[1], [0], [0], [1], [0, 0, 1, 1], [], []>} : vector<2x128xf32>, vector<128x384xf32>, vector<2x384xf32> -> vector<2x384xf32>
    %c0_110 = arith.constant 0 : index
    %c0_111 = arith.constant 0 : index
    %229 = vector.load %arg5[%c0_110, %c0_111] : memref<1x384xf32, #tpu.memory_space<vmem>>, vector<1x384xf32>
    %230 = vector.broadcast %229 : vector<1x384xf32> to vector<2x384xf32>
    %231 = arith.addf %228, %230 : vector<2x384xf32>
    %232 = vector.extract_strided_slice %226 {offsets = [0, 0], sizes = [2, 128], strides = [1, 1]} : vector<2x384xf32> to vector<2x128xf32>
    %233 = vector.extract_strided_slice %231 {offsets = [0, 0], sizes = [2, 128], strides = [1, 1]} : vector<2x384xf32> to vector<2x128xf32>
    %234 = arith.addf %232, %233 : vector<2x128xf32>
    %235 = arith.negf %234 : vector<2x128xf32>
    %236 = math.exp %235 : vector<2x128xf32>
    %cst_112 = arith.constant 1.000000e+00 : f32
    %237 = vector.broadcast %cst_112 : f32 to vector<2x128xf32>
    %238 = arith.addf %237, %236 : vector<2x128xf32>
    %239 = arith.divf %237, %238 : vector<2x128xf32>
    %240 = vector.extract_strided_slice %226 {offsets = [0, 128], sizes = [2, 128], strides = [1, 1]} : vector<2x384xf32> to vector<2x128xf32>
    %241 = vector.extract_strided_slice %231 {offsets = [0, 128], sizes = [2, 128], strides = [1, 1]} : vector<2x384xf32> to vector<2x128xf32>
    %242 = arith.addf %240, %241 : vector<2x128xf32>
    %243 = arith.negf %242 : vector<2x128xf32>
    %244 = math.exp %243 : vector<2x128xf32>
    %cst_113 = arith.constant 1.000000e+00 : f32
    %245 = vector.broadcast %cst_113 : f32 to vector<2x128xf32>
    %246 = arith.addf %245, %244 : vector<2x128xf32>
    %247 = arith.divf %245, %246 : vector<2x128xf32>
    %248 = vector.extract_strided_slice %226 {offsets = [0, 256], sizes = [2, 128], strides = [1, 1]} : vector<2x384xf32> to vector<2x128xf32>
    %249 = vector.extract_strided_slice %231 {offsets = [0, 256], sizes = [2, 128], strides = [1, 1]} : vector<2x384xf32> to vector<2x128xf32>
    %250 = arith.mulf %239, %249 : vector<2x128xf32>
    %251 = arith.addf %248, %250 : vector<2x128xf32>
    %252 = math.tanh %251 : vector<2x128xf32>
    %cst_114 = arith.constant 1.000000e+00 : f32
    %253 = vector.broadcast %cst_114 : f32 to vector<2x128xf32>
    %254 = arith.subf %253, %247 : vector<2x128xf32>
    %255 = arith.mulf %254, %252 : vector<2x128xf32>
    %256 = arith.mulf %247, %213 : vector<2x128xf32>
    %257 = arith.addf %255, %256 : vector<2x128xf32>
    %c0_115 = arith.constant 0 : index
    %c0_116 = arith.constant 0 : index
    %258 = vector.load %arg6[%c0_115, %c0_116] : memref<128x32xf32, #tpu.memory_space<vmem>>, vector<128x32xf32>
    %cst_117 = arith.constant dense<0.000000e+00> : vector<2x32xf32>
    %259 = tpu.matmul %257, %258, %cst_117 {dimension_numbers = #tpu.dot_dimension_numbers<[1], [0], [0], [1], [0, 0, 1, 1], [], []>} : vector<2x128xf32>, vector<128x32xf32>, vector<2x32xf32> -> vector<2x32xf32>
    %c0_118 = arith.constant 0 : index
    %c0_119 = arith.constant 0 : index
    %260 = vector.load %arg7[%c0_118, %c0_119] : memref<1x32xf32, #tpu.memory_space<vmem>>, vector<1x32xf32>
    %261 = vector.broadcast %260 : vector<1x32xf32> to vector<2x32xf32>
    %262 = arith.addf %259, %261 : vector<2x32xf32>
    %c2 = arith.constant 2 : index
    %c0_120 = arith.constant 0 : index
    %c0_121 = arith.constant 0 : index
    %263 = vector.load %arg8[%c2, %c0_120, %c0_121] : memref<8x2x32xf32, #tpu.memory_space<vmem>>, vector<1x2x32xf32>
    %264 = vector.shape_cast %263 : vector<1x2x32xf32> to vector<2x32xf32>
    %265 = vector.shape_cast %262 : vector<2x32xf32> to vector<1x2x32xf32>
    tpu.vector_store %arg8[%c2, %c0_120, %c0_121], %265 {strides = array<i32>} : memref<8x2x32xf32, #tpu.memory_space<vmem>>, vector<1x2x32xf32>,
    %c0_122 = arith.constant 0 : index
    %c0_123 = arith.constant 0 : index
    %266 = vector.load %arg2[%c0_122, %c0_123] : memref<32x384xf32, #tpu.memory_space<vmem>>, vector<32x384xf32>
    %cst_124 = arith.constant dense<0.000000e+00> : vector<2x384xf32>
    %267 = tpu.matmul %262, %266, %cst_124 {dimension_numbers = #tpu.dot_dimension_numbers<[1], [0], [0], [1], [0, 0, 1, 1], [], []>} : vector<2x32xf32>, vector<32x384xf32>, vector<2x384xf32> -> vector<2x384xf32>
    %c0_125 = arith.constant 0 : index
    %c0_126 = arith.constant 0 : index
    %268 = vector.load %arg4[%c0_125, %c0_126] : memref<1x384xf32, #tpu.memory_space<vmem>>, vector<1x384xf32>
    %269 = vector.broadcast %268 : vector<1x384xf32> to vector<2x384xf32>
    %270 = arith.addf %267, %269 : vector<2x384xf32>
    %c0_127 = arith.constant 0 : index
    %c0_128 = arith.constant 0 : index
    %271 = vector.load %arg3[%c0_127, %c0_128] : memref<128x384xf32, #tpu.memory_space<vmem>>, vector<128x384xf32>
    %cst_129 = arith.constant dense<0.000000e+00> : vector<2x384xf32>
    %272 = tpu.matmul %257, %271, %cst_129 {dimension_numbers = #tpu.dot_dimension_numbers<[1], [0], [0], [1], [0, 0, 1, 1], [], []>} : vector<2x128xf32>, vector<128x384xf32>, vector<2x384xf32> -> vector<2x384xf32>
    %c0_130 = arith.constant 0 : index
    %c0_131 = arith.constant 0 : index
    %273 = vector.load %arg5[%c0_130, %c0_131] : memref<1x384xf32, #tpu.memory_space<vmem>>, vector<1x384xf32>
    %274 = vector.broadcast %273 : vector<1x384xf32> to vector<2x384xf32>
    %275 = arith.addf %272, %274 : vector<2x384xf32>
    %276 = vector.extract_strided_slice %270 {offsets = [0, 0], sizes = [2, 128], strides = [1, 1]} : vector<2x384xf32> to vector<2x128xf32>
    %277 = vector.extract_strided_slice %275 {offsets = [0, 0], sizes = [2, 128], strides = [1, 1]} : vector<2x384xf32> to vector<2x128xf32>
    %278 = arith.addf %276, %277 : vector<2x128xf32>
    %279 = arith.negf %278 : vector<2x128xf32>
    %280 = math.exp %279 : vector<2x128xf32>
    %cst_132 = arith.constant 1.000000e+00 : f32
    %281 = vector.broadcast %cst_132 : f32 to vector<2x128xf32>
    %282 = arith.addf %281, %280 : vector<2x128xf32>
    %283 = arith.divf %281, %282 : vector<2x128xf32>
    %284 = vector.extract_strided_slice %270 {offsets = [0, 128], sizes = [2, 128], strides = [1, 1]} : vector<2x384xf32> to vector<2x128xf32>
    %285 = vector.extract_strided_slice %275 {offsets = [0, 128], sizes = [2, 128], strides = [1, 1]} : vector<2x384xf32> to vector<2x128xf32>
    %286 = arith.addf %284, %285 : vector<2x128xf32>
    %287 = arith.negf %286 : vector<2x128xf32>
    %288 = math.exp %287 : vector<2x128xf32>
    %cst_133 = arith.constant 1.000000e+00 : f32
    %289 = vector.broadcast %cst_133 : f32 to vector<2x128xf32>
    %290 = arith.addf %289, %288 : vector<2x128xf32>
    %291 = arith.divf %289, %290 : vector<2x128xf32>
    %292 = vector.extract_strided_slice %270 {offsets = [0, 256], sizes = [2, 128], strides = [1, 1]} : vector<2x384xf32> to vector<2x128xf32>
    %293 = vector.extract_strided_slice %275 {offsets = [0, 256], sizes = [2, 128], strides = [1, 1]} : vector<2x384xf32> to vector<2x128xf32>
    %294 = arith.mulf %283, %293 : vector<2x128xf32>
    %295 = arith.addf %292, %294 : vector<2x128xf32>
    %296 = math.tanh %295 : vector<2x128xf32>
    %cst_134 = arith.constant 1.000000e+00 : f32
    %297 = vector.broadcast %cst_134 : f32 to vector<2x128xf32>
    %298 = arith.subf %297, %291 : vector<2x128xf32>
    %299 = arith.mulf %298, %296 : vector<2x128xf32>
    %300 = arith.mulf %291, %257 : vector<2x128xf32>
    %301 = arith.addf %299, %300 : vector<2x128xf32>
    %c0_135 = arith.constant 0 : index
    %c0_136 = arith.constant 0 : index
    %302 = vector.load %arg6[%c0_135, %c0_136] : memref<128x32xf32, #tpu.memory_space<vmem>>, vector<128x32xf32>
    %cst_137 = arith.constant dense<0.000000e+00> : vector<2x32xf32>
    %303 = tpu.matmul %301, %302, %cst_137 {dimension_numbers = #tpu.dot_dimension_numbers<[1], [0], [0], [1], [0, 0, 1, 1], [], []>} : vector<2x128xf32>, vector<128x32xf32>, vector<2x32xf32> -> vector<2x32xf32>
    %c0_138 = arith.constant 0 : index
    %c0_139 = arith.constant 0 : index
    %304 = vector.load %arg7[%c0_138, %c0_139] : memref<1x32xf32, #tpu.memory_space<vmem>>, vector<1x32xf32>
    %305 = vector.broadcast %304 : vector<1x32xf32> to vector<2x32xf32>
    %306 = arith.addf %303, %305 : vector<2x32xf32>
    %c1 = arith.constant 1 : index
    %c0_140 = arith.constant 0 : index
    %c0_141 = arith.constant 0 : index
    %307 = vector.load %arg8[%c1, %c0_140, %c0_141] : memref<8x2x32xf32, #tpu.memory_space<vmem>>, vector<1x2x32xf32>
    %308 = vector.shape_cast %307 : vector<1x2x32xf32> to vector<2x32xf32>
    %309 = vector.shape_cast %306 : vector<2x32xf32> to vector<1x2x32xf32>
    tpu.vector_store %arg8[%c1, %c0_140, %c0_141], %309 {strides = array<i32>} : memref<8x2x32xf32, #tpu.memory_space<vmem>>, vector<1x2x32xf32>,
    %c0_142 = arith.constant 0 : index
    %c0_143 = arith.constant 0 : index
    %310 = vector.load %arg2[%c0_142, %c0_143] : memref<32x384xf32, #tpu.memory_space<vmem>>, vector<32x384xf32>
    %cst_144 = arith.constant dense<0.000000e+00> : vector<2x384xf32>
    %311 = tpu.matmul %306, %310, %cst_144 {dimension_numbers = #tpu.dot_dimension_numbers<[1], [0], [0], [1], [0, 0, 1, 1], [], []>} : vector<2x32xf32>, vector<32x384xf32>, vector<2x384xf32> -> vector<2x384xf32>
    %c0_145 = arith.constant 0 : index
    %c0_146 = arith.constant 0 : index
    %312 = vector.load %arg4[%c0_145, %c0_146] : memref<1x384xf32, #tpu.memory_space<vmem>>, vector<1x384xf32>
    %313 = vector.broadcast %312 : vector<1x384xf32> to vector<2x384xf32>
    %314 = arith.addf %311, %313 : vector<2x384xf32>
    %c0_147 = arith.constant 0 : index
    %c0_148 = arith.constant 0 : index
    %315 = vector.load %arg3[%c0_147, %c0_148] : memref<128x384xf32, #tpu.memory_space<vmem>>, vector<128x384xf32>
    %cst_149 = arith.constant dense<0.000000e+00> : vector<2x384xf32>
    %316 = tpu.matmul %301, %315, %cst_149 {dimension_numbers = #tpu.dot_dimension_numbers<[1], [0], [0], [1], [0, 0, 1, 1], [], []>} : vector<2x128xf32>, vector<128x384xf32>, vector<2x384xf32> -> vector<2x384xf32>
    %c0_150 = arith.constant 0 : index
    %c0_151 = arith.constant 0 : index
    %317 = vector.load %arg5[%c0_150, %c0_151] : memref<1x384xf32, #tpu.memory_space<vmem>>, vector<1x384xf32>
    %318 = vector.broadcast %317 : vector<1x384xf32> to vector<2x384xf32>
    %319 = arith.addf %316, %318 : vector<2x384xf32>
    %320 = vector.extract_strided_slice %314 {offsets = [0, 0], sizes = [2, 128], strides = [1, 1]} : vector<2x384xf32> to vector<2x128xf32>
    %321 = vector.extract_strided_slice %319 {offsets = [0, 0], sizes = [2, 128], strides = [1, 1]} : vector<2x384xf32> to vector<2x128xf32>
    %322 = arith.addf %320, %321 : vector<2x128xf32>
    %323 = arith.negf %322 : vector<2x128xf32>
    %324 = math.exp %323 : vector<2x128xf32>
    %cst_152 = arith.constant 1.000000e+00 : f32
    %325 = vector.broadcast %cst_152 : f32 to vector<2x128xf32>
    %326 = arith.addf %325, %324 : vector<2x128xf32>
    %327 = arith.divf %325, %326 : vector<2x128xf32>
    %328 = vector.extract_strided_slice %314 {offsets = [0, 128], sizes = [2, 128], strides = [1, 1]} : vector<2x384xf32> to vector<2x128xf32>
    %329 = vector.extract_strided_slice %319 {offsets = [0, 128], sizes = [2, 128], strides = [1, 1]} : vector<2x384xf32> to vector<2x128xf32>
    %330 = arith.addf %328, %329 : vector<2x128xf32>
    %331 = arith.negf %330 : vector<2x128xf32>
    %332 = math.exp %331 : vector<2x128xf32>
    %cst_153 = arith.constant 1.000000e+00 : f32
    %333 = vector.broadcast %cst_153 : f32 to vector<2x128xf32>
    %334 = arith.addf %333, %332 : vector<2x128xf32>
    %335 = arith.divf %333, %334 : vector<2x128xf32>
    %336 = vector.extract_strided_slice %314 {offsets = [0, 256], sizes = [2, 128], strides = [1, 1]} : vector<2x384xf32> to vector<2x128xf32>
    %337 = vector.extract_strided_slice %319 {offsets = [0, 256], sizes = [2, 128], strides = [1, 1]} : vector<2x384xf32> to vector<2x128xf32>
    %338 = arith.mulf %327, %337 : vector<2x128xf32>
    %339 = arith.addf %336, %338 : vector<2x128xf32>
    %340 = math.tanh %339 : vector<2x128xf32>
    %cst_154 = arith.constant 1.000000e+00 : f32
    %341 = vector.broadcast %cst_154 : f32 to vector<2x128xf32>
    %342 = arith.subf %341, %335 : vector<2x128xf32>
    %343 = arith.mulf %342, %340 : vector<2x128xf32>
    %344 = arith.mulf %335, %301 : vector<2x128xf32>
    %345 = arith.addf %343, %344 : vector<2x128xf32>
    %c0_155 = arith.constant 0 : index
    %c0_156 = arith.constant 0 : index
    %346 = vector.load %arg6[%c0_155, %c0_156] : memref<128x32xf32, #tpu.memory_space<vmem>>, vector<128x32xf32>
    %cst_157 = arith.constant dense<0.000000e+00> : vector<2x32xf32>
    %347 = tpu.matmul %345, %346, %cst_157 {dimension_numbers = #tpu.dot_dimension_numbers<[1], [0], [0], [1], [0, 0, 1, 1], [], []>} : vector<2x128xf32>, vector<128x32xf32>, vector<2x32xf32> -> vector<2x32xf32>
    %c0_158 = arith.constant 0 : index
    %c0_159 = arith.constant 0 : index
    %348 = vector.load %arg7[%c0_158, %c0_159] : memref<1x32xf32, #tpu.memory_space<vmem>>, vector<1x32xf32>
    %349 = vector.broadcast %348 : vector<1x32xf32> to vector<2x32xf32>
    %350 = arith.addf %347, %349 : vector<2x32xf32>
    %c0_160 = arith.constant 0 : index
    %c0_161 = arith.constant 0 : index
    %c0_162 = arith.constant 0 : index
    %351 = vector.load %arg8[%c0_160, %c0_161, %c0_162] : memref<8x2x32xf32, #tpu.memory_space<vmem>>, vector<1x2x32xf32>
    %352 = vector.shape_cast %351 : vector<1x2x32xf32> to vector<2x32xf32>
    %353 = vector.shape_cast %350 : vector<2x32xf32> to vector<1x2x32xf32>
    tpu.vector_store %arg8[%c0_160, %c0_161, %c0_162], %353 {strides = array<i32>} : memref<8x2x32xf32, #tpu.memory_space<vmem>>, vector<1x2x32xf32>,
    return
  }
}

</mosaic_0001>

<llo_original>
// kernel: tpu_custom_call.1
$region0: #{tpu_custom_call.1}
  #allocation0 [shape = 'u32[]', space=smem, size = 0x4, offset = 0x4, fixed_abs, tag = 'smem constant byte address 0x4 - core index']
  #allocation1 [shape = 'u32[144,128]{1,0:T(1,128)}', space=vmem, size = 0x12000, scoped, tag = 'internal scratch']
  %s0 = inlined_call_operand.vmem [shape: f32[2,32], index: 0, kind: input, shape index: {}]
  %s1 = inlined_call_operand.vmem [shape: f32[2,128], index: 1, kind: input, shape index: {}]
  %s2 = inlined_call_operand.vmem [shape: f32[32,384], index: 2, kind: input, shape index: {}]
  %s3 = inlined_call_operand.hbm [shape: f32[128,384], index: 3, kind: input, shape index: {}]
  %s4 = inlined_call_operand.vmem [shape: f32[1,384], index: 4, kind: input, shape index: {}]
  %s5 = inlined_call_operand.vmem [shape: f32[1,384], index: 5, kind: input, shape index: {}]
  %s6 = inlined_call_operand.vmem [shape: f32[128,32], index: 6, kind: input, shape index: {}]
  %s7 = inlined_call_operand.vmem [shape: f32[1,32], index: 7, kind: input, shape index: {}]
  %s8 = inlined_call_operand.hbm [shape: f32[8,2,32], index: 8, kind: output, shape index: {}]
  %s9 = sld [smem:[#allocation0]]
  $region46: #{tpu_custom_call.1} parent=0
    _
  %s11 = ssub.s32 1, %s9
  %s12 = scalar_select 0, %s11, %s9
  $region1: #{tpu_custom_call.1} parent=0
    #allocation2 [shape = 'u8[196608]{0}', space=vmem, size = 0x30000, scoped, tag = 'input window, operand 3, single buffered']
    #allocation3 [shape = 's32[1]{0}', space=sflag, size = 0x4, scoped, tag = 'scoped memory for tpu_custom_call.1']
    #allocation4 [shape = 's32[1]{0}', space=sflag, size = 0x4, scoped, tag = 'scoped memory for tpu_custom_call.1']
    #allocation5 [shape = 'u8[8192]{0}', space=vmem, size = 0x2000, scoped, tag = 'output window, operand 0, single buffered']
    %13 = vsyncpa [#allocation3], 0
    %14 = vsyncpa [#allocation4], 0
    // Predicated region
    $region2: #{tpu_custom_call.1} parent=1 // pred_check
      _
    $region3: #{tpu_custom_call.1} parent=1 // pred_check_branch
      %16 = sbr.rel (0) target = $region5
    $region4: #{tpu_custom_call.1} parent=1 // pred_region
      _
    $region5: #{tpu_custom_call.1} parent=1 // pred_fallthru
      _
    // Predicated region
    $region6: #{tpu_custom_call.1} parent=1 // pred_check
      _
    $region7: #{tpu_custom_call.1} parent=1 // pred_check_branch
      %18 = sbr.rel (0) target = $region9
    $region8: #{tpu_custom_call.1} parent=1 // pred_region
      _
    $region9: #{tpu_custom_call.1} parent=1 // pred_fallthru
      _
    // Predicated region
    $region10: #{tpu_custom_call.1} parent=1 // pred_check
      _
    $region11: #{tpu_custom_call.1} parent=1 // pred_check_branch
      %20 = sbr.rel (0) target = $region13
    $region12: #{tpu_custom_call.1} parent=1 // pred_region
      _
    $region13: #{tpu_custom_call.1} parent=1 // pred_fallthru
      _
    // Predicated region
    $region14: #{tpu_custom_call.1} parent=1 // pred_check
      _
    $region15: #{tpu_custom_call.1} parent=1 // pred_check_branch
      %22 = sbr.rel (0) target = $region17
    $region16: #{tpu_custom_call.1} parent=1 // pred_region
      %s24 = ssub.s32 6144, 6144
      %25 = vsyncadd [#allocation3], %s24
      %s26 = sshll.u32 [#allocation2], 4
      %s27 = int_to_ptr.vmem [resolvable:$true] %s26
      %32 = dma.hbm_to_vmem [thread:$0]  %s3, 6144, %s27, [#allocation3], 384, 384, 24
    $region17: #{tpu_custom_call.1} parent=1 // pred_fallthru
      _
    // Predicated region
    $region18: #{tpu_custom_call.1} parent=1 // pred_check
      _
    $region19: #{tpu_custom_call.1} parent=1 // pred_check_branch
      %34 = sbr.rel (0) target = $region21
    $region20: #{tpu_custom_call.1} parent=1 // pred_region
      _
    $region21: #{tpu_custom_call.1} parent=1 // pred_fallthru
      _
    // Predicated region
    $region22: #{tpu_custom_call.1} parent=1 // pred_check
      _
    $region23: #{tpu_custom_call.1} parent=1 // pred_check_branch
      %36 = sbr.rel (0) target = $region25
    $region24: #{tpu_custom_call.1} parent=1 // pred_region
      _
    $region25: #{tpu_custom_call.1} parent=1 // pred_fallthru
      _
    // Predicated region
    $region26: #{tpu_custom_call.1} parent=1 // pred_check
      _
    $region27: #{tpu_custom_call.1} parent=1 // pred_check_branch
      %38 = sbr.rel (0) target = $region29
    $region28: #{tpu_custom_call.1} parent=1 // pred_region
      _
    $region29: #{tpu_custom_call.1} parent=1 // pred_fallthru
      _
    // Predicated region
    $region30: #{tpu_custom_call.1} parent=1 // pred_check
      _
    $region31: #{tpu_custom_call.1} parent=1 // pred_check_branch
      %40 = sbr.rel (0) target = $region33
    $region32: #{tpu_custom_call.1} parent=1 // pred_region
      _
    $region33: #{tpu_custom_call.1} parent=1 // pred_fallthru
      _
    // Predicated region
    $region34: #{tpu_custom_call.1} parent=1 // pred_check
      _
    $region35: #{tpu_custom_call.1} parent=1 // pred_check_branch
      %42 = sbr.rel (0) target = $region37
    $region36: #{tpu_custom_call.1} parent=1 // pred_region
      %43 = dma.done [#allocation3], 6144
    $region37: #{tpu_custom_call.1} parent=1 // pred_fallthru
      _
    %v44 = vld [vmem:[%s0] sm:$0x3]
    %v45 = vld [vmem:[%s1] sm:$0x3]
    %v46 = vld [vmem:[%s2] sm:$0xff]
    %v47 = vld [vmem:[%s2 + $0x8] sm:$0xff]
    %v48 = vld [vmem:[%s2 + $0x10] sm:$0xff]
    %v49 = vld [vmem:[%s2 + $0x18] sm:$0xff]
    %v50 = vld [vmem:[%s2 + $0x20] sm:$0xff]
    %v51 = vld [vmem:[%s2 + $0x28] sm:$0xff]
    %v52 = vld [vmem:[%s2 + $0x30] sm:$0xff]
    %v53 = vld [vmem:[%s2 + $0x38] sm:$0xff]
    %v54 = vld [vmem:[%s2 + $0x40] sm:$0xff]
    %v55 = vld [vmem:[%s2 + $0x48] sm:$0xff]
    %v56 = vld [vmem:[%s2 + $0x50] sm:$0xff]
    %v57 = vld [vmem:[%s2 + $0x58] sm:$0xff]
    %v58 = vld [vmem:[%s4] sm:$0x7]
    %v60 = vlaneseq
    %v61 = vshrl.u32 %v60, 7
    %v62 = vsub.s32 0, %v61
    %v63 = vrot.slane %v58, %v62
    %v64 = vlaneseq
    %v65 = vshrl.u32 %v64, 7
    %v66 = vsub.s32 1, %v65
    %v67 = vrot.slane %v58, %v66
    %v68 = vlaneseq
    %v69 = vshrl.u32 %v68, 7
    %v70 = vsub.s32 2, %v69
    %v71 = vrot.slane %v58, %v70
    %vm75 = vcmask 261120
    %v77 = vsel %vm75, %v44, 0
    %79 = vmatprep.subr.mxu0 0.0
    %80 = vmatpush1.msra.mxu0 0.0
    %81 = vmatprep.subr.mxu0 0.0
    %82 = vmatpush1.msra.mxu0 0.0
    %83 = vmatprep.subr.mxu0 0.0
    %84 = vmatpush1.msra.mxu0 0.0
    %85 = vmatprep.subr.mxu0 0.0
    %86 = vmatpush1.msra.mxu0 0.0
    %87 = vmatprep.subr.mxu0 0.0
    %88 = vmatpush1.msra.mxu0 0.0
    %89 = vmatprep.subr.mxu0 0.0
    %90 = vmatpush1.msra.mxu0 0.0
    %91 = vmatprep.subr.mxu0 0.0
    %92 = vmatpush1.msra.mxu0 0.0
    %93 = vmatprep.subr.mxu0 0.0
    %94 = vmatpush1.msra.mxu0 0.0
    %95 = vmatprep.subr.mxu0 0.0
    %96 = vmatpush1.msra.mxu0 0.0
    %97 = vmatprep.subr.mxu0 0.0
    %98 = vmatpush1.msra.mxu0 0.0
    %99 = vmatprep.subr.mxu0 0.0
    %100 = vmatpush1.msra.mxu0 0.0
    %101 = vmatprep.subr.mxu0 0.0
    %102 = vmatpush1.msra.mxu0 0.0
    %103 = vmatprep.subr.mxu0 %v56
    %104 = vmatpush1.msra.mxu0 %v55
    %105 = vmatprep.subr.mxu0 %v53
    %106 = vmatpush1.msra.mxu0 %v52
    %107 = vmatprep.subr.mxu0 %v50
    %108 = vmatpush1.msra.mxu0 %v49
    %109 = vmatprep.subr.mxu0 %v47
    %110 = vmatpush1.msra.mxu0 %v46
    %111 = vmatprep.subr.mxu0 0.0
    %112 = vmatpush2.msra.mxu0 0.0
    %113 = vmatprep.subr.mxu0 0.0
    %114 = vmatpush2.msra.mxu0 0.0
    %115 = vmatprep.subr.mxu0 0.0
    %116 = vmatpush2.msra.mxu0 0.0
    %117 = vmatprep.subr.mxu0 0.0
    %118 = vmatpush2.msra.mxu0 0.0
    %119 = vmatprep.subr.mxu0 0.0
    %120 = vmatpush2.msra.mxu0 0.0
    %121 = vmatprep.subr.mxu0 0.0
    %122 = vmatpush2.msra.mxu0 0.0
    %123 = vmatprep.subr.mxu0 0.0
    %124 = vmatpush2.msra.mxu0 0.0
    %125 = vmatprep.subr.mxu0 0.0
    %126 = vmatpush2.msra.mxu0 0.0
    %127 = vmatprep.subr.mxu0 0.0
    %128 = vmatpush2.msra.mxu0 0.0
    %129 = vmatprep.subr.mxu0 0.0
    %130 = vmatpush2.msra.mxu0 0.0
    %131 = vmatprep.subr.mxu0 0.0
    %132 = vmatpush2.msra.mxu0 0.0
    %133 = vmatprep.subr.mxu0 0.0
    %134 = vmatpush2.msra.mxu0 0.0
    %135 = vmatprep.subr.mxu0 0.0
    %136 = vmatpush2.msra.mxu0 0.0
    %137 = vmatprep.subr.mxu0 0.0
    %138 = vmatpush2.msra.mxu0 0.0
    %139 = vmatprep.subr.mxu0 0.0
    %140 = vmatpush2.msra.mxu0 0.0
    %141 = vmatprep.subr.mxu0 0.0
    %142 = vmatpush2.msra.mxu0 0.0
    %143 = vmatprep.mubr.f32.mxu0 0.0
    %144 = vmatmul.mubr.f32.gmra.mxu0 %v77
    %v145 = vpop.f32.mrf.mxu0
    %v146 = vadd.f32 %v63, %v145
    %v147 = vpop.f32.mrf.mxu0
    %v148 = vadd.f32 %v67, %v147
    %149 = vdwg.mxu0
    %150 = vmatprep.subr.mxu0 0.0
    %151 = vmatpush1.msra.mxu0 0.0
    %152 = vmatprep.subr.mxu0 0.0
    %153 = vmatpush1.msra.mxu0 0.0
    %154 = vmatprep.subr.mxu0 0.0
    %155 = vmatpush1.msra.mxu0 0.0
    %156 = vmatprep.subr.mxu0 0.0
    %157 = vmatpush1.msra.mxu0 0.0
    %158 = vmatprep.subr.mxu0 0.0
    %159 = vmatpush1.msra.mxu0 0.0
    %160 = vmatprep.subr.mxu0 0.0
    %161 = vmatpush1.msra.mxu0 0.0
    %162 = vmatprep.subr.mxu0 0.0
    %163 = vmatpush1.msra.mxu0 0.0
    %164 = vmatprep.subr.mxu0 0.0
    %165 = vmatpush1.msra.mxu0 0.0
    %166 = vmatprep.subr.mxu0 0.0
    %167 = vmatpush1.msra.mxu0 0.0
    %168 = vmatprep.subr.mxu0 0.0
    %169 = vmatpush1.msra.mxu0 0.0
    %170 = vmatprep.subr.mxu0 0.0
    %171 = vmatpush1.msra.mxu0 0.0
    %172 = vmatprep.subr.mxu0 0.0
    %173 = vmatpush1.msra.mxu0 0.0
    %174 = vmatprep.subr.mxu0 0.0
    %175 = vmatpush1.msra.mxu0 %v57
    %176 = vmatprep.subr.mxu0 0.0
    %177 = vmatpush1.msra.mxu0 %v54
    %178 = vmatprep.subr.mxu0 0.0
    %179 = vmatpush1.msra.mxu0 %v51
    %180 = vmatprep.subr.mxu0 0.0
    %181 = vmatpush1.msra.mxu0 %v48
    %182 = vmatprep.subr.mxu0 0.0
    %183 = vmatpush2.msra.mxu0 0.0
    %184 = vmatprep.subr.mxu0 0.0
    %185 = vmatpush2.msra.mxu0 0.0
    %186 = vmatprep.subr.mxu0 0.0
    %187 = vmatpush2.msra.mxu0 0.0
    %188 = vmatprep.subr.mxu0 0.0
    %189 = vmatpush2.msra.mxu0 0.0
    %190 = vmatprep.subr.mxu0 0.0
    %191 = vmatpush2.msra.mxu0 0.0
    %192 = vmatprep.subr.mxu0 0.0
    %193 = vmatpush2.msra.mxu0 0.0
    %194 = vmatprep.subr.mxu0 0.0
    %195 = vmatpush2.msra.mxu0 0.0
    %196 = vmatprep.subr.mxu0 0.0
    %197 = vmatpush2.msra.mxu0 0.0
    %198 = vmatprep.subr.mxu0 0.0
    %199 = vmatpush2.msra.mxu0 0.0
    %200 = vmatprep.subr.mxu0 0.0
    %201 = vmatpush2.msra.mxu0 0.0
    %202 = vmatprep.subr.mxu0 0.0
    %203 = vmatpush2.msra.mxu0 0.0
    %204 = vmatprep.subr.mxu0 0.0
    %205 = vmatpush2.msra.mxu0 0.0
    %206 = vmatprep.subr.mxu0 0.0
    %207 = vmatpush2.msra.mxu0 0.0
    %208 = vmatprep.subr.mxu0 0.0
    %209 = vmatpush2.msra.mxu0 0.0
    %210 = vmatprep.subr.mxu0 0.0
    %211 = vmatpush2.msra.mxu0 0.0
    %212 = vmatprep.subr.mxu0 0.0
    %213 = vmatpush2.msra.mxu0 0.0
    %214 = vmatprep.mubr.f32.mxu0 0.0
    %215 = vmatmul.mubr.f32.gmra.mxu0 %v77
    %v216 = vpop.f32.mrf.mxu0
    %v217 = vadd.f32 %v71, %v216
    %v218 = vpop.f32.mrf.mxu0
    %219 = vdwg.mxu0
    %v220 = vld [vmem:[#allocation2] sm:$0xff]
    %v221 = vld [vmem:[#allocation2 + $0x8] sm:$0xff]
    %v222 = vld [vmem:[#allocation2 + $0x10] sm:$0xff]
    %v223 = vld [vmem:[#allocation2 + $0x18] sm:$0xff]
    %v224 = vld [vmem:[#allocation2 + $0x20] sm:$0xff]
    %v225 = vld [vmem:[#allocation2 + $0x28] sm:$0xff]
    %v226 = vld [vmem:[#allocation2 + $0x30] sm:$0xff]
    %v227 = vld [vmem:[#allocation2 + $0x38] sm:$0xff]
    %v228 = vld [vmem:[#allocation2 + $0x40] sm:$0xff]
    %v229 = vld [vmem:[#allocation2 + $0x48] sm:$0xff]
    %v230 = vld [vmem:[#allocation2 + $0x50] sm:$0xff]
    %v231 = vld [vmem:[#allocation2 + $0x58] sm:$0xff]
    %v232 = vld [vmem:[#allocation2 + $0x60] sm:$0xff]
    %v233 = vld [vmem:[#allocation2 + $0x68] sm:$0xff]
    %v234 = vld [vmem:[#allocation2 + $0x70] sm:$0xff]
    %v235 = vld [vmem:[#allocation2 + $0x78] sm:$0xff]
    %v236 = vld [vmem:[#allocation2 + $0x80] sm:$0xff]
    %v237 = vld [vmem:[#allocation2 + $0x88] sm:$0xff]
    %v238 = vld [vmem:[#allocation2 + $0x90] sm:$0xff]
    %v239 = vld [vmem:[#allocation2 + $0x98] sm:$0xff]
    %v240 = vld [vmem:[#allocation2 + $0xa0] sm:$0xff]
    %v241 = vld [vmem:[#allocation2 + $0xa8] sm:$0xff]
    %v242 = vld [vmem:[#allocation2 + $0xb0] sm:$0xff]
    %v243 = vld [vmem:[#allocation2 + $0xb8] sm:$0xff]
    %v244 = vld [vmem:[#allocation2 + $0xc0] sm:$0xff]
    %v245 = vld [vmem:[#allocation2 + $0xc8] sm:$0xff]
    %v246 = vld [vmem:[#allocation2 + $0xd0] sm:$0xff]
    %v247 = vld [vmem:[#allocation2 + $0xd8] sm:$0xff]
    %v248 = vld [vmem:[#allocation2 + $0xe0] sm:$0xff]
    %v249 = vld [vmem:[#allocation2 + $0xe8] sm:$0xff]
    %v250 = vld [vmem:[#allocation2 + $0xf0] sm:$0xff]
    %v251 = vld [vmem:[#allocation2 + $0xf8] sm:$0xff]
    %v252 = vld [vmem:[#allocation2 + $0x100] sm:$0xff]
    %v253 = vld [vmem:[#allocation2 + $0x108] sm:$0xff]
    %v254 = vld [vmem:[#allocation2 + $0x110] sm:$0xff]
    %v255 = vld [vmem:[#allocation2 + $0x118] sm:$0xff]
    %v256 = vld [vmem:[#allocation2 + $0x120] sm:$0xff]
    %v257 = vld [vmem:[#allocation2 + $0x128] sm:$0xff]
    %v258 = vld [vmem:[#allocation2 + $0x130] sm:$0xff]
    %v259 = vld [vmem:[#allocation2 + $0x138] sm:$0xff]
    %v260 = vld [vmem:[#allocation2 + $0x140] sm:$0xff]
    %v261 = vld [vmem:[#allocation2 + $0x148] sm:$0xff]
    %v262 = vld [vmem:[#allocation2 + $0x150] sm:$0xff]
    %v263 = vld [vmem:[#allocation2 + $0x158] sm:$0xff]
    %v264 = vld [vmem:[#allocation2 + $0x160] sm:$0xff]
    %v265 = vld [vmem:[#allocation2 + $0x168] sm:$0xff]
    %v266 = vld [vmem:[#allocation2 + $0x170] sm:$0xff]
    %v267 = vld [vmem:[#allocation2 + $0x178] sm:$0xff]
    %v268 = vld [vmem:[%s5] sm:$0x7]
    %v270 = vlaneseq
    %v271 = vshrl.u32 %v270, 7
    %v272 = vsub.s32 0, %v271
    %v273 = vrot.slane %v268, %v272
    %v274 = vlaneseq
    %v275 = vshrl.u32 %v274, 7
    %v276 = vsub.s32 1, %v275
    %v277 = vrot.slane %v268, %v276
    %v278 = vlaneseq
    %v279 = vshrl.u32 %v278, 7
    %v280 = vsub.s32 2, %v279
    %v281 = vrot.slane %v268, %v280
    %285 = vmatprep.subr.mxu0 %v266
    %286 = vmatpush1.msra.mxu0 %v265
    %287 = vmatprep.subr.mxu0 %v263
    %288 = vmatpush1.msra.mxu0 %v262
    %289 = vmatprep.subr.mxu0 %v260
    %290 = vmatpush1.msra.mxu0 %v259
    %291 = vmatprep.subr.mxu0 %v257
    %292 = vmatpush1.msra.mxu0 %v256
    %293 = vmatprep.subr.mxu0 %v254
    %294 = vmatpush1.msra.mxu0 %v253
    %295 = vmatprep.subr.mxu0 %v251
    %296 = vmatpush1.msra.mxu0 %v250
    %297 = vmatprep.subr.mxu0 %v248
    %298 = vmatpush1.msra.mxu0 %v247
    %299 = vmatprep.subr.mxu0 %v245
    %300 = vmatpush1.msra.mxu0 %v244
    %301 = vmatprep.subr.mxu0 %v242
    %302 = vmatpush1.msra.mxu0 %v241
    %303 = vmatprep.subr.mxu0 %v239
    %304 = vmatpush1.msra.mxu0 %v238
    %305 = vmatprep.subr.mxu0 %v236
    %306 = vmatpush1.msra.mxu0 %v235
    %307 = vmatprep.subr.mxu0 %v233
    %308 = vmatpush1.msra.mxu0 %v232
    %309 = vmatprep.subr.mxu0 %v230
    %310 = vmatpush1.msra.mxu0 %v229
    %311 = vmatprep.subr.mxu0 %v227
    %312 = vmatpush1.msra.mxu0 %v226
    %313 = vmatprep.subr.mxu0 %v224
    %314 = vmatpush1.msra.mxu0 %v223
    %315 = vmatprep.subr.mxu0 %v221
    %316 = vmatpush1.msra.mxu0 %v220
    %317 = vmatprep.subr.mxu0 0.0
    %318 = vmatpush2.msra.mxu0 0.0
    %319 = vmatprep.subr.mxu0 0.0
    %320 = vmatpush2.msra.mxu0 0.0
    %321 = vmatprep.subr.mxu0 0.0
    %322 = vmatpush2.msra.mxu0 0.0
    %323 = vmatprep.subr.mxu0 0.0
    %324 = vmatpush2.msra.mxu0 0.0
    %325 = vmatprep.subr.mxu0 0.0
    %326 = vmatpush2.msra.mxu0 0.0
    %327 = vmatprep.subr.mxu0 0.0
    %328 = vmatpush2.msra.mxu0 0.0
    %329 = vmatprep.subr.mxu0 0.0
    %330 = vmatpush2.msra.mxu0 0.0
    %331 = vmatprep.subr.mxu0 0.0
    %332 = vmatpush2.msra.mxu0 0.0
    %333 = vmatprep.subr.mxu0 0.0
    %334 = vmatpush2.msra.mxu0 0.0
    %335 = vmatprep.subr.mxu0 0.0
    %336 = vmatpush2.msra.mxu0 0.0
    %337 = vmatprep.subr.mxu0 0.0
    %338 = vmatpush2.msra.mxu0 0.0
    %339 = vmatprep.subr.mxu0 0.0
    %340 = vmatpush2.msra.mxu0 0.0
    %341 = vmatprep.subr.mxu0 0.0
    %342 = vmatpush2.msra.mxu0 0.0
    %343 = vmatprep.subr.mxu0 0.0
    %344 = vmatpush2.msra.mxu0 0.0
    %345 = vmatprep.subr.mxu0 0.0
    %346 = vmatpush2.msra.mxu0 0.0
    %347 = vmatprep.subr.mxu0 0.0
    %348 = vmatpush2.msra.mxu0 0.0
    %349 = vmatprep.mubr.f32.mxu0 0.0
    %350 = vmatmul.mubr.f32.gmra.mxu0 %v45
    %v351 = vpop.f32.mrf.mxu0
    %v352 = vadd.f32 %v273, %v351
    %v353 = vpop.f32.mrf.mxu0
    %v354 = vadd.f32 %v277, %v353
    %355 = vdwg.mxu0
    %356 = vmatprep.subr.mxu0 0.0
    %357 = vmatpush1.msra.mxu0 %v267
    %358 = vmatprep.subr.mxu0 0.0
    %359 = vmatpush1.msra.mxu0 %v264
    %360 = vmatprep.subr.mxu0 0.0
    %361 = vmatpush1.msra.mxu0 %v261
    %362 = vmatprep.subr.mxu0 0.0
    %363 = vmatpush1.msra.mxu0 %v258
    %364 = vmatprep.subr.mxu0 0.0
    %365 = vmatpush1.msra.mxu0 %v255
    %366 = vmatprep.subr.mxu0 0.0
    %367 = vmatpush1.msra.mxu0 %v252
    %368 = vmatprep.subr.mxu0 0.0
    %369 = vmatpush1.msra.mxu0 %v249
    %370 = vmatprep.subr.mxu0 0.0
    %371 = vmatpush1.msra.mxu0 %v246
    %372 = vmatprep.subr.mxu0 0.0
    %373 = vmatpush1.msra.mxu0 %v243
    %374 = vmatprep.subr.mxu0 0.0
    %375 = vmatpush1.msra.mxu0 %v240
    %376 = vmatprep.subr.mxu0 0.0
    %377 = vmatpush1.msra.mxu0 %v237
    %378 = vmatprep.subr.mxu0 0.0
    %379 = vmatpush1.msra.mxu0 %v234
    %380 = vmatprep.subr.mxu0 0.0
    %381 = vmatpush1.msra.mxu0 %v231
    %382 = vmatprep.subr.mxu0 0.0
    %383 = vmatpush1.msra.mxu0 %v228
    %384 = vmatprep.subr.mxu0 0.0
    %385 = vmatpush1.msra.mxu0 %v225
    %386 = vmatprep.subr.mxu0 0.0
    %387 = vmatpush1.msra.mxu0 %v222
    %388 = vmatprep.subr.mxu0 0.0
    %389 = vmatpush2.msra.mxu0 0.0
    %390 = vmatprep.subr.mxu0 0.0
    %391 = vmatpush2.msra.mxu0 0.0
    %392 = vmatprep.subr.mxu0 0.0
    %393 = vmatpush2.msra.mxu0 0.0
    %394 = vmatprep.subr.mxu0 0.0
    %395 = vmatpush2.msra.mxu0 0.0
    %396 = vmatprep.subr.mxu0 0.0
    %397 = vmatpush2.msra.mxu0 0.0
    %398 = vmatprep.subr.mxu0 0.0
    %399 = vmatpush2.msra.mxu0 0.0
    %400 = vmatprep.subr.mxu0 0.0
    %401 = vmatpush2.msra.mxu0 0.0
    %402 = vmatprep.subr.mxu0 0.0
    %403 = vmatpush2.msra.mxu0 0.0
    %404 = vmatprep.subr.mxu0 0.0
    %405 = vmatpush2.msra.mxu0 0.0
    %406 = vmatprep.subr.mxu0 0.0
    %407 = vmatpush2.msra.mxu0 0.0
    %408 = vmatprep.subr.mxu0 0.0
    %409 = vmatpush2.msra.mxu0 0.0
    %410 = vmatprep.subr.mxu0 0.0
    %411 = vmatpush2.msra.mxu0 0.0
    %412 = vmatprep.subr.mxu0 0.0
    %413 = vmatpush2.msra.mxu0 0.0
    %414 = vmatprep.subr.mxu0 0.0
    %415 = vmatpush2.msra.mxu0 0.0
    %416 = vmatprep.subr.mxu0 0.0
    %417 = vmatpush2.msra.mxu0 0.0
    %418 = vmatprep.subr.mxu0 0.0
    %419 = vmatpush2.msra.mxu0 0.0
    %420 = vmatprep.mubr.f32.mxu0 0.0
    %421 = vmatmul.mubr.f32.gmra.mxu0 %v45
    %v422 = vpop.f32.mrf.mxu0
    %v423 = vadd.f32 %v281, %v422
    %v424 = vpop.f32.mrf.mxu0
    %425 = vdwg.mxu0
    %v426 = vadd.f32 %v146, %v352
    %v427 = vxor.u32 %v426, 2147483648
    %v428 = vmul.f32 %v427, 1.442695
    %v429 = vpow.pop %v428
    %v430 = vadd.f32 %v429, 1.0
    %v431 = vrcp.pop %v430
    %v432 = vmul.f32 1.0, %v431
    %v433 = vadd.f32 %v148, %v354
    %v434 = vxor.u32 %v433, 2147483648
    %v435 = vmul.f32 %v434, 1.442695
    %v436 = vpow.pop %v435
    %v437 = vadd.f32 %v436, 1.0
    %v438 = vrcp.pop %v437
    %v439 = vmul.f32 1.0, %v438
    %v440 = vmul.f32 %v432, %v423
    %v441 = vadd.f32 %v217, %v440
    %v442 = vtanh.pop %v441
    %v443 = vsub.f32 1.0, %v439
    %v444 = vmul.f32 %v443, %v442
    %v445 = vmul.f32 %v439, %v45
    %v446 = vadd.f32 %v444, %v445
    %v447 = vld [vmem:[%s6] sm:$0xff]
    %v448 = vld [vmem:[%s6 + $0x8] sm:$0xff]
    %v449 = vld [vmem:[%s6 + $0x10] sm:$0xff]
    %v450 = vld [vmem:[%s6 + $0x18] sm:$0xff]
    %v451 = vld [vmem:[%s6 + $0x20] sm:$0xff]
    %v452 = vld [vmem:[%s6 + $0x28] sm:$0xff]
    %v453 = vld [vmem:[%s6 + $0x30] sm:$0xff]
    %v454 = vld [vmem:[%s6 + $0x38] sm:$0xff]
    %v455 = vld [vmem:[%s6 + $0x40] sm:$0xff]
    %v456 = vld [vmem:[%s6 + $0x48] sm:$0xff]
    %v457 = vld [vmem:[%s6 + $0x50] sm:$0xff]
    %v458 = vld [vmem:[%s6 + $0x58] sm:$0xff]
    %v459 = vld [vmem:[%s6 + $0x60] sm:$0xff]
    %v460 = vld [vmem:[%s6 + $0x68] sm:$0xff]
    %v461 = vld [vmem:[%s6 + $0x70] sm:$0xff]
    %v462 = vld [vmem:[%s6 + $0x78] sm:$0xff]
    %v463 = vld [vmem:[%s7] sm:$0x1]
    %v465 = vlaneseq
    %v466 = vshrl.u32 %v465, 7
    %v467 = vsub.s32 0, %v466
    %v468 = vrot.slane %v463, %v467
    %470 = vmatprep.subr.mxu0 0.0
    %471 = vmatpush1.msra.mxu0 %v462
    %472 = vmatprep.subr.mxu0 0.0
    %473 = vmatpush1.msra.mxu0 %v461
    %474 = vmatprep.subr.mxu0 0.0
    %475 = vmatpush1.msra.mxu0 %v460
    %476 = vmatprep.subr.mxu0 0.0
    %477 = vmatpush1.msra.mxu0 %v459
    %478 = vmatprep.subr.mxu0 0.0
    %479 = vmatpush1.msra.mxu0 %v458
    %480 = vmatprep.subr.mxu0 0.0
    %481 = vmatpush1.msra.mxu0 %v457
    %482 = vmatprep.subr.mxu0 0.0
    %483 = vmatpush1.msra.mxu0 %v456
    %484 = vmatprep.subr.mxu0 0.0
    %485 = vmatpush1.msra.mxu0 %v455
    %486 = vmatprep.subr.mxu0 0.0
    %487 = vmatpush1.msra.mxu0 %v454
    %488 = vmatprep.subr.mxu0 0.0
    %489 = vmatpush1.msra.mxu0 %v453
    %490 = vmatprep.subr.mxu0 0.0
    %491 = vmatpush1.msra.mxu0 %v452
    %492 = vmatprep.subr.mxu0 0.0
    %493 = vmatpush1.msra.mxu0 %v451
    %494 = vmatprep.subr.mxu0 0.0
    %495 = vmatpush1.msra.mxu0 %v450
    %496 = vmatprep.subr.mxu0 0.0
    %497 = vmatpush1.msra.mxu0 %v449
    %498 = vmatprep.subr.mxu0 0.0
    %499 = vmatpush1.msra.mxu0 %v448
    %500 = vmatprep.subr.mxu0 0.0
    %501 = vmatpush1.msra.mxu0 %v447
    %502 = vmatprep.subr.mxu0 0.0
    %503 = vmatpush2.msra.mxu0 0.0
    %504 = vmatprep.subr.mxu0 0.0
    %505 = vmatpush2.msra.mxu0 0.0
    %506 = vmatprep.subr.mxu0 0.0
    %507 = vmatpush2.msra.mxu0 0.0
    %508 = vmatprep.subr.mxu0 0.0
    %509 = vmatpush2.msra.mxu0 0.0
    %510 = vmatprep.subr.mxu0 0.0
    %511 = vmatpush2.msra.mxu0 0.0
    %512 = vmatprep.subr.mxu0 0.0
    %513 = vmatpush2.msra.mxu0 0.0
    %514 = vmatprep.subr.mxu0 0.0
    %515 = vmatpush2.msra.mxu0 0.0
    %516 = vmatprep.subr.mxu0 0.0
    %517 = vmatpush2.msra.mxu0 0.0
    %518 = vmatprep.subr.mxu0 0.0
    %519 = vmatpush2.msra.mxu0 0.0
    %520 = vmatprep.subr.mxu0 0.0
    %521 = vmatpush2.msra.mxu0 0.0
    %522 = vmatprep.subr.mxu0 0.0
    %523 = vmatpush2.msra.mxu0 0.0
    %524 = vmatprep.subr.mxu0 0.0
    %525 = vmatpush2.msra.mxu0 0.0
    %526 = vmatprep.subr.mxu0 0.0
    %527 = vmatpush2.msra.mxu0 0.0
    %528 = vmatprep.subr.mxu0 0.0
    %529 = vmatpush2.msra.mxu0 0.0
    %530 = vmatprep.subr.mxu0 0.0
    %531 = vmatpush2.msra.mxu0 0.0
    %532 = vmatprep.subr.mxu0 0.0
    %533 = vmatpush2.msra.mxu0 0.0
    %534 = vmatprep.mubr.f32.mxu0 0.0
    %535 = vmatmul.mubr.f32.gmra.mxu0 %v446
    %v536 = vpop.f32.mrf.mxu0
    %v537 = vadd.f32 %v468, %v536
    %v538 = vpop.f32.mrf.mxu0
    %539 = vdwg.mxu0
    %s540 = scalar_lea.vmem [#allocation5], 14
    %vm541 = vcmask 254976
    %542 = vst.msk [vmem:[%s540] sm:$0x3] %vm541, %v537
    %v543 = vld [vmem:[%s2] sm:$0xff]
    %v544 = vld [vmem:[%s2 + $0x8] sm:$0xff]
    %v545 = vld [vmem:[%s2 + $0x10] sm:$0xff]
    %v546 = vld [vmem:[%s2 + $0x18] sm:$0xff]
    %v547 = vld [vmem:[%s2 + $0x20] sm:$0xff]
    %v548 = vld [vmem:[%s2 + $0x28] sm:$0xff]
    %v549 = vld [vmem:[%s2 + $0x30] sm:$0xff]
    %v550 = vld [vmem:[%s2 + $0x38] sm:$0xff]
    %v551 = vld [vmem:[%s2 + $0x40] sm:$0xff]
    %v552 = vld [vmem:[%s2 + $0x48] sm:$0xff]
    %v553 = vld [vmem:[%s2 + $0x50] sm:$0xff]
    %v554 = vld [vmem:[%s2 + $0x58] sm:$0xff]
    %v555 = vld [vmem:[%s4] sm:$0x7]
    %v557 = vlaneseq
    %v558 = vshrl.u32 %v557, 7
    %v559 = vsub.s32 0, %v558
    %v560 = vrot.slane %v555, %v559
    %v561 = vlaneseq
    %v562 = vshrl.u32 %v561, 7
    %v563 = vsub.s32 1, %v562
    %v564 = vrot.slane %v555, %v563
    %v565 = vlaneseq
    %v566 = vshrl.u32 %v565, 7
    %v567 = vsub.s32 2, %v566
    %v568 = vrot.slane %v555, %v567
    %v573 = vsel %vm75, %v537, 0
    %575 = vmatprep.subr.mxu0 0.0
    %576 = vmatpush1.msra.mxu0 0.0
    %577 = vmatprep.subr.mxu0 0.0
    %578 = vmatpush1.msra.mxu0 0.0
    %579 = vmatprep.subr.mxu0 0.0
    %580 = vmatpush1.msra.mxu0 0.0
    %581 = vmatprep.subr.mxu0 0.0
    %582 = vmatpush1.msra.mxu0 0.0
    %583 = vmatprep.subr.mxu0 0.0
    %584 = vmatpush1.msra.mxu0 0.0
    %585 = vmatprep.subr.mxu0 0.0
    %586 = vmatpush1.msra.mxu0 0.0
    %587 = vmatprep.subr.mxu0 0.0
    %588 = vmatpush1.msra.mxu0 0.0
    %589 = vmatprep.subr.mxu0 0.0
    %590 = vmatpush1.msra.mxu0 0.0
    %591 = vmatprep.subr.mxu0 0.0
    %592 = vmatpush1.msra.mxu0 0.0
    %593 = vmatprep.subr.mxu0 0.0
    %594 = vmatpush1.msra.mxu0 0.0
    %595 = vmatprep.subr.mxu0 0.0
    %596 = vmatpush1.msra.mxu0 0.0
    %597 = vmatprep.subr.mxu0 0.0
    %598 = vmatpush1.msra.mxu0 0.0
    %599 = vmatprep.subr.mxu0 %v553
    %600 = vmatpush1.msra.mxu0 %v552
    %601 = vmatprep.subr.mxu0 %v550
    %602 = vmatpush1.msra.mxu0 %v549
    %603 = vmatprep.subr.mxu0 %v547
    %604 = vmatpush1.msra.mxu0 %v546
    %605 = vmatprep.subr.mxu0 %v544
    %606 = vmatpush1.msra.mxu0 %v543
    %607 = vmatprep.subr.mxu0 0.0
    %608 = vmatpush2.msra.mxu0 0.0
    %609 = vmatprep.subr.mxu0 0.0
    %610 = vmatpush2.msra.mxu0 0.0
    %611 = vmatprep.subr.mxu0 0.0
    %612 = vmatpush2.msra.mxu0 0.0
    %613 = vmatprep.subr.mxu0 0.0
    %614 = vmatpush2.msra.mxu0 0.0
    %615 = vmatprep.subr.mxu0 0.0
    %616 = vmatpush2.msra.mxu0 0.0
    %617 = vmatprep.subr.mxu0 0.0
    %618 = vmatpush2.msra.mxu0 0.0
    %619 = vmatprep.subr.mxu0 0.0
    %620 = vmatpush2.msra.mxu0 0.0
    %621 = vmatprep.subr.mxu0 0.0
    %622 = vmatpush2.msra.mxu0 0.0
    %623 = vmatprep.subr.mxu0 0.0
    %624 = vmatpush2.msra.mxu0 0.0
    %625 = vmatprep.subr.mxu0 0.0
    %626 = vmatpush2.msra.mxu0 0.0
    %627 = vmatprep.subr.mxu0 0.0
    %628 = vmatpush2.msra.mxu0 0.0
    %629 = vmatprep.subr.mxu0 0.0
    %630 = vmatpush2.msra.mxu0 0.0
    %631 = vmatprep.subr.mxu0 0.0
    %632 = vmatpush2.msra.mxu0 0.0
    %633 = vmatprep.subr.mxu0 0.0
    %634 = vmatpush2.msra.mxu0 0.0
    %635 = vmatprep.subr.mxu0 0.0
    %636 = vmatpush2.msra.mxu0 0.0
    %637 = vmatprep.subr.mxu0 0.0
    %638 = vmatpush2.msra.mxu0 0.0
    %639 = vmatprep.mubr.f32.mxu0 0.0
    %640 = vmatmul.mubr.f32.gmra.mxu0 %v573
    %v641 = vpop.f32.mrf.mxu0
    %v642 = vadd.f32 %v560, %v641
    %v643 = vpop.f32.mrf.mxu0
    %v644 = vadd.f32 %v564, %v643
    %645 = vdwg.mxu0
    %646 = vmatprep.subr.mxu0 0.0
    %647 = vmatpush1.msra.mxu0 0.0
    %648 = vmatprep.subr.mxu0 0.0
    %649 = vmatpush1.msra.mxu0 0.0
    %650 = vmatprep.subr.mxu0 0.0
    %651 = vmatpush1.msra.mxu0 0.0
    %652 = vmatprep.subr.mxu0 0.0
    %653 = vmatpush1.msra.mxu0 0.0
    %654 = vmatprep.subr.mxu0 0.0
    %655 = vmatpush1.msra.mxu0 0.0
    %656 = vmatprep.subr.mxu0 0.0
    %657 = vmatpush1.msra.mxu0 0.0
    %658 = vmatprep.subr.mxu0 0.0
    %659 = vmatpush1.msra.mxu0 0.0
    %660 = vmatprep.subr.mxu0 0.0
    %661 = vmatpush1.msra.mxu0 0.0
    %662 = vmatprep.subr.mxu0 0.0
    %663 = vmatpush1.msra.mxu0 0.0
    %664 = vmatprep.subr.mxu0 0.0
    %665 = vmatpush1.msra.mxu0 0.0
    %666 = vmatprep.subr.mxu0 0.0
    %667 = vmatpush1.msra.mxu0 0.0
    %668 = vmatprep.subr.mxu0 0.0
    %669 = vmatpush1.msra.mxu0 0.0
    %670 = vmatprep.subr.mxu0 0.0
    %671 = vmatpush1.msra.mxu0 %v554
    %672 = vmatprep.subr.mxu0 0.0
    %673 = vmatpush1.msra.mxu0 %v551
    %674 = vmatprep.subr.mxu0 0.0
    %675 = vmatpush1.msra.mxu0 %v548
    %676 = vmatprep.subr.mxu0 0.0
    %677 = vmatpush1.msra.mxu0 %v545
    %678 = vmatprep.subr.mxu0 0.0
    %679 = vmatpush2.msra.mxu0 0.0
    %680 = vmatprep.subr.mxu0 0.0
    %681 = vmatpush2.msra.mxu0 0.0
    %682 = vmatprep.subr.mxu0 0.0
    %683 = vmatpush2.msra.mxu0 0.0
    %684 = vmatprep.subr.mxu0 0.0
    %685 = vmatpush2.msra.mxu0 0.0
    %686 = vmatprep.subr.mxu0 0.0
    %687 = vmatpush2.msra.mxu0 0.0
    %688 = vmatprep.subr.mxu0 0.0
    %689 = vmatpush2.msra.mxu0 0.0
    %690 = vmatprep.subr.mxu0 0.0
    %691 = vmatpush2.msra.mxu0 0.0
    %692 = vmatprep.subr.mxu0 0.0
    %693 = vmatpush2.msra.mxu0 0.0
    %694 = vmatprep.subr.mxu0 0.0
    %695 = vmatpush2.msra.mxu0 0.0
    %696 = vmatprep.subr.mxu0 0.0
    %697 = vmatpush2.msra.mxu0 0.0
    %698 = vmatprep.subr.mxu0 0.0
    %699 = vmatpush2.msra.mxu0 0.0
    %700 = vmatprep.subr.mxu0 0.0
    %701 = vmatpush2.msra.mxu0 0.0
    %702 = vmatprep.subr.mxu0 0.0
    %703 = vmatpush2.msra.mxu0 0.0
    %704 = vmatprep.subr.mxu0 0.0
    %705 = vmatpush2.msra.mxu0 0.0
    %706 = vmatprep.subr.mxu0 0.0
    %707 = vmatpush2.msra.mxu0 0.0
    %708 = vmatprep.subr.mxu0 0.0
    %709 = vmatpush2.msra.mxu0 0.0
    %710 = vmatprep.mubr.f32.mxu0 0.0
    %711 = vmatmul.mubr.f32.gmra.mxu0 %v573
    %v712 = vpop.f32.mrf.mxu0
    %v713 = vadd.f32 %v568, %v712
    %v714 = vpop.f32.mrf.mxu0
    %715 = vdwg.mxu0
    %v716 = vld [vmem:[#allocation2] sm:$0xff]
    %v717 = vld [vmem:[#allocation2 + $0x8] sm:$0xff]
    %v718 = vld [vmem:[#allocation2 + $0x10] sm:$0xff]
    %v719 = vld [vmem:[#allocation2 + $0x18] sm:$0xff]
    %v720 = vld [vmem:[#allocation2 + $0x20] sm:$0xff]
    %v721 = vld [vmem:[#allocation2 + $0x28] sm:$0xff]
    %v722 = vld [vmem:[#allocation2 + $0x30] sm:$0xff]
    %v723 = vld [vmem:[#allocation2 + $0x38] sm:$0xff]
    %v724 = vld [vmem:[#allocation2 + $0x40] sm:$0xff]
    %v725 = vld [vmem:[#allocation2 + $0x48] sm:$0xff]
    %v726 = vld [vmem:[#allocation2 + $0x50] sm:$0xff]
    %v727 = vld [vmem:[#allocation2 + $0x58] sm:$0xff]
    %v728 = vld [vmem:[#allocation2 + $0x60] sm:$0xff]
    %v729 = vld [vmem:[#allocation2 + $0x68] sm:$0xff]
    %v730 = vld [vmem:[#allocation2 + $0x70] sm:$0xff]
    %v731 = vld [vmem:[#allocation2 + $0x78] sm:$0xff]
    %v732 = vld [vmem:[#allocation2 + $0x80] sm:$0xff]
    %v733 = vld [vmem:[#allocation2 + $0x88] sm:$0xff]
    %v734 = vld [vmem:[#allocation2 + $0x90] sm:$0xff]
    %v735 = vld [vmem:[#allocation2 + $0x98] sm:$0xff]
    %v736 = vld [vmem:[#allocation2 + $0xa0] sm:$0xff]
    %v737 = vld [vmem:[#allocation2 + $0xa8] sm:$0xff]
    %v738 = vld [vmem:[#allocation2 + $0xb0] sm:$0xff]
    %v739 = vld [vmem:[#allocation2 + $0xb8] sm:$0xff]
    %v740 = vld [vmem:[#allocation2 + $0xc0] sm:$0xff]
    %v741 = vld [vmem:[#allocation2 + $0xc8] sm:$0xff]
    %v742 = vld [vmem:[#allocation2 + $0xd0] sm:$0xff]
    %v743 = vld [vmem:[#allocation2 + $0xd8] sm:$0xff]
    %v744 = vld [vmem:[#allocation2 + $0xe0] sm:$0xff]
    %v745 = vld [vmem:[#allocation2 + $0xe8] sm:$0xff]
    %v746 = vld [vmem:[#allocation2 + $0xf0] sm:$0xff]
    %v747 = vld [vmem:[#allocation2 + $0xf8] sm:$0xff]
    %v748 = vld [vmem:[#allocation2 + $0x100] sm:$0xff]
    %v749 = vld [vmem:[#allocation2 + $0x108] sm:$0xff]
    %v750 = vld [vmem:[#allocation2 + $0x110] sm:$0xff]
    %v751 = vld [vmem:[#allocation2 + $0x118] sm:$0xff]
    %v752 = vld [vmem:[#allocation2 + $0x120] sm:$0xff]
    %v753 = vld [vmem:[#allocation2 + $0x128] sm:$0xff]
    %v754 = vld [vmem:[#allocation2 + $0x130] sm:$0xff]
    %v755 = vld [vmem:[#allocation2 + $0x138] sm:$0xff]
    %v756 = vld [vmem:[#allocation2 + $0x140] sm:$0xff]
    %v757 = vld [vmem:[#allocation2 + $0x148] sm:$0xff]
    %v758 = vld [vmem:[#allocation2 + $0x150] sm:$0xff]
    %v759 = vld [vmem:[#allocation2 + $0x158] sm:$0xff]
    %v760 = vld [vmem:[#allocation2 + $0x160] sm:$0xff]
    %v761 = vld [vmem:[#allocation2 + $0x168] sm:$0xff]
    %v762 = vld [vmem:[#allocation2 + $0x170] sm:$0xff]
    %v763 = vld [vmem:[#allocation2 + $0x178] sm:$0xff]
    %v764 = vld [vmem:[%s5] sm:$0x7]
    %v766 = vlaneseq
    %v767 = vshrl.u32 %v766, 7
    %v768 = vsub.s32 0, %v767
    %v769 = vrot.slane %v764, %v768
    %v770 = vlaneseq
    %v771 = vshrl.u32 %v770, 7
    %v772 = vsub.s32 1, %v771
    %v773 = vrot.slane %v764, %v772
    %v774 = vlaneseq
    %v775 = vshrl.u32 %v774, 7
    %v776 = vsub.s32 2, %v775
    %v777 = vrot.slane %v764, %v776
    %781 = vmatprep.subr.mxu0 %v762
    %782 = vmatpush1.msra.mxu0 %v761
    %783 = vmatprep.subr.mxu0 %v759
    %784 = vmatpush1.msra.mxu0 %v758
    %785 = vmatprep.subr.mxu0 %v756
    %786 = vmatpush1.msra.mxu0 %v755
    %787 = vmatprep.subr.mxu0 %v753
    %788 = vmatpush1.msra.mxu0 %v752
    %789 = vmatprep.subr.mxu0 %v750
    %790 = vmatpush1.msra.mxu0 %v749
    %791 = vmatprep.subr.mxu0 %v747
    %792 = vmatpush1.msra.mxu0 %v746
    %793 = vmatprep.subr.mxu0 %v744
    %794 = vmatpush1.msra.mxu0 %v743
    %795 = vmatprep.subr.mxu0 %v741
    %796 = vmatpush1.msra.mxu0 %v740
    %797 = vmatprep.subr.mxu0 %v738
    %798 = vmatpush1.msra.mxu0 %v737
    %799 = vmatprep.subr.mxu0 %v735
    %800 = vmatpush1.msra.mxu0 %v734
    %801 = vmatprep.subr.mxu0 %v732
    %802 = vmatpush1.msra.mxu0 %v731
    %803 = vmatprep.subr.mxu0 %v729
    %804 = vmatpush1.msra.mxu0 %v728
    %805 = vmatprep.subr.mxu0 %v726
    %806 = vmatpush1.msra.mxu0 %v725
    %807 = vmatprep.subr.mxu0 %v723
    %808 = vmatpush1.msra.mxu0 %v722
    %809 = vmatprep.subr.mxu0 %v720
    %810 = vmatpush1.msra.mxu0 %v719
    %811 = vmatprep.subr.mxu0 %v717
    %812 = vmatpush1.msra.mxu0 %v716
    %813 = vmatprep.subr.mxu0 0.0
    %814 = vmatpush2.msra.mxu0 0.0
    %815 = vmatprep.subr.mxu0 0.0
    %816 = vmatpush2.msra.mxu0 0.0
    %817 = vmatprep.subr.mxu0 0.0
    %818 = vmatpush2.msra.mxu0 0.0
    %819 = vmatprep.subr.mxu0 0.0
    %820 = vmatpush2.msra.mxu0 0.0
    %821 = vmatprep.subr.mxu0 0.0
    %822 = vmatpush2.msra.mxu0 0.0
    %823 = vmatprep.subr.mxu0 0.0
    %824 = vmatpush2.msra.mxu0 0.0
    %825 = vmatprep.subr.mxu0 0.0
    %826 = vmatpush2.msra.mxu0 0.0
    %827 = vmatprep.subr.mxu0 0.0
    %828 = vmatpush2.msra.mxu0 0.0
    %829 = vmatprep.subr.mxu0 0.0
    %830 = vmatpush2.msra.mxu0 0.0
    %831 = vmatprep.subr.mxu0 0.0
    %832 = vmatpush2.msra.mxu0 0.0
    %833 = vmatprep.subr.mxu0 0.0
    %834 = vmatpush2.msra.mxu0 0.0
    %835 = vmatprep.subr.mxu0 0.0
    %836 = vmatpush2.msra.mxu0 0.0
    %837 = vmatprep.subr.mxu0 0.0
    %838 = vmatpush2.msra.mxu0 0.0
    %839 = vmatprep.subr.mxu0 0.0
    %840 = vmatpush2.msra.mxu0 0.0
    %841 = vmatprep.subr.mxu0 0.0
    %842 = vmatpush2.msra.mxu0 0.0
    %843 = vmatprep.subr.mxu0 0.0
    %844 = vmatpush2.msra.mxu0 0.0
    %845 = vmatprep.mubr.f32.mxu0 0.0
    %846 = vmatmul.mubr.f32.gmra.mxu0 %v446
    %v847 = vpop.f32.mrf.mxu0
    %v848 = vadd.f32 %v769, %v847
    %v849 = vpop.f32.mrf.mxu0
    %v850 = vadd.f32 %v773, %v849
    %851 = vdwg.mxu0
    %852 = vmatprep.subr.mxu0 0.0
    %853 = vmatpush1.msra.mxu0 %v763
    %854 = vmatprep.subr.mxu0 0.0
    %855 = vmatpush1.msra.mxu0 %v760
    %856 = vmatprep.subr.mxu0 0.0
    %857 = vmatpush1.msra.mxu0 %v757
    %858 = vmatprep.subr.mxu0 0.0
    %859 = vmatpush1.msra.mxu0 %v754
    %860 = vmatprep.subr.mxu0 0.0
    %861 = vmatpush1.msra.mxu0 %v751
    %862 = vmatprep.subr.mxu0 0.0
    %863 = vmatpush1.msra.mxu0 %v748
    %864 = vmatprep.subr.mxu0 0.0
    %865 = vmatpush1.msra.mxu0 %v745
    %866 = vmatprep.subr.mxu0 0.0
    %867 = vmatpush1.msra.mxu0 %v742
    %868 = vmatprep.subr.mxu0 0.0
    %869 = vmatpush1.msra.mxu0 %v739
    %870 = vmatprep.subr.mxu0 0.0
    %871 = vmatpush1.msra.mxu0 %v736
    %872 = vmatprep.subr.mxu0 0.0
    %873 = vmatpush1.msra.mxu0 %v733
    %874 = vmatprep.subr.mxu0 0.0
    %875 = vmatpush1.msra.mxu0 %v730
    %876 = vmatprep.subr.mxu0 0.0
    %877 = vmatpush1.msra.mxu0 %v727
    %878 = vmatprep.subr.mxu0 0.0
    %879 = vmatpush1.msra.mxu0 %v724
    %880 = vmatprep.subr.mxu0 0.0
    %881 = vmatpush1.msra.mxu0 %v721
    %882 = vmatprep.subr.mxu0 0.0
    %883 = vmatpush1.msra.mxu0 %v718
    %884 = vmatprep.subr.mxu0 0.0
    %885 = vmatpush2.msra.mxu0 0.0
    %886 = vmatprep.subr.mxu0 0.0
    %887 = vmatpush2.msra.mxu0 0.0
    %888 = vmatprep.subr.mxu0 0.0
    %889 = vmatpush2.msra.mxu0 0.0
    %890 = vmatprep.subr.mxu0 0.0
    %891 = vmatpush2.msra.mxu0 0.0
    %892 = vmatprep.subr.mxu0 0.0
    %893 = vmatpush2.msra.mxu0 0.0
    %894 = vmatprep.subr.mxu0 0.0
    %895 = vmatpush2.msra.mxu0 0.0
    %896 = vmatprep.subr.mxu0 0.0
    %897 = vmatpush2.msra.mxu0 0.0
    %898 = vmatprep.subr.mxu0 0.0
    %899 = vmatpush2.msra.mxu0 0.0
    %900 = vmatprep.subr.mxu0 0.0
    %901 = vmatpush2.msra.mxu0 0.0
    %902 = vmatprep.subr.mxu0 0.0
    %903 = vmatpush2.msra.mxu0 0.0
    %904 = vmatprep.subr.mxu0 0.0
    %905 = vmatpush2.msra.mxu0 0.0
    %906 = vmatprep.subr.mxu0 0.0
    %907 = vmatpush2.msra.mxu0 0.0
    %908 = vmatprep.subr.mxu0 0.0
    %909 = vmatpush2.msra.mxu0 0.0
    %910 = vmatprep.subr.mxu0 0.0
    %911 = vmatpush2.msra.mxu0 0.0
    %912 = vmatprep.subr.mxu0 0.0
    %913 = vmatpush2.msra.mxu0 0.0
    %914 = vmatprep.subr.mxu0 0.0
    %915 = vmatpush2.msra.mxu0 0.0
    %916 = vmatprep.mubr.f32.mxu0 0.0
    %917 = vmatmul.mubr.f32.gmra.mxu0 %v446
    %v918 = vpop.f32.mrf.mxu0
    %v919 = vadd.f32 %v777, %v918
    %v920 = vpop.f32.mrf.mxu0
    %921 = vdwg.mxu0
    %v922 = vadd.f32 %v642, %v848
    %v923 = vxor.u32 %v922, 2147483648
    %v924 = vmul.f32 %v923, 1.442695
    %v925 = vpow.pop %v924
    %v926 = vadd.f32 %v925, 1.0
    %v927 = vrcp.pop %v926
    %v928 = vmul.f32 1.0, %v927
    %v929 = vadd.f32 %v644, %v850
    %v930 = vxor.u32 %v929, 2147483648
    %v931 = vmul.f32 %v930, 1.442695
    %v932 = vpow.pop %v931
    %v933 = vadd.f32 %v932, 1.0
    %v934 = vrcp.pop %v933
    %v935 = vmul.f32 1.0, %v934
    %v936 = vmul.f32 %v928, %v919
    %v937 = vadd.f32 %v713, %v936
    %v938 = vtanh.pop %v937
    %v939 = vsub.f32 1.0, %v935
    %v940 = vmul.f32 %v939, %v938
    %v941 = vmul.f32 %v935, %v446
    %v942 = vadd.f32 %v940, %v941
    %v943 = vld [vmem:[%s6] sm:$0xff]
    %v944 = vld [vmem:[%s6 + $0x8] sm:$0xff]
    %v945 = vld [vmem:[%s6 + $0x10] sm:$0xff]
    %v946 = vld [vmem:[%s6 + $0x18] sm:$0xff]
    %v947 = vld [vmem:[%s6 + $0x20] sm:$0xff]
    %v948 = vld [vmem:[%s6 + $0x28] sm:$0xff]
    %v949 = vld [vmem:[%s6 + $0x30] sm:$0xff]
    %v950 = vld [vmem:[%s6 + $0x38] sm:$0xff]
    %v951 = vld [vmem:[%s6 + $0x40] sm:$0xff]
    %v952 = vld [vmem:[%s6 + $0x48] sm:$0xff]
    %v953 = vld [vmem:[%s6 + $0x50] sm:$0xff]
    %v954 = vld [vmem:[%s6 + $0x58] sm:$0xff]
    %v955 = vld [vmem:[%s6 + $0x60] sm:$0xff]
    %v956 = vld [vmem:[%s6 + $0x68] sm:$0xff]
    %v957 = vld [vmem:[%s6 + $0x70] sm:$0xff]
    %v958 = vld [vmem:[%s6 + $0x78] sm:$0xff]
    %v959 = vld [vmem:[%s7] sm:$0x1]
    %v961 = vlaneseq
    %v962 = vshrl.u32 %v961, 7
    %v963 = vsub.s32 0, %v962
    %v964 = vrot.slane %v959, %v963
    %966 = vmatprep.subr.mxu0 0.0
    %967 = vmatpush1.msra.mxu0 %v958
    %968 = vmatprep.subr.mxu0 0.0
    %969 = vmatpush1.msra.mxu0 %v957
    %970 = vmatprep.subr.mxu0 0.0
    %971 = vmatpush1.msra.mxu0 %v956
    %972 = vmatprep.subr.mxu0 0.0
    %973 = vmatpush1.msra.mxu0 %v955
    %974 = vmatprep.subr.mxu0 0.0
    %975 = vmatpush1.msra.mxu0 %v954
    %976 = vmatprep.subr.mxu0 0.0
    %977 = vmatpush1.msra.mxu0 %v953
    %978 = vmatprep.subr.mxu0 0.0
    %979 = vmatpush1.msra.mxu0 %v952
    %980 = vmatprep.subr.mxu0 0.0
    %981 = vmatpush1.msra.mxu0 %v951
    %982 = vmatprep.subr.mxu0 0.0
    %983 = vmatpush1.msra.mxu0 %v950
    %984 = vmatprep.subr.mxu0 0.0
    %985 = vmatpush1.msra.mxu0 %v949
    %986 = vmatprep.subr.mxu0 0.0
    %987 = vmatpush1.msra.mxu0 %v948
    %988 = vmatprep.subr.mxu0 0.0
    %989 = vmatpush1.msra.mxu0 %v947
    %990 = vmatprep.subr.mxu0 0.0
    %991 = vmatpush1.msra.mxu0 %v946
    %992 = vmatprep.subr.mxu0 0.0
    %993 = vmatpush1.msra.mxu0 %v945
    %994 = vmatprep.subr.mxu0 0.0
    %995 = vmatpush1.msra.mxu0 %v944
    %996 = vmatprep.subr.mxu0 0.0
    %997 = vmatpush1.msra.mxu0 %v943
    %998 = vmatprep.subr.mxu0 0.0
    %999 = vmatpush2.msra.mxu0 0.0
    %1000 = vmatprep.subr.mxu0 0.0
    %1001 = vmatpush2.msra.mxu0 0.0
    %1002 = vmatprep.subr.mxu0 0.0
    %1003 = vmatpush2.msra.mxu0 0.0
    %1004 = vmatprep.subr.mxu0 0.0
    %1005 = vmatpush2.msra.mxu0 0.0
    %1006 = vmatprep.subr.mxu0 0.0
    %1007 = vmatpush2.msra.mxu0 0.0
    %1008 = vmatprep.subr.mxu0 0.0
    %1009 = vmatpush2.msra.mxu0 0.0
    %1010 = vmatprep.subr.mxu0 0.0
    %1011 = vmatpush2.msra.mxu0 0.0
    %1012 = vmatprep.subr.mxu0 0.0
    %1013 = vmatpush2.msra.mxu0 0.0
    %1014 = vmatprep.subr.mxu0 0.0
    %1015 = vmatpush2.msra.mxu0 0.0
    %1016 = vmatprep.subr.mxu0 0.0
    %1017 = vmatpush2.msra.mxu0 0.0
    %1018 = vmatprep.subr.mxu0 0.0
    %1019 = vmatpush2.msra.mxu0 0.0
    %1020 = vmatprep.subr.mxu0 0.0
    %1021 = vmatpush2.msra.mxu0 0.0
    %1022 = vmatprep.subr.mxu0 0.0
    %1023 = vmatpush2.msra.mxu0 0.0
    %1024 = vmatprep.subr.mxu0 0.0
    %1025 = vmatpush2.msra.mxu0 0.0
    %1026 = vmatprep.subr.mxu0 0.0
    %1027 = vmatpush2.msra.mxu0 0.0
    %1028 = vmatprep.subr.mxu0 0.0
    %1029 = vmatpush2.msra.mxu0 0.0
    %1030 = vmatprep.mubr.f32.mxu0 0.0
    %1031 = vmatmul.mubr.f32.gmra.mxu0 %v942
    %v1032 = vpop.f32.mrf.mxu0
    %v1033 = vadd.f32 %v964, %v1032
    %v1034 = vpop.f32.mrf.mxu0
    %1035 = vdwg.mxu0
    %s1036 = scalar_lea.vmem [#allocation5], 12
    %1037 = vst.msk [vmem:[%s1036] sm:$0x3] %vm541, %v1033
    %v1038 = vld [vmem:[%s2] sm:$0xff]
    %v1039 = vld [vmem:[%s2 + $0x8] sm:$0xff]
    %v1040 = vld [vmem:[%s2 + $0x10] sm:$0xff]
    %v1041 = vld [vmem:[%s2 + $0x18] sm:$0xff]
    %v1042 = vld [vmem:[%s2 + $0x20] sm:$0xff]
    %v1043 = vld [vmem:[%s2 + $0x28] sm:$0xff]
    %v1044 = vld [vmem:[%s2 + $0x30] sm:$0xff]
    %v1045 = vld [vmem:[%s2 + $0x38] sm:$0xff]
    %v1046 = vld [vmem:[%s2 + $0x40] sm:$0xff]
    %v1047 = vld [vmem:[%s2 + $0x48] sm:$0xff]
    %v1048 = vld [vmem:[%s2 + $0x50] sm:$0xff]
    %v1049 = vld [vmem:[%s2 + $0x58] sm:$0xff]
    %v1050 = vld [vmem:[%s4] sm:$0x7]
    %v1052 = vlaneseq
    %v1053 = vshrl.u32 %v1052, 7
    %v1054 = vsub.s32 0, %v1053
    %v1055 = vrot.slane %v1050, %v1054
    %v1056 = vlaneseq
    %v1057 = vshrl.u32 %v1056, 7
    %v1058 = vsub.s32 1, %v1057
    %v1059 = vrot.slane %v1050, %v1058
    %v1060 = vlaneseq
    %v1061 = vshrl.u32 %v1060, 7
    %v1062 = vsub.s32 2, %v1061
    %v1063 = vrot.slane %v1050, %v1062
    %v1068 = vsel %vm75, %v1033, 0
    %1070 = vmatprep.subr.mxu0 0.0
    %1071 = vmatpush1.msra.mxu0 0.0
    %1072 = vmatprep.subr.mxu0 0.0
    %1073 = vmatpush1.msra.mxu0 0.0
    %1074 = vmatprep.subr.mxu0 0.0
    %1075 = vmatpush1.msra.mxu0 0.0
    %1076 = vmatprep.subr.mxu0 0.0
    %1077 = vmatpush1.msra.mxu0 0.0
    %1078 = vmatprep.subr.mxu0 0.0
    %1079 = vmatpush1.msra.mxu0 0.0
    %1080 = vmatprep.subr.mxu0 0.0
    %1081 = vmatpush1.msra.mxu0 0.0
    %1082 = vmatprep.subr.mxu0 0.0
    %1083 = vmatpush1.msra.mxu0 0.0
    %1084 = vmatprep.subr.mxu0 0.0
    %1085 = vmatpush1.msra.mxu0 0.0
    %1086 = vmatprep.subr.mxu0 0.0
    %1087 = vmatpush1.msra.mxu0 0.0
    %1088 = vmatprep.subr.mxu0 0.0
    %1089 = vmatpush1.msra.mxu0 0.0
    %1090 = vmatprep.subr.mxu0 0.0
    %1091 = vmatpush1.msra.mxu0 0.0
    %1092 = vmatprep.subr.mxu0 0.0
    %1093 = vmatpush1.msra.mxu0 0.0
    %1094 = vmatprep.subr.mxu0 %v1048
    %1095 = vmatpush1.msra.mxu0 %v1047
    %1096 = vmatprep.subr.mxu0 %v1045
    %1097 = vmatpush1.msra.mxu0 %v1044
    %1098 = vmatprep.subr.mxu0 %v1042
    %1099 = vmatpush1.msra.mxu0 %v1041
    %1100 = vmatprep.subr.mxu0 %v1039
    %1101 = vmatpush1.msra.mxu0 %v1038
    %1102 = vmatprep.subr.mxu0 0.0
    %1103 = vmatpush2.msra.mxu0 0.0
    %1104 = vmatprep.subr.mxu0 0.0
    %1105 = vmatpush2.msra.mxu0 0.0
    %1106 = vmatprep.subr.mxu0 0.0
    %1107 = vmatpush2.msra.mxu0 0.0
    %1108 = vmatprep.subr.mxu0 0.0
    %1109 = vmatpush2.msra.mxu0 0.0
    %1110 = vmatprep.subr.mxu0 0.0
    %1111 = vmatpush2.msra.mxu0 0.0
    %1112 = vmatprep.subr.mxu0 0.0
    %1113 = vmatpush2.msra.mxu0 0.0
    %1114 = vmatprep.subr.mxu0 0.0
    %1115 = vmatpush2.msra.mxu0 0.0
    %1116 = vmatprep.subr.mxu0 0.0
    %1117 = vmatpush2.msra.mxu0 0.0
    %1118 = vmatprep.subr.mxu0 0.0
    %1119 = vmatpush2.msra.mxu0 0.0
    %1120 = vmatprep.subr.mxu0 0.0
    %1121 = vmatpush2.msra.mxu0 0.0
    %1122 = vmatprep.subr.mxu0 0.0
    %1123 = vmatpush2.msra.mxu0 0.0
    %1124 = vmatprep.subr.mxu0 0.0
    %1125 = vmatpush2.msra.mxu0 0.0
    %1126 = vmatprep.subr.mxu0 0.0
    %1127 = vmatpush2.msra.mxu0 0.0
    %1128 = vmatprep.subr.mxu0 0.0
    %1129 = vmatpush2.msra.mxu0 0.0
    %1130 = vmatprep.subr.mxu0 0.0
    %1131 = vmatpush2.msra.mxu0 0.0
    %1132 = vmatprep.subr.mxu0 0.0
    %1133 = vmatpush2.msra.mxu0 0.0
    %1134 = vmatprep.mubr.f32.mxu0 0.0
    %1135 = vmatmul.mubr.f32.gmra.mxu0 %v1068
    %v1136 = vpop.f32.mrf.mxu0
    %v1137 = vadd.f32 %v1055, %v1136
    %v1138 = vpop.f32.mrf.mxu0
    %v1139 = vadd.f32 %v1059, %v1138
    %1140 = vdwg.mxu0
    %1141 = vmatprep.subr.mxu0 0.0
    %1142 = vmatpush1.msra.mxu0 0.0
    %1143 = vmatprep.subr.mxu0 0.0
    %1144 = vmatpush1.msra.mxu0 0.0
    %1145 = vmatprep.subr.mxu0 0.0
    %1146 = vmatpush1.msra.mxu0 0.0
    %1147 = vmatprep.subr.mxu0 0.0
    %1148 = vmatpush1.msra.mxu0 0.0
    %1149 = vmatprep.subr.mxu0 0.0
    %1150 = vmatpush1.msra.mxu0 0.0
    %1151 = vmatprep.subr.mxu0 0.0
    %1152 = vmatpush1.msra.mxu0 0.0
    %1153 = vmatprep.subr.mxu0 0.0
    %1154 = vmatpush1.msra.mxu0 0.0
    %1155 = vmatprep.subr.mxu0 0.0
    %1156 = vmatpush1.msra.mxu0 0.0
    %1157 = vmatprep.subr.mxu0 0.0
    %1158 = vmatpush1.msra.mxu0 0.0
    %1159 = vmatprep.subr.mxu0 0.0
    %1160 = vmatpush1.msra.mxu0 0.0
    %1161 = vmatprep.subr.mxu0 0.0
    %1162 = vmatpush1.msra.mxu0 0.0
    %1163 = vmatprep.subr.mxu0 0.0
    %1164 = vmatpush1.msra.mxu0 0.0
    %1165 = vmatprep.subr.mxu0 0.0
    %1166 = vmatpush1.msra.mxu0 %v1049
    %1167 = vmatprep.subr.mxu0 0.0
    %1168 = vmatpush1.msra.mxu0 %v1046
    %1169 = vmatprep.subr.mxu0 0.0
    %1170 = vmatpush1.msra.mxu0 %v1043
    %1171 = vmatprep.subr.mxu0 0.0
    %1172 = vmatpush1.msra.mxu0 %v1040
    %1173 = vmatprep.subr.mxu0 0.0
    %1174 = vmatpush2.msra.mxu0 0.0
    %1175 = vmatprep.subr.mxu0 0.0
    %1176 = vmatpush2.msra.mxu0 0.0
    %1177 = vmatprep.subr.mxu0 0.0
    %1178 = vmatpush2.msra.mxu0 0.0
    %1179 = vmatprep.subr.mxu0 0.0
    %1180 = vmatpush2.msra.mxu0 0.0
    %1181 = vmatprep.subr.mxu0 0.0
    %1182 = vmatpush2.msra.mxu0 0.0
    %1183 = vmatprep.subr.mxu0 0.0
    %1184 = vmatpush2.msra.mxu0 0.0
    %1185 = vmatprep.subr.mxu0 0.0
    %1186 = vmatpush2.msra.mxu0 0.0
    %1187 = vmatprep.subr.mxu0 0.0
    %1188 = vmatpush2.msra.mxu0 0.0
    %1189 = vmatprep.subr.mxu0 0.0
    %1190 = vmatpush2.msra.mxu0 0.0
    %1191 = vmatprep.subr.mxu0 0.0
    %1192 = vmatpush2.msra.mxu0 0.0
    %1193 = vmatprep.subr.mxu0 0.0
    %1194 = vmatpush2.msra.mxu0 0.0
    %1195 = vmatprep.subr.mxu0 0.0
    %1196 = vmatpush2.msra.mxu0 0.0
    %1197 = vmatprep.subr.mxu0 0.0
    %1198 = vmatpush2.msra.mxu0 0.0
    %1199 = vmatprep.subr.mxu0 0.0
    %1200 = vmatpush2.msra.mxu0 0.0
    %1201 = vmatprep.subr.mxu0 0.0
    %1202 = vmatpush2.msra.mxu0 0.0
    %1203 = vmatprep.subr.mxu0 0.0
    %1204 = vmatpush2.msra.mxu0 0.0
    %1205 = vmatprep.mubr.f32.mxu0 0.0
    %1206 = vmatmul.mubr.f32.gmra.mxu0 %v1068
    %v1207 = vpop.f32.mrf.mxu0
    %v1208 = vadd.f32 %v1063, %v1207
    %v1209 = vpop.f32.mrf.mxu0
    %1210 = vdwg.mxu0
    %v1211 = vld [vmem:[#allocation2] sm:$0xff]
    %v1212 = vld [vmem:[#allocation2 + $0x8] sm:$0xff]
    %v1213 = vld [vmem:[#allocation2 + $0x10] sm:$0xff]
    %v1214 = vld [vmem:[#allocation2 + $0x18] sm:$0xff]
    %v1215 = vld [vmem:[#allocation2 + $0x20] sm:$0xff]
    %v1216 = vld [vmem:[#allocation2 + $0x28] sm:$0xff]
    %v1217 = vld [vmem:[#allocation2 + $0x30] sm:$0xff]
    %v1218 = vld [vmem:[#allocation2 + $0x38] sm:$0xff]
    %v1219 = vld [vmem:[#allocation2 + $0x40] sm:$0xff]
    %v1220 = vld [vmem:[#allocation2 + $0x48] sm:$0xff]
    %v1221 = vld [vmem:[#allocation2 + $0x50] sm:$0xff]
    %v1222 = vld [vmem:[#allocation2 + $0x58] sm:$0xff]
    %v1223 = vld [vmem:[#allocation2 + $0x60] sm:$0xff]
    %v1224 = vld [vmem:[#allocation2 + $0x68] sm:$0xff]
    %v1225 = vld [vmem:[#allocation2 + $0x70] sm:$0xff]
    %v1226 = vld [vmem:[#allocation2 + $0x78] sm:$0xff]
    %v1227 = vld [vmem:[#allocation2 + $0x80] sm:$0xff]
    %v1228 = vld [vmem:[#allocation2 + $0x88] sm:$0xff]
    %v1229 = vld [vmem:[#allocation2 + $0x90] sm:$0xff]
    %v1230 = vld [vmem:[#allocation2 + $0x98] sm:$0xff]
    %v1231 = vld [vmem:[#allocation2 + $0xa0] sm:$0xff]
    %v1232 = vld [vmem:[#allocation2 + $0xa8] sm:$0xff]
    %v1233 = vld [vmem:[#allocation2 + $0xb0] sm:$0xff]
    %v1234 = vld [vmem:[#allocation2 + $0xb8] sm:$0xff]
    %v1235 = vld [vmem:[#allocation2 + $0xc0] sm:$0xff]
    %v1236 = vld [vmem:[#allocation2 + $0xc8] sm:$0xff]
    %v1237 = vld [vmem:[#allocation2 + $0xd0] sm:$0xff]
    %v1238 = vld [vmem:[#allocation2 + $0xd8] sm:$0xff]
    %v1239 = vld [vmem:[#allocation2 + $0xe0] sm:$0xff]
    %v1240 = vld [vmem:[#allocation2 + $0xe8] sm:$0xff]
    %v1241 = vld [vmem:[#allocation2 + $0xf0] sm:$0xff]
    %v1242 = vld [vmem:[#allocation2 + $0xf8] sm:$0xff]
    %v1243 = vld [vmem:[#allocation2 + $0x100] sm:$0xff]
    %v1244 = vld [vmem:[#allocation2 + $0x108] sm:$0xff]
    %v1245 = vld [vmem:[#allocation2 + $0x110] sm:$0xff]
    %v1246 = vld [vmem:[#allocation2 + $0x118] sm:$0xff]
    %v1247 = vld [vmem:[#allocation2 + $0x120] sm:$0xff]
    %v1248 = vld [vmem:[#allocation2 + $0x128] sm:$0xff]
    %v1249 = vld [vmem:[#allocation2 + $0x130] sm:$0xff]
    %v1250 = vld [vmem:[#allocation2 + $0x138] sm:$0xff]
    %v1251 = vld [vmem:[#allocation2 + $0x140] sm:$0xff]
    %v1252 = vld [vmem:[#allocation2 + $0x148] sm:$0xff]
    %v1253 = vld [vmem:[#allocation2 + $0x150] sm:$0xff]
    %v1254 = vld [vmem:[#allocation2 + $0x158] sm:$0xff]
    %v1255 = vld [vmem:[#allocation2 + $0x160] sm:$0xff]
    %v1256 = vld [vmem:[#allocation2 + $0x168] sm:$0xff]
    %v1257 = vld [vmem:[#allocation2 + $0x170] sm:$0xff]
    %v1258 = vld [vmem:[#allocation2 + $0x178] sm:$0xff]
    %v1259 = vld [vmem:[%s5] sm:$0x7]
    %v1261 = vlaneseq
    %v1262 = vshrl.u32 %v1261, 7
    %v1263 = vsub.s32 0, %v1262
    %v1264 = vrot.slane %v1259, %v1263
    %v1265 = vlaneseq
    %v1266 = vshrl.u32 %v1265, 7
    %v1267 = vsub.s32 1, %v1266
    %v1268 = vrot.slane %v1259, %v1267
    %v1269 = vlaneseq
    %v1270 = vshrl.u32 %v1269, 7
    %v1271 = vsub.s32 2, %v1270
    %v1272 = vrot.slane %v1259, %v1271
    %1276 = vmatprep.subr.mxu0 %v1257
    %1277 = vmatpush1.msra.mxu0 %v1256
    %1278 = vmatprep.subr.mxu0 %v1254
    %1279 = vmatpush1.msra.mxu0 %v1253
    %1280 = vmatprep.subr.mxu0 %v1251
    %1281 = vmatpush1.msra.mxu0 %v1250
    %1282 = vmatprep.subr.mxu0 %v1248
    %1283 = vmatpush1.msra.mxu0 %v1247
    %1284 = vmatprep.subr.mxu0 %v1245
    %1285 = vmatpush1.msra.mxu0 %v1244
    %1286 = vmatprep.subr.mxu0 %v1242
    %1287 = vmatpush1.msra.mxu0 %v1241
    %1288 = vmatprep.subr.mxu0 %v1239
    %1289 = vmatpush1.msra.mxu0 %v1238
    %1290 = vmatprep.subr.mxu0 %v1236
    %1291 = vmatpush1.msra.mxu0 %v1235
    %1292 = vmatprep.subr.mxu0 %v1233
    %1293 = vmatpush1.msra.mxu0 %v1232
    %1294 = vmatprep.subr.mxu0 %v1230
    %1295 = vmatpush1.msra.mxu0 %v1229
    %1296 = vmatprep.subr.mxu0 %v1227
    %1297 = vmatpush1.msra.mxu0 %v1226
    %1298 = vmatprep.subr.mxu0 %v1224
    %1299 = vmatpush1.msra.mxu0 %v1223
    %1300 = vmatprep.subr.mxu0 %v1221
    %1301 = vmatpush1.msra.mxu0 %v1220
    %1302 = vmatprep.subr.mxu0 %v1218
    %1303 = vmatpush1.msra.mxu0 %v1217
    %1304 = vmatprep.subr.mxu0 %v1215
    %1305 = vmatpush1.msra.mxu0 %v1214
    %1306 = vmatprep.subr.mxu0 %v1212
    %1307 = vmatpush1.msra.mxu0 %v1211
    %1308 = vmatprep.subr.mxu0 0.0
    %1309 = vmatpush2.msra.mxu0 0.0
    %1310 = vmatprep.subr.mxu0 0.0
    %1311 = vmatpush2.msra.mxu0 0.0
    %1312 = vmatprep.subr.mxu0 0.0
    %1313 = vmatpush2.msra.mxu0 0.0
    %1314 = vmatprep.subr.mxu0 0.0
    %1315 = vmatpush2.msra.mxu0 0.0
    %1316 = vmatprep.subr.mxu0 0.0
    %1317 = vmatpush2.msra.mxu0 0.0
    %1318 = vmatprep.subr.mxu0 0.0
    %1319 = vmatpush2.msra.mxu0 0.0
    %1320 = vmatprep.subr.mxu0 0.0
    %1321 = vmatpush2.msra.mxu0 0.0
    %1322 = vmatprep.subr.mxu0 0.0
    %1323 = vmatpush2.msra.mxu0 0.0
    %1324 = vmatprep.subr.mxu0 0.0
    %1325 = vmatpush2.msra.mxu0 0.0
    %1326 = vmatprep.subr.mxu0 0.0
    %1327 = vmatpush2.msra.mxu0 0.0
    %1328 = vmatprep.subr.mxu0 0.0
    %1329 = vmatpush2.msra.mxu0 0.0
    %1330 = vmatprep.subr.mxu0 0.0
    %1331 = vmatpush2.msra.mxu0 0.0
    %1332 = vmatprep.subr.mxu0 0.0
    %1333 = vmatpush2.msra.mxu0 0.0
    %1334 = vmatprep.subr.mxu0 0.0
    %1335 = vmatpush2.msra.mxu0 0.0
    %1336 = vmatprep.subr.mxu0 0.0
    %1337 = vmatpush2.msra.mxu0 0.0
    %1338 = vmatprep.subr.mxu0 0.0
    %1339 = vmatpush2.msra.mxu0 0.0
    %1340 = vmatprep.mubr.f32.mxu0 0.0
    %1341 = vmatmul.mubr.f32.gmra.mxu0 %v942
    %v1342 = vpop.f32.mrf.mxu0
    %v1343 = vadd.f32 %v1264, %v1342
    %v1344 = vpop.f32.mrf.mxu0
    %v1345 = vadd.f32 %v1268, %v1344
    %1346 = vdwg.mxu0
    %1347 = vmatprep.subr.mxu0 0.0
    %1348 = vmatpush1.msra.mxu0 %v1258
    %1349 = vmatprep.subr.mxu0 0.0
    %1350 = vmatpush1.msra.mxu0 %v1255
    %1351 = vmatprep.subr.mxu0 0.0
    %1352 = vmatpush1.msra.mxu0 %v1252
    %1353 = vmatprep.subr.mxu0 0.0
    %1354 = vmatpush1.msra.mxu0 %v1249
    %1355 = vmatprep.subr.mxu0 0.0
    %1356 = vmatpush1.msra.mxu0 %v1246
    %1357 = vmatprep.subr.mxu0 0.0
    %1358 = vmatpush1.msra.mxu0 %v1243
    %1359 = vmatprep.subr.mxu0 0.0
    %1360 = vmatpush1.msra.mxu0 %v1240
    %1361 = vmatprep.subr.mxu0 0.0
    %1362 = vmatpush1.msra.mxu0 %v1237
    %1363 = vmatprep.subr.mxu0 0.0
    %1364 = vmatpush1.msra.mxu0 %v1234
    %1365 = vmatprep.subr.mxu0 0.0
    %1366 = vmatpush1.msra.mxu0 %v1231
    %1367 = vmatprep.subr.mxu0 0.0
    %1368 = vmatpush1.msra.mxu0 %v1228
    %1369 = vmatprep.subr.mxu0 0.0
    %1370 = vmatpush1.msra.mxu0 %v1225
    %1371 = vmatprep.subr.mxu0 0.0
    %1372 = vmatpush1.msra.mxu0 %v1222
    %1373 = vmatprep.subr.mxu0 0.0
    %1374 = vmatpush1.msra.mxu0 %v1219
    %1375 = vmatprep.subr.mxu0 0.0
    %1376 = vmatpush1.msra.mxu0 %v1216
    %1377 = vmatprep.subr.mxu0 0.0
    %1378 = vmatpush1.msra.mxu0 %v1213
    %1379 = vmatprep.subr.mxu0 0.0
    %1380 = vmatpush2.msra.mxu0 0.0
    %1381 = vmatprep.subr.mxu0 0.0
    %1382 = vmatpush2.msra.mxu0 0.0
    %1383 = vmatprep.subr.mxu0 0.0
    %1384 = vmatpush2.msra.mxu0 0.0
    %1385 = vmatprep.subr.mxu0 0.0
    %1386 = vmatpush2.msra.mxu0 0.0
    %1387 = vmatprep.subr.mxu0 0.0
    %1388 = vmatpush2.msra.mxu0 0.0
    %1389 = vmatprep.subr.mxu0 0.0
    %1390 = vmatpush2.msra.mxu0 0.0
    %1391 = vmatprep.subr.mxu0 0.0
    %1392 = vmatpush2.msra.mxu0 0.0
    %1393 = vmatprep.subr.mxu0 0.0
    %1394 = vmatpush2.msra.mxu0 0.0
    %1395 = vmatprep.subr.mxu0 0.0
    %1396 = vmatpush2.msra.mxu0 0.0
    %1397 = vmatprep.subr.mxu0 0.0
    %1398 = vmatpush2.msra.mxu0 0.0
    %1399 = vmatprep.subr.mxu0 0.0
    %1400 = vmatpush2.msra.mxu0 0.0
    %1401 = vmatprep.subr.mxu0 0.0
    %1402 = vmatpush2.msra.mxu0 0.0
    %1403 = vmatprep.subr.mxu0 0.0
    %1404 = vmatpush2.msra.mxu0 0.0
    %1405 = vmatprep.subr.mxu0 0.0
    %1406 = vmatpush2.msra.mxu0 0.0
    %1407 = vmatprep.subr.mxu0 0.0
    %1408 = vmatpush2.msra.mxu0 0.0
    %1409 = vmatprep.subr.mxu0 0.0
    %1410 = vmatpush2.msra.mxu0 0.0
    %1411 = vmatprep.mubr.f32.mxu0 0.0
    %1412 = vmatmul.mubr.f32.gmra.mxu0 %v942
    %v1413 = vpop.f32.mrf.mxu0
    %v1414 = vadd.f32 %v1272, %v1413
    %v1415 = vpop.f32.mrf.mxu0
    %1416 = vdwg.mxu0
    %v1417 = vadd.f32 %v1137, %v1343
    %v1418 = vxor.u32 %v1417, 2147483648
    %v1419 = vmul.f32 %v1418, 1.442695
    %v1420 = vpow.pop %v1419
    %v1421 = vadd.f32 %v1420, 1.0
    %v1422 = vrcp.pop %v1421
    %v1423 = vmul.f32 1.0, %v1422
    %v1424 = vadd.f32 %v1139, %v1345
    %v1425 = vxor.u32 %v1424, 2147483648
    %v1426 = vmul.f32 %v1425, 1.442695
    %v1427 = vpow.pop %v1426
    %v1428 = vadd.f32 %v1427, 1.0
    %v1429 = vrcp.pop %v1428
    %v1430 = vmul.f32 1.0, %v1429
    %v1431 = vmul.f32 %v1423, %v1414
    %v1432 = vadd.f32 %v1208, %v1431
    %v1433 = vtanh.pop %v1432
    %v1434 = vsub.f32 1.0, %v1430
    %v1435 = vmul.f32 %v1434, %v1433
    %v1436 = vmul.f32 %v1430, %v942
    %v1437 = vadd.f32 %v1435, %v1436
    %v1438 = vld [vmem:[%s6] sm:$0xff]
    %v1439 = vld [vmem:[%s6 + $0x8] sm:$0xff]
    %v1440 = vld [vmem:[%s6 + $0x10] sm:$0xff]
    %v1441 = vld [vmem:[%s6 + $0x18] sm:$0xff]
    %v1442 = vld [vmem:[%s6 + $0x20] sm:$0xff]
    %v1443 = vld [vmem:[%s6 + $0x28] sm:$0xff]
    %v1444 = vld [vmem:[%s6 + $0x30] sm:$0xff]
    %v1445 = vld [vmem:[%s6 + $0x38] sm:$0xff]
    %v1446 = vld [vmem:[%s6 + $0x40] sm:$0xff]
    %v1447 = vld [vmem:[%s6 + $0x48] sm:$0xff]
    %v1448 = vld [vmem:[%s6 + $0x50] sm:$0xff]
    %v1449 = vld [vmem:[%s6 + $0x58] sm:$0xff]
    %v1450 = vld [vmem:[%s6 + $0x60] sm:$0xff]
    %v1451 = vld [vmem:[%s6 + $0x68] sm:$0xff]
    %v1452 = vld [vmem:[%s6 + $0x70] sm:$0xff]
    %v1453 = vld [vmem:[%s6 + $0x78] sm:$0xff]
    %v1454 = vld [vmem:[%s7] sm:$0x1]
    %v1456 = vlaneseq
    %v1457 = vshrl.u32 %v1456, 7
    %v1458 = vsub.s32 0, %v1457
    %v1459 = vrot.slane %v1454, %v1458
    %1461 = vmatprep.subr.mxu0 0.0
    %1462 = vmatpush1.msra.mxu0 %v1453
    %1463 = vmatprep.subr.mxu0 0.0
    %1464 = vmatpush1.msra.mxu0 %v1452
    %1465 = vmatprep.subr.mxu0 0.0
    %1466 = vmatpush1.msra.mxu0 %v1451
    %1467 = vmatprep.subr.mxu0 0.0
    %1468 = vmatpush1.msra.mxu0 %v1450
    %1469 = vmatprep.subr.mxu0 0.0
    %1470 = vmatpush1.msra.mxu0 %v1449
    %1471 = vmatprep.subr.mxu0 0.0
    %1472 = vmatpush1.msra.mxu0 %v1448
    %1473 = vmatprep.subr.mxu0 0.0
    %1474 = vmatpush1.msra.mxu0 %v1447
    %1475 = vmatprep.subr.mxu0 0.0
    %1476 = vmatpush1.msra.mxu0 %v1446
    %1477 = vmatprep.subr.mxu0 0.0
    %1478 = vmatpush1.msra.mxu0 %v1445
    %1479 = vmatprep.subr.mxu0 0.0
    %1480 = vmatpush1.msra.mxu0 %v1444
    %1481 = vmatprep.subr.mxu0 0.0
    %1482 = vmatpush1.msra.mxu0 %v1443
    %1483 = vmatprep.subr.mxu0 0.0
    %1484 = vmatpush1.msra.mxu0 %v1442
    %1485 = vmatprep.subr.mxu0 0.0
    %1486 = vmatpush1.msra.mxu0 %v1441
    %1487 = vmatprep.subr.mxu0 0.0
    %1488 = vmatpush1.msra.mxu0 %v1440
    %1489 = vmatprep.subr.mxu0 0.0
    %1490 = vmatpush1.msra.mxu0 %v1439
    %1491 = vmatprep.subr.mxu0 0.0
    %1492 = vmatpush1.msra.mxu0 %v1438
    %1493 = vmatprep.subr.mxu0 0.0
    %1494 = vmatpush2.msra.mxu0 0.0
    %1495 = vmatprep.subr.mxu0 0.0
    %1496 = vmatpush2.msra.mxu0 0.0
    %1497 = vmatprep.subr.mxu0 0.0
    %1498 = vmatpush2.msra.mxu0 0.0
    %1499 = vmatprep.subr.mxu0 0.0
    %1500 = vmatpush2.msra.mxu0 0.0
    %1501 = vmatprep.subr.mxu0 0.0
    %1502 = vmatpush2.msra.mxu0 0.0
    %1503 = vmatprep.subr.mxu0 0.0
    %1504 = vmatpush2.msra.mxu0 0.0
    %1505 = vmatprep.subr.mxu0 0.0
    %1506 = vmatpush2.msra.mxu0 0.0
    %1507 = vmatprep.subr.mxu0 0.0
    %1508 = vmatpush2.msra.mxu0 0.0
    %1509 = vmatprep.subr.mxu0 0.0
    %1510 = vmatpush2.msra.mxu0 0.0
    %1511 = vmatprep.subr.mxu0 0.0
    %1512 = vmatpush2.msra.mxu0 0.0
    %1513 = vmatprep.subr.mxu0 0.0
    %1514 = vmatpush2.msra.mxu0 0.0
    %1515 = vmatprep.subr.mxu0 0.0
    %1516 = vmatpush2.msra.mxu0 0.0
    %1517 = vmatprep.subr.mxu0 0.0
    %1518 = vmatpush2.msra.mxu0 0.0
    %1519 = vmatprep.subr.mxu0 0.0
    %1520 = vmatpush2.msra.mxu0 0.0
    %1521 = vmatprep.subr.mxu0 0.0
    %1522 = vmatpush2.msra.mxu0 0.0
    %1523 = vmatprep.subr.mxu0 0.0
    %1524 = vmatpush2.msra.mxu0 0.0
    %1525 = vmatprep.mubr.f32.mxu0 0.0
    %1526 = vmatmul.mubr.f32.gmra.mxu0 %v1437
    %v1527 = vpop.f32.mrf.mxu0
    %v1528 = vadd.f32 %v1459, %v1527
    %v1529 = vpop.f32.mrf.mxu0
    %1530 = vdwg.mxu0
    %s1531 = scalar_lea.vmem [#allocation5], 10
    %1532 = vst.msk [vmem:[%s1531] sm:$0x3] %vm541, %v1528
    %v1533 = vld [vmem:[%s2] sm:$0xff]
    %v1534 = vld [vmem:[%s2 + $0x8] sm:$0xff]
    %v1535 = vld [vmem:[%s2 + $0x10] sm:$0xff]
    %v1536 = vld [vmem:[%s2 + $0x18] sm:$0xff]
    %v1537 = vld [vmem:[%s2 + $0x20] sm:$0xff]
    %v1538 = vld [vmem:[%s2 + $0x28] sm:$0xff]
    %v1539 = vld [vmem:[%s2 + $0x30] sm:$0xff]
    %v1540 = vld [vmem:[%s2 + $0x38] sm:$0xff]
    %v1541 = vld [vmem:[%s2 + $0x40] sm:$0xff]
    %v1542 = vld [vmem:[%s2 + $0x48] sm:$0xff]
    %v1543 = vld [vmem:[%s2 + $0x50] sm:$0xff]
    %v1544 = vld [vmem:[%s2 + $0x58] sm:$0xff]
    %v1545 = vld [vmem:[%s4] sm:$0x7]
    %v1547 = vlaneseq
    %v1548 = vshrl.u32 %v1547, 7
    %v1549 = vsub.s32 0, %v1548
    %v1550 = vrot.slane %v1545, %v1549
    %v1551 = vlaneseq
    %v1552 = vshrl.u32 %v1551, 7
    %v1553 = vsub.s32 1, %v1552
    %v1554 = vrot.slane %v1545, %v1553
    %v1555 = vlaneseq
    %v1556 = vshrl.u32 %v1555, 7
    %v1557 = vsub.s32 2, %v1556
    %v1558 = vrot.slane %v1545, %v1557
    %v1563 = vsel %vm75, %v1528, 0
    %1565 = vmatprep.subr.mxu0 0.0
    %1566 = vmatpush1.msra.mxu0 0.0
    %1567 = vmatprep.subr.mxu0 0.0
    %1568 = vmatpush1.msra.mxu0 0.0
    %1569 = vmatprep.subr.mxu0 0.0
    %1570 = vmatpush1.msra.mxu0 0.0
    %1571 = vmatprep.subr.mxu0 0.0
    %1572 = vmatpush1.msra.mxu0 0.0
    %1573 = vmatprep.subr.mxu0 0.0
    %1574 = vmatpush1.msra.mxu0 0.0
    %1575 = vmatprep.subr.mxu0 0.0
    %1576 = vmatpush1.msra.mxu0 0.0
    %1577 = vmatprep.subr.mxu0 0.0
    %1578 = vmatpush1.msra.mxu0 0.0
    %1579 = vmatprep.subr.mxu0 0.0
    %1580 = vmatpush1.msra.mxu0 0.0
    %1581 = vmatprep.subr.mxu0 0.0
    %1582 = vmatpush1.msra.mxu0 0.0
    %1583 = vmatprep.subr.mxu0 0.0
    %1584 = vmatpush1.msra.mxu0 0.0
    %1585 = vmatprep.subr.mxu0 0.0
    %1586 = vmatpush1.msra.mxu0 0.0
    %1587 = vmatprep.subr.mxu0 0.0
    %1588 = vmatpush1.msra.mxu0 0.0
    %1589 = vmatprep.subr.mxu0 %v1543
    %1590 = vmatpush1.msra.mxu0 %v1542
    %1591 = vmatprep.subr.mxu0 %v1540
    %1592 = vmatpush1.msra.mxu0 %v1539
    %1593 = vmatprep.subr.mxu0 %v1537
    %1594 = vmatpush1.msra.mxu0 %v1536
    %1595 = vmatprep.subr.mxu0 %v1534
    %1596 = vmatpush1.msra.mxu0 %v1533
    %1597 = vmatprep.subr.mxu0 0.0
    %1598 = vmatpush2.msra.mxu0 0.0
    %1599 = vmatprep.subr.mxu0 0.0
    %1600 = vmatpush2.msra.mxu0 0.0
    %1601 = vmatprep.subr.mxu0 0.0
    %1602 = vmatpush2.msra.mxu0 0.0
    %1603 = vmatprep.subr.mxu0 0.0
    %1604 = vmatpush2.msra.mxu0 0.0
    %1605 = vmatprep.subr.mxu0 0.0
    %1606 = vmatpush2.msra.mxu0 0.0
    %1607 = vmatprep.subr.mxu0 0.0
    %1608 = vmatpush2.msra.mxu0 0.0
    %1609 = vmatprep.subr.mxu0 0.0
    %1610 = vmatpush2.msra.mxu0 0.0
    %1611 = vmatprep.subr.mxu0 0.0
    %1612 = vmatpush2.msra.mxu0 0.0
    %1613 = vmatprep.subr.mxu0 0.0
    %1614 = vmatpush2.msra.mxu0 0.0
    %1615 = vmatprep.subr.mxu0 0.0
    %1616 = vmatpush2.msra.mxu0 0.0
    %1617 = vmatprep.subr.mxu0 0.0
    %1618 = vmatpush2.msra.mxu0 0.0
    %1619 = vmatprep.subr.mxu0 0.0
    %1620 = vmatpush2.msra.mxu0 0.0
    %1621 = vmatprep.subr.mxu0 0.0
    %1622 = vmatpush2.msra.mxu0 0.0
    %1623 = vmatprep.subr.mxu0 0.0
    %1624 = vmatpush2.msra.mxu0 0.0
    %1625 = vmatprep.subr.mxu0 0.0
    %1626 = vmatpush2.msra.mxu0 0.0
    %1627 = vmatprep.subr.mxu0 0.0
    %1628 = vmatpush2.msra.mxu0 0.0
    %1629 = vmatprep.mubr.f32.mxu0 0.0
    %1630 = vmatmul.mubr.f32.gmra.mxu0 %v1563
    %v1631 = vpop.f32.mrf.mxu0
    %v1632 = vadd.f32 %v1550, %v1631
    %v1633 = vpop.f32.mrf.mxu0
    %v1634 = vadd.f32 %v1554, %v1633
    %1635 = vdwg.mxu0
    %1636 = vmatprep.subr.mxu0 0.0
    %1637 = vmatpush1.msra.mxu0 0.0
    %1638 = vmatprep.subr.mxu0 0.0
    %1639 = vmatpush1.msra.mxu0 0.0
    %1640 = vmatprep.subr.mxu0 0.0
    %1641 = vmatpush1.msra.mxu0 0.0
    %1642 = vmatprep.subr.mxu0 0.0
    %1643 = vmatpush1.msra.mxu0 0.0
    %1644 = vmatprep.subr.mxu0 0.0
    %1645 = vmatpush1.msra.mxu0 0.0
    %1646 = vmatprep.subr.mxu0 0.0
    %1647 = vmatpush1.msra.mxu0 0.0
    %1648 = vmatprep.subr.mxu0 0.0
    %1649 = vmatpush1.msra.mxu0 0.0
    %1650 = vmatprep.subr.mxu0 0.0
    %1651 = vmatpush1.msra.mxu0 0.0
    %1652 = vmatprep.subr.mxu0 0.0
    %1653 = vmatpush1.msra.mxu0 0.0
    %1654 = vmatprep.subr.mxu0 0.0
    %1655 = vmatpush1.msra.mxu0 0.0
    %1656 = vmatprep.subr.mxu0 0.0
    %1657 = vmatpush1.msra.mxu0 0.0
    %1658 = vmatprep.subr.mxu0 0.0
    %1659 = vmatpush1.msra.mxu0 0.0
    %1660 = vmatprep.subr.mxu0 0.0
    %1661 = vmatpush1.msra.mxu0 %v1544
    %1662 = vmatprep.subr.mxu0 0.0
    %1663 = vmatpush1.msra.mxu0 %v1541
    %1664 = vmatprep.subr.mxu0 0.0
    %1665 = vmatpush1.msra.mxu0 %v1538
    %1666 = vmatprep.subr.mxu0 0.0
    %1667 = vmatpush1.msra.mxu0 %v1535
    %1668 = vmatprep.subr.mxu0 0.0
    %1669 = vmatpush2.msra.mxu0 0.0
    %1670 = vmatprep.subr.mxu0 0.0
    %1671 = vmatpush2.msra.mxu0 0.0
    %1672 = vmatprep.subr.mxu0 0.0
    %1673 = vmatpush2.msra.mxu0 0.0
    %1674 = vmatprep.subr.mxu0 0.0
    %1675 = vmatpush2.msra.mxu0 0.0
    %1676 = vmatprep.subr.mxu0 0.0
    %1677 = vmatpush2.msra.mxu0 0.0
    %1678 = vmatprep.subr.mxu0 0.0
    %1679 = vmatpush2.msra.mxu0 0.0
    %1680 = vmatprep.subr.mxu0 0.0
    %1681 = vmatpush2.msra.mxu0 0.0
    %1682 = vmatprep.subr.mxu0 0.0
    %1683 = vmatpush2.msra.mxu0 0.0
    %1684 = vmatprep.subr.mxu0 0.0
    %1685 = vmatpush2.msra.mxu0 0.0
    %1686 = vmatprep.subr.mxu0 0.0
    %1687 = vmatpush2.msra.mxu0 0.0
    %1688 = vmatprep.subr.mxu0 0.0
    %1689 = vmatpush2.msra.mxu0 0.0
    %1690 = vmatprep.subr.mxu0 0.0
    %1691 = vmatpush2.msra.mxu0 0.0
    %1692 = vmatprep.subr.mxu0 0.0
    %1693 = vmatpush2.msra.mxu0 0.0
    %1694 = vmatprep.subr.mxu0 0.0
    %1695 = vmatpush2.msra.mxu0 0.0
    %1696 = vmatprep.subr.mxu0 0.0
    %1697 = vmatpush2.msra.mxu0 0.0
    %1698 = vmatprep.subr.mxu0 0.0
    %1699 = vmatpush2.msra.mxu0 0.0
    %1700 = vmatprep.mubr.f32.mxu0 0.0
    %1701 = vmatmul.mubr.f32.gmra.mxu0 %v1563
    %v1702 = vpop.f32.mrf.mxu0
    %v1703 = vadd.f32 %v1558, %v1702
    %v1704 = vpop.f32.mrf.mxu0
    %1705 = vdwg.mxu0
    %v1706 = vld [vmem:[#allocation2] sm:$0xff]
    %v1707 = vld [vmem:[#allocation2 + $0x8] sm:$0xff]
    %v1708 = vld [vmem:[#allocation2 + $0x10] sm:$0xff]
    %v1709 = vld [vmem:[#allocation2 + $0x18] sm:$0xff]
    %v1710 = vld [vmem:[#allocation2 + $0x20] sm:$0xff]
    %v1711 = vld [vmem:[#allocation2 + $0x28] sm:$0xff]
    %v1712 = vld [vmem:[#allocation2 + $0x30] sm:$0xff]
    %v1713 = vld [vmem:[#allocation2 + $0x38] sm:$0xff]
    %v1714 = vld [vmem:[#allocation2 + $0x40] sm:$0xff]
    %v1715 = vld [vmem:[#allocation2 + $0x48] sm:$0xff]
    %v1716 = vld [vmem:[#allocation2 + $0x50] sm:$0xff]
    %v1717 = vld [vmem:[#allocation2 + $0x58] sm:$0xff]
    %v1718 = vld [vmem:[#allocation2 + $0x60] sm:$0xff]
    %v1719 = vld [vmem:[#allocation2 + $0x68] sm:$0xff]
    %v1720 = vld [vmem:[#allocation2 + $0x70] sm:$0xff]
    %v1721 = vld [vmem:[#allocation2 + $0x78] sm:$0xff]
    %v1722 = vld [vmem:[#allocation2 + $0x80] sm:$0xff]
    %v1723 = vld [vmem:[#allocation2 + $0x88] sm:$0xff]
    %v1724 = vld [vmem:[#allocation2 + $0x90] sm:$0xff]
    %v1725 = vld [vmem:[#allocation2 + $0x98] sm:$0xff]
    %v1726 = vld [vmem:[#allocation2 + $0xa0] sm:$0xff]
    %v1727 = vld [vmem:[#allocation2 + $0xa8] sm:$0xff]
    %v1728 = vld [vmem:[#allocation2 + $0xb0] sm:$0xff]
    %v1729 = vld [vmem:[#allocation2 + $0xb8] sm:$0xff]
    %v1730 = vld [vmem:[#allocation2 + $0xc0] sm:$0xff]
    %v1731 = vld [vmem:[#allocation2 + $0xc8] sm:$0xff]
    %v1732 = vld [vmem:[#allocation2 + $0xd0] sm:$0xff]
    %v1733 = vld [vmem:[#allocation2 + $0xd8] sm:$0xff]
    %v1734 = vld [vmem:[#allocation2 + $0xe0] sm:$0xff]
    %v1735 = vld [vmem:[#allocation2 + $0xe8] sm:$0xff]
    %v1736 = vld [vmem:[#allocation2 + $0xf0] sm:$0xff]
    %v1737 = vld [vmem:[#allocation2 + $0xf8] sm:$0xff]
    %v1738 = vld [vmem:[#allocation2 + $0x100] sm:$0xff]
    %v1739 = vld [vmem:[#allocation2 + $0x108] sm:$0xff]
    %v1740 = vld [vmem:[#allocation2 + $0x110] sm:$0xff]
    %v1741 = vld [vmem:[#allocation2 + $0x118] sm:$0xff]
    %v1742 = vld [vmem:[#allocation2 + $0x120] sm:$0xff]
    %v1743 = vld [vmem:[#allocation2 + $0x128] sm:$0xff]
    %v1744 = vld [vmem:[#allocation2 + $0x130] sm:$0xff]
    %v1745 = vld [vmem:[#allocation2 + $0x138] sm:$0xff]
    %v1746 = vld [vmem:[#allocation2 + $0x140] sm:$0xff]
    %v1747 = vld [vmem:[#allocation2 + $0x148] sm:$0xff]
    %v1748 = vld [vmem:[#allocation2 + $0x150] sm:$0xff]
    %v1749 = vld [vmem:[#allocation2 + $0x158] sm:$0xff]
    %v1750 = vld [vmem:[#allocation2 + $0x160] sm:$0xff]
    %v1751 = vld [vmem:[#allocation2 + $0x168] sm:$0xff]
    %v1752 = vld [vmem:[#allocation2 + $0x170] sm:$0xff]
    %v1753 = vld [vmem:[#allocation2 + $0x178] sm:$0xff]
    %v1754 = vld [vmem:[%s5] sm:$0x7]
    %v1756 = vlaneseq
    %v1757 = vshrl.u32 %v1756, 7
    %v1758 = vsub.s32 0, %v1757
    %v1759 = vrot.slane %v1754, %v1758
    %v1760 = vlaneseq
    %v1761 = vshrl.u32 %v1760, 7
    %v1762 = vsub.s32 1, %v1761
    %v1763 = vrot.slane %v1754, %v1762
    %v1764 = vlaneseq
    %v1765 = vshrl.u32 %v1764, 7
    %v1766 = vsub.s32 2, %v1765
    %v1767 = vrot.slane %v1754, %v1766
    %1771 = vmatprep.subr.mxu0 %v1752
    %1772 = vmatpush1.msra.mxu0 %v1751
    %1773 = vmatprep.subr.mxu0 %v1749
    %1774 = vmatpush1.msra.mxu0 %v1748
    %1775 = vmatprep.subr.mxu0 %v1746
    %1776 = vmatpush1.msra.mxu0 %v1745
    %1777 = vmatprep.subr.mxu0 %v1743
    %1778 = vmatpush1.msra.mxu0 %v1742
    %1779 = vmatprep.subr.mxu0 %v1740
    %1780 = vmatpush1.msra.mxu0 %v1739
    %1781 = vmatprep.subr.mxu0 %v1737
    %1782 = vmatpush1.msra.mxu0 %v1736
    %1783 = vmatprep.subr.mxu0 %v1734
    %1784 = vmatpush1.msra.mxu0 %v1733
    %1785 = vmatprep.subr.mxu0 %v1731
    %1786 = vmatpush1.msra.mxu0 %v1730
    %1787 = vmatprep.subr.mxu0 %v1728
    %1788 = vmatpush1.msra.mxu0 %v1727
    %1789 = vmatprep.subr.mxu0 %v1725
    %1790 = vmatpush1.msra.mxu0 %v1724
    %1791 = vmatprep.subr.mxu0 %v1722
    %1792 = vmatpush1.msra.mxu0 %v1721
    %1793 = vmatprep.subr.mxu0 %v1719
    %1794 = vmatpush1.msra.mxu0 %v1718
    %1795 = vmatprep.subr.mxu0 %v1716
    %1796 = vmatpush1.msra.mxu0 %v1715
    %1797 = vmatprep.subr.mxu0 %v1713
    %1798 = vmatpush1.msra.mxu0 %v1712
    %1799 = vmatprep.subr.mxu0 %v1710
    %1800 = vmatpush1.msra.mxu0 %v1709
    %1801 = vmatprep.subr.mxu0 %v1707
    %1802 = vmatpush1.msra.mxu0 %v1706
    %1803 = vmatprep.subr.mxu0 0.0
    %1804 = vmatpush2.msra.mxu0 0.0
    %1805 = vmatprep.subr.mxu0 0.0
    %1806 = vmatpush2.msra.mxu0 0.0
    %1807 = vmatprep.subr.mxu0 0.0
    %1808 = vmatpush2.msra.mxu0 0.0
    %1809 = vmatprep.subr.mxu0 0.0
    %1810 = vmatpush2.msra.mxu0 0.0
    %1811 = vmatprep.subr.mxu0 0.0
    %1812 = vmatpush2.msra.mxu0 0.0
    %1813 = vmatprep.subr.mxu0 0.0
    %1814 = vmatpush2.msra.mxu0 0.0
    %1815 = vmatprep.subr.mxu0 0.0
    %1816 = vmatpush2.msra.mxu0 0.0
    %1817 = vmatprep.subr.mxu0 0.0
    %1818 = vmatpush2.msra.mxu0 0.0
    %1819 = vmatprep.subr.mxu0 0.0
    %1820 = vmatpush2.msra.mxu0 0.0
    %1821 = vmatprep.subr.mxu0 0.0
    %1822 = vmatpush2.msra.mxu0 0.0
    %1823 = vmatprep.subr.mxu0 0.0
    %1824 = vmatpush2.msra.mxu0 0.0
    %1825 = vmatprep.subr.mxu0 0.0
    %1826 = vmatpush2.msra.mxu0 0.0
    %1827 = vmatprep.subr.mxu0 0.0
    %1828 = vmatpush2.msra.mxu0 0.0
    %1829 = vmatprep.subr.mxu0 0.0
    %1830 = vmatpush2.msra.mxu0 0.0
    %1831 = vmatprep.subr.mxu0 0.0
    %1832 = vmatpush2.msra.mxu0 0.0
    %1833 = vmatprep.subr.mxu0 0.0
    %1834 = vmatpush2.msra.mxu0 0.0
    %1835 = vmatprep.mubr.f32.mxu0 0.0
    %1836 = vmatmul.mubr.f32.gmra.mxu0 %v1437
    %v1837 = vpop.f32.mrf.mxu0
    %v1838 = vadd.f32 %v1759, %v1837
    %v1839 = vpop.f32.mrf.mxu0
    %v1840 = vadd.f32 %v1763, %v1839
    %1841 = vdwg.mxu0
    %1842 = vmatprep.subr.mxu0 0.0
    %1843 = vmatpush1.msra.mxu0 %v1753
    %1844 = vmatprep.subr.mxu0 0.0
    %1845 = vmatpush1.msra.mxu0 %v1750
    %1846 = vmatprep.subr.mxu0 0.0
    %1847 = vmatpush1.msra.mxu0 %v1747
    %1848 = vmatprep.subr.mxu0 0.0
    %1849 = vmatpush1.msra.mxu0 %v1744
    %1850 = vmatprep.subr.mxu0 0.0
    %1851 = vmatpush1.msra.mxu0 %v1741
    %1852 = vmatprep.subr.mxu0 0.0
    %1853 = vmatpush1.msra.mxu0 %v1738
    %1854 = vmatprep.subr.mxu0 0.0
    %1855 = vmatpush1.msra.mxu0 %v1735
    %1856 = vmatprep.subr.mxu0 0.0
    %1857 = vmatpush1.msra.mxu0 %v1732
    %1858 = vmatprep.subr.mxu0 0.0
    %1859 = vmatpush1.msra.mxu0 %v1729
    %1860 = vmatprep.subr.mxu0 0.0
    %1861 = vmatpush1.msra.mxu0 %v1726
    %1862 = vmatprep.subr.mxu0 0.0
    %1863 = vmatpush1.msra.mxu0 %v1723
    %1864 = vmatprep.subr.mxu0 0.0
    %1865 = vmatpush1.msra.mxu0 %v1720
    %1866 = vmatprep.subr.mxu0 0.0
    %1867 = vmatpush1.msra.mxu0 %v1717
    %1868 = vmatprep.subr.mxu0 0.0
    %1869 = vmatpush1.msra.mxu0 %v1714
    %1870 = vmatprep.subr.mxu0 0.0
    %1871 = vmatpush1.msra.mxu0 %v1711
    %1872 = vmatprep.subr.mxu0 0.0
    %1873 = vmatpush1.msra.mxu0 %v1708
    %1874 = vmatprep.subr.mxu0 0.0
    %1875 = vmatpush2.msra.mxu0 0.0
    %1876 = vmatprep.subr.mxu0 0.0
    %1877 = vmatpush2.msra.mxu0 0.0
    %1878 = vmatprep.subr.mxu0 0.0
    %1879 = vmatpush2.msra.mxu0 0.0
    %1880 = vmatprep.subr.mxu0 0.0
    %1881 = vmatpush2.msra.mxu0 0.0
    %1882 = vmatprep.subr.mxu0 0.0
    %1883 = vmatpush2.msra.mxu0 0.0
    %1884 = vmatprep.subr.mxu0 0.0
    %1885 = vmatpush2.msra.mxu0 0.0
    %1886 = vmatprep.subr.mxu0 0.0
    %1887 = vmatpush2.msra.mxu0 0.0
    %1888 = vmatprep.subr.mxu0 0.0
    %1889 = vmatpush2.msra.mxu0 0.0
    %1890 = vmatprep.subr.mxu0 0.0
    %1891 = vmatpush2.msra.mxu0 0.0
    %1892 = vmatprep.subr.mxu0 0.0
    %1893 = vmatpush2.msra.mxu0 0.0
    %1894 = vmatprep.subr.mxu0 0.0
    %1895 = vmatpush2.msra.mxu0 0.0
    %1896 = vmatprep.subr.mxu0 0.0
    %1897 = vmatpush2.msra.mxu0 0.0
    %1898 = vmatprep.subr.mxu0 0.0
    %1899 = vmatpush2.msra.mxu0 0.0
    %1900 = vmatprep.subr.mxu0 0.0
    %1901 = vmatpush2.msra.mxu0 0.0
    %1902 = vmatprep.subr.mxu0 0.0
    %1903 = vmatpush2.msra.mxu0 0.0
    %1904 = vmatprep.subr.mxu0 0.0
    %1905 = vmatpush2.msra.mxu0 0.0
    %1906 = vmatprep.mubr.f32.mxu0 0.0
    %1907 = vmatmul.mubr.f32.gmra.mxu0 %v1437
    %v1908 = vpop.f32.mrf.mxu0
    %v1909 = vadd.f32 %v1767, %v1908
    %v1910 = vpop.f32.mrf.mxu0
    %1911 = vdwg.mxu0
    %v1912 = vadd.f32 %v1632, %v1838
    %v1913 = vxor.u32 %v1912, 2147483648
    %v1914 = vmul.f32 %v1913, 1.442695
    %v1915 = vpow.pop %v1914
    %v1916 = vadd.f32 %v1915, 1.0
    %v1917 = vrcp.pop %v1916
    %v1918 = vmul.f32 1.0, %v1917
    %v1919 = vadd.f32 %v1634, %v1840
    %v1920 = vxor.u32 %v1919, 2147483648
    %v1921 = vmul.f32 %v1920, 1.442695
    %v1922 = vpow.pop %v1921
    %v1923 = vadd.f32 %v1922, 1.0
    %v1924 = vrcp.pop %v1923
    %v1925 = vmul.f32 1.0, %v1924
    %v1926 = vmul.f32 %v1918, %v1909
    %v1927 = vadd.f32 %v1703, %v1926
    %v1928 = vtanh.pop %v1927
    %v1929 = vsub.f32 1.0, %v1925
    %v1930 = vmul.f32 %v1929, %v1928
    %v1931 = vmul.f32 %v1925, %v1437
    %v1932 = vadd.f32 %v1930, %v1931
    %v1933 = vld [vmem:[%s6] sm:$0xff]
    %v1934 = vld [vmem:[%s6 + $0x8] sm:$0xff]
    %v1935 = vld [vmem:[%s6 + $0x10] sm:$0xff]
    %v1936 = vld [vmem:[%s6 + $0x18] sm:$0xff]
    %v1937 = vld [vmem:[%s6 + $0x20] sm:$0xff]
    %v1938 = vld [vmem:[%s6 + $0x28] sm:$0xff]
    %v1939 = vld [vmem:[%s6 + $0x30] sm:$0xff]
    %v1940 = vld [vmem:[%s6 + $0x38] sm:$0xff]
    %v1941 = vld [vmem:[%s6 + $0x40] sm:$0xff]
    %v1942 = vld [vmem:[%s6 + $0x48] sm:$0xff]
    %v1943 = vld [vmem:[%s6 + $0x50] sm:$0xff]
    %v1944 = vld [vmem:[%s6 + $0x58] sm:$0xff]
    %v1945 = vld [vmem:[%s6 + $0x60] sm:$0xff]
    %v1946 = vld [vmem:[%s6 + $0x68] sm:$0xff]
    %v1947 = vld [vmem:[%s6 + $0x70] sm:$0xff]
    %v1948 = vld [vmem:[%s6 + $0x78] sm:$0xff]
    %v1949 = vld [vmem:[%s7] sm:$0x1]
    %v1951 = vlaneseq
    %v1952 = vshrl.u32 %v1951, 7
    %v1953 = vsub.s32 0, %v1952
    %v1954 = vrot.slane %v1949, %v1953
    %1956 = vmatprep.subr.mxu0 0.0
    %1957 = vmatpush1.msra.mxu0 %v1948
    %1958 = vmatprep.subr.mxu0 0.0
    %1959 = vmatpush1.msra.mxu0 %v1947
    %1960 = vmatprep.subr.mxu0 0.0
    %1961 = vmatpush1.msra.mxu0 %v1946
    %1962 = vmatprep.subr.mxu0 0.0
    %1963 = vmatpush1.msra.mxu0 %v1945
    %1964 = vmatprep.subr.mxu0 0.0
    %1965 = vmatpush1.msra.mxu0 %v1944
    %1966 = vmatprep.subr.mxu0 0.0
    %1967 = vmatpush1.msra.mxu0 %v1943
    %1968 = vmatprep.subr.mxu0 0.0
    %1969 = vmatpush1.msra.mxu0 %v1942
    %1970 = vmatprep.subr.mxu0 0.0
    %1971 = vmatpush1.msra.mxu0 %v1941
    %1972 = vmatprep.subr.mxu0 0.0
    %1973 = vmatpush1.msra.mxu0 %v1940
    %1974 = vmatprep.subr.mxu0 0.0
    %1975 = vmatpush1.msra.mxu0 %v1939
    %1976 = vmatprep.subr.mxu0 0.0
    %1977 = vmatpush1.msra.mxu0 %v1938
    %1978 = vmatprep.subr.mxu0 0.0
    %1979 = vmatpush1.msra.mxu0 %v1937
    %1980 = vmatprep.subr.mxu0 0.0
    %1981 = vmatpush1.msra.mxu0 %v1936
    %1982 = vmatprep.subr.mxu0 0.0
    %1983 = vmatpush1.msra.mxu0 %v1935
    %1984 = vmatprep.subr.mxu0 0.0
    %1985 = vmatpush1.msra.mxu0 %v1934
    %1986 = vmatprep.subr.mxu0 0.0
    %1987 = vmatpush1.msra.mxu0 %v1933
    %1988 = vmatprep.subr.mxu0 0.0
    %1989 = vmatpush2.msra.mxu0 0.0
    %1990 = vmatprep.subr.mxu0 0.0
    %1991 = vmatpush2.msra.mxu0 0.0
    %1992 = vmatprep.subr.mxu0 0.0
    %1993 = vmatpush2.msra.mxu0 0.0
    %1994 = vmatprep.subr.mxu0 0.0
    %1995 = vmatpush2.msra.mxu0 0.0
    %1996 = vmatprep.subr.mxu0 0.0
    %1997 = vmatpush2.msra.mxu0 0.0
    %1998 = vmatprep.subr.mxu0 0.0
    %1999 = vmatpush2.msra.mxu0 0.0
    %2000 = vmatprep.subr.mxu0 0.0
    %2001 = vmatpush2.msra.mxu0 0.0
    %2002 = vmatprep.subr.mxu0 0.0
    %2003 = vmatpush2.msra.mxu0 0.0
    %2004 = vmatprep.subr.mxu0 0.0
    %2005 = vmatpush2.msra.mxu0 0.0
    %2006 = vmatprep.subr.mxu0 0.0
    %2007 = vmatpush2.msra.mxu0 0.0
    %2008 = vmatprep.subr.mxu0 0.0
    %2009 = vmatpush2.msra.mxu0 0.0
    %2010 = vmatprep.subr.mxu0 0.0
    %2011 = vmatpush2.msra.mxu0 0.0
    %2012 = vmatprep.subr.mxu0 0.0
    %2013 = vmatpush2.msra.mxu0 0.0
    %2014 = vmatprep.subr.mxu0 0.0
    %2015 = vmatpush2.msra.mxu0 0.0
    %2016 = vmatprep.subr.mxu0 0.0
    %2017 = vmatpush2.msra.mxu0 0.0
    %2018 = vmatprep.subr.mxu0 0.0
    %2019 = vmatpush2.msra.mxu0 0.0
    %2020 = vmatprep.mubr.f32.mxu0 0.0
    %2021 = vmatmul.mubr.f32.gmra.mxu0 %v1932
    %v2022 = vpop.f32.mrf.mxu0
    %v2023 = vadd.f32 %v1954, %v2022
    %v2024 = vpop.f32.mrf.mxu0
    %2025 = vdwg.mxu0
    %s2026 = scalar_lea.vmem [#allocation5], 8
    %2027 = vst.msk [vmem:[%s2026] sm:$0x3] %vm541, %v2023
    %v2028 = vld [vmem:[%s2] sm:$0xff]
    %v2029 = vld [vmem:[%s2 + $0x8] sm:$0xff]
    %v2030 = vld [vmem:[%s2 + $0x10] sm:$0xff]
    %v2031 = vld [vmem:[%s2 + $0x18] sm:$0xff]
    %v2032 = vld [vmem:[%s2 + $0x20] sm:$0xff]
    %v2033 = vld [vmem:[%s2 + $0x28] sm:$0xff]
    %v2034 = vld [vmem:[%s2 + $0x30] sm:$0xff]
    %v2035 = vld [vmem:[%s2 + $0x38] sm:$0xff]
    %v2036 = vld [vmem:[%s2 + $0x40] sm:$0xff]
    %v2037 = vld [vmem:[%s2 + $0x48] sm:$0xff]
    %v2038 = vld [vmem:[%s2 + $0x50] sm:$0xff]
    %v2039 = vld [vmem:[%s2 + $0x58] sm:$0xff]
    %v2040 = vld [vmem:[%s4] sm:$0x7]
    %v2042 = vlaneseq
    %v2043 = vshrl.u32 %v2042, 7
    %v2044 = vsub.s32 0, %v2043
    %v2045 = vrot.slane %v2040, %v2044
    %v2046 = vlaneseq
    %v2047 = vshrl.u32 %v2046, 7
    %v2048 = vsub.s32 1, %v2047
    %v2049 = vrot.slane %v2040, %v2048
    %v2050 = vlaneseq
    %v2051 = vshrl.u32 %v2050, 7
    %v2052 = vsub.s32 2, %v2051
    %v2053 = vrot.slane %v2040, %v2052
    %v2058 = vsel %vm75, %v2023, 0
    %2060 = vmatprep.subr.mxu0 0.0
    %2061 = vmatpush1.msra.mxu0 0.0
    %2062 = vmatprep.subr.mxu0 0.0
    %2063 = vmatpush1.msra.mxu0 0.0
    %2064 = vmatprep.subr.mxu0 0.0
    %2065 = vmatpush1.msra.mxu0 0.0
    %2066 = vmatprep.subr.mxu0 0.0
    %2067 = vmatpush1.msra.mxu0 0.0
    %2068 = vmatprep.subr.mxu0 0.0
    %2069 = vmatpush1.msra.mxu0 0.0
    %2070 = vmatprep.subr.mxu0 0.0
    %2071 = vmatpush1.msra.mxu0 0.0
    %2072 = vmatprep.subr.mxu0 0.0
    %2073 = vmatpush1.msra.mxu0 0.0
    %2074 = vmatprep.subr.mxu0 0.0
    %2075 = vmatpush1.msra.mxu0 0.0
    %2076 = vmatprep.subr.mxu0 0.0
    %2077 = vmatpush1.msra.mxu0 0.0
    %2078 = vmatprep.subr.mxu0 0.0
    %2079 = vmatpush1.msra.mxu0 0.0
    %2080 = vmatprep.subr.mxu0 0.0
    %2081 = vmatpush1.msra.mxu0 0.0
    %2082 = vmatprep.subr.mxu0 0.0
    %2083 = vmatpush1.msra.mxu0 0.0
    %2084 = vmatprep.subr.mxu0 %v2038
    %2085 = vmatpush1.msra.mxu0 %v2037
    %2086 = vmatprep.subr.mxu0 %v2035
    %2087 = vmatpush1.msra.mxu0 %v2034
    %2088 = vmatprep.subr.mxu0 %v2032
    %2089 = vmatpush1.msra.mxu0 %v2031
    %2090 = vmatprep.subr.mxu0 %v2029
    %2091 = vmatpush1.msra.mxu0 %v2028
    %2092 = vmatprep.subr.mxu0 0.0
    %2093 = vmatpush2.msra.mxu0 0.0
    %2094 = vmatprep.subr.mxu0 0.0
    %2095 = vmatpush2.msra.mxu0 0.0
    %2096 = vmatprep.subr.mxu0 0.0
    %2097 = vmatpush2.msra.mxu0 0.0
    %2098 = vmatprep.subr.mxu0 0.0
    %2099 = vmatpush2.msra.mxu0 0.0
    %2100 = vmatprep.subr.mxu0 0.0
    %2101 = vmatpush2.msra.mxu0 0.0
    %2102 = vmatprep.subr.mxu0 0.0
    %2103 = vmatpush2.msra.mxu0 0.0
    %2104 = vmatprep.subr.mxu0 0.0
    %2105 = vmatpush2.msra.mxu0 0.0
    %2106 = vmatprep.subr.mxu0 0.0
    %2107 = vmatpush2.msra.mxu0 0.0
    %2108 = vmatprep.subr.mxu0 0.0
    %2109 = vmatpush2.msra.mxu0 0.0
    %2110 = vmatprep.subr.mxu0 0.0
    %2111 = vmatpush2.msra.mxu0 0.0
    %2112 = vmatprep.subr.mxu0 0.0
    %2113 = vmatpush2.msra.mxu0 0.0
    %2114 = vmatprep.subr.mxu0 0.0
    %2115 = vmatpush2.msra.mxu0 0.0
    %2116 = vmatprep.subr.mxu0 0.0
    %2117 = vmatpush2.msra.mxu0 0.0
    %2118 = vmatprep.subr.mxu0 0.0
    %2119 = vmatpush2.msra.mxu0 0.0
    %2120 = vmatprep.subr.mxu0 0.0
    %2121 = vmatpush2.msra.mxu0 0.0
    %2122 = vmatprep.subr.mxu0 0.0
    %2123 = vmatpush2.msra.mxu0 0.0
    %2124 = vmatprep.mubr.f32.mxu0 0.0
    %2125 = vmatmul.mubr.f32.gmra.mxu0 %v2058
    %v2126 = vpop.f32.mrf.mxu0
    %v2127 = vadd.f32 %v2045, %v2126
    %v2128 = vpop.f32.mrf.mxu0
    %v2129 = vadd.f32 %v2049, %v2128
    %2130 = vdwg.mxu0
    %2131 = vmatprep.subr.mxu0 0.0
    %2132 = vmatpush1.msra.mxu0 0.0
    %2133 = vmatprep.subr.mxu0 0.0
    %2134 = vmatpush1.msra.mxu0 0.0
    %2135 = vmatprep.subr.mxu0 0.0
    %2136 = vmatpush1.msra.mxu0 0.0
    %2137 = vmatprep.subr.mxu0 0.0
    %2138 = vmatpush1.msra.mxu0 0.0
    %2139 = vmatprep.subr.mxu0 0.0
    %2140 = vmatpush1.msra.mxu0 0.0
    %2141 = vmatprep.subr.mxu0 0.0
    %2142 = vmatpush1.msra.mxu0 0.0
    %2143 = vmatprep.subr.mxu0 0.0
    %2144 = vmatpush1.msra.mxu0 0.0
    %2145 = vmatprep.subr.mxu0 0.0
    %2146 = vmatpush1.msra.mxu0 0.0
    %2147 = vmatprep.subr.mxu0 0.0
    %2148 = vmatpush1.msra.mxu0 0.0
    %2149 = vmatprep.subr.mxu0 0.0
    %2150 = vmatpush1.msra.mxu0 0.0
    %2151 = vmatprep.subr.mxu0 0.0
    %2152 = vmatpush1.msra.mxu0 0.0
    %2153 = vmatprep.subr.mxu0 0.0
    %2154 = vmatpush1.msra.mxu0 0.0
    %2155 = vmatprep.subr.mxu0 0.0
    %2156 = vmatpush1.msra.mxu0 %v2039
    %2157 = vmatprep.subr.mxu0 0.0
    %2158 = vmatpush1.msra.mxu0 %v2036
    %2159 = vmatprep.subr.mxu0 0.0
    %2160 = vmatpush1.msra.mxu0 %v2033
    %2161 = vmatprep.subr.mxu0 0.0
    %2162 = vmatpush1.msra.mxu0 %v2030
    %2163 = vmatprep.subr.mxu0 0.0
    %2164 = vmatpush2.msra.mxu0 0.0
    %2165 = vmatprep.subr.mxu0 0.0
    %2166 = vmatpush2.msra.mxu0 0.0
    %2167 = vmatprep.subr.mxu0 0.0
    %2168 = vmatpush2.msra.mxu0 0.0
    %2169 = vmatprep.subr.mxu0 0.0
    %2170 = vmatpush2.msra.mxu0 0.0
    %2171 = vmatprep.subr.mxu0 0.0
    %2172 = vmatpush2.msra.mxu0 0.0
    %2173 = vmatprep.subr.mxu0 0.0
    %2174 = vmatpush2.msra.mxu0 0.0
    %2175 = vmatprep.subr.mxu0 0.0
    %2176 = vmatpush2.msra.mxu0 0.0
    %2177 = vmatprep.subr.mxu0 0.0
    %2178 = vmatpush2.msra.mxu0 0.0
    %2179 = vmatprep.subr.mxu0 0.0
    %2180 = vmatpush2.msra.mxu0 0.0
    %2181 = vmatprep.subr.mxu0 0.0
    %2182 = vmatpush2.msra.mxu0 0.0
    %2183 = vmatprep.subr.mxu0 0.0
    %2184 = vmatpush2.msra.mxu0 0.0
    %2185 = vmatprep.subr.mxu0 0.0
    %2186 = vmatpush2.msra.mxu0 0.0
    %2187 = vmatprep.subr.mxu0 0.0
    %2188 = vmatpush2.msra.mxu0 0.0
    %2189 = vmatprep.subr.mxu0 0.0
    %2190 = vmatpush2.msra.mxu0 0.0
    %2191 = vmatprep.subr.mxu0 0.0
    %2192 = vmatpush2.msra.mxu0 0.0
    %2193 = vmatprep.subr.mxu0 0.0
    %2194 = vmatpush2.msra.mxu0 0.0
    %2195 = vmatprep.mubr.f32.mxu0 0.0
    %2196 = vmatmul.mubr.f32.gmra.mxu0 %v2058
    %v2197 = vpop.f32.mrf.mxu0
    %v2198 = vadd.f32 %v2053, %v2197
    %v2199 = vpop.f32.mrf.mxu0
    %2200 = vdwg.mxu0
    %v2201 = vld [vmem:[#allocation2] sm:$0xff]
    %v2202 = vld [vmem:[#allocation2 + $0x8] sm:$0xff]
    %v2203 = vld [vmem:[#allocation2 + $0x10] sm:$0xff]
    %v2204 = vld [vmem:[#allocation2 + $0x18] sm:$0xff]
    %v2205 = vld [vmem:[#allocation2 + $0x20] sm:$0xff]
    %v2206 = vld [vmem:[#allocation2 + $0x28] sm:$0xff]
    %v2207 = vld [vmem:[#allocation2 + $0x30] sm:$0xff]
    %v2208 = vld [vmem:[#allocation2 + $0x38] sm:$0xff]
    %v2209 = vld [vmem:[#allocation2 + $0x40] sm:$0xff]
    %v2210 = vld [vmem:[#allocation2 + $0x48] sm:$0xff]
    %v2211 = vld [vmem:[#allocation2 + $0x50] sm:$0xff]
    %v2212 = vld [vmem:[#allocation2 + $0x58] sm:$0xff]
    %v2213 = vld [vmem:[#allocation2 + $0x60] sm:$0xff]
    %v2214 = vld [vmem:[#allocation2 + $0x68] sm:$0xff]
    %v2215 = vld [vmem:[#allocation2 + $0x70] sm:$0xff]
    %v2216 = vld [vmem:[#allocation2 + $0x78] sm:$0xff]
    %v2217 = vld [vmem:[#allocation2 + $0x80] sm:$0xff]
    %v2218 = vld [vmem:[#allocation2 + $0x88] sm:$0xff]
    %v2219 = vld [vmem:[#allocation2 + $0x90] sm:$0xff]
    %v2220 = vld [vmem:[#allocation2 + $0x98] sm:$0xff]
    %v2221 = vld [vmem:[#allocation2 + $0xa0] sm:$0xff]
    %v2222 = vld [vmem:[#allocation2 + $0xa8] sm:$0xff]
    %v2223 = vld [vmem:[#allocation2 + $0xb0] sm:$0xff]
    %v2224 = vld [vmem:[#allocation2 + $0xb8] sm:$0xff]
    %v2225 = vld [vmem:[#allocation2 + $0xc0] sm:$0xff]
    %v2226 = vld [vmem:[#allocation2 + $0xc8] sm:$0xff]
    %v2227 = vld [vmem:[#allocation2 + $0xd0] sm:$0xff]
    %v2228 = vld [vmem:[#allocation2 + $0xd8] sm:$0xff]
    %v2229 = vld [vmem:[#allocation2 + $0xe0] sm:$0xff]
    %v2230 = vld [vmem:[#allocation2 + $0xe8] sm:$0xff]
    %v2231 = vld [vmem:[#allocation2 + $0xf0] sm:$0xff]
    %v2232 = vld [vmem:[#allocation2 + $0xf8] sm:$0xff]
    %v2233 = vld [vmem:[#allocation2 + $0x100] sm:$0xff]
    %v2234 = vld [vmem:[#allocation2 + $0x108] sm:$0xff]
    %v2235 = vld [vmem:[#allocation2 + $0x110] sm:$0xff]
    %v2236 = vld [vmem:[#allocation2 + $0x118] sm:$0xff]
    %v2237 = vld [vmem:[#allocation2 + $0x120] sm:$0xff]
    %v2238 = vld [vmem:[#allocation2 + $0x128] sm:$0xff]
    %v2239 = vld [vmem:[#allocation2 + $0x130] sm:$0xff]
    %v2240 = vld [vmem:[#allocation2 + $0x138] sm:$0xff]
    %v2241 = vld [vmem:[#allocation2 + $0x140] sm:$0xff]
    %v2242 = vld [vmem:[#allocation2 + $0x148] sm:$0xff]
    %v2243 = vld [vmem:[#allocation2 + $0x150] sm:$0xff]
    %v2244 = vld [vmem:[#allocation2 + $0x158] sm:$0xff]
    %v2245 = vld [vmem:[#allocation2 + $0x160] sm:$0xff]
    %v2246 = vld [vmem:[#allocation2 + $0x168] sm:$0xff]
    %v2247 = vld [vmem:[#allocation2 + $0x170] sm:$0xff]
    %v2248 = vld [vmem:[#allocation2 + $0x178] sm:$0xff]
    %v2249 = vld [vmem:[%s5] sm:$0x7]
    %v2251 = vlaneseq
    %v2252 = vshrl.u32 %v2251, 7
    %v2253 = vsub.s32 0, %v2252
    %v2254 = vrot.slane %v2249, %v2253
    %v2255 = vlaneseq
    %v2256 = vshrl.u32 %v2255, 7
    %v2257 = vsub.s32 1, %v2256
    %v2258 = vrot.slane %v2249, %v2257
    %v2259 = vlaneseq
    %v2260 = vshrl.u32 %v2259, 7
    %v2261 = vsub.s32 2, %v2260
    %v2262 = vrot.slane %v2249, %v2261
    %2266 = vmatprep.subr.mxu0 %v2247
    %2267 = vmatpush1.msra.mxu0 %v2246
    %2268 = vmatprep.subr.mxu0 %v2244
    %2269 = vmatpush1.msra.mxu0 %v2243
    %2270 = vmatprep.subr.mxu0 %v2241
    %2271 = vmatpush1.msra.mxu0 %v2240
    %2272 = vmatprep.subr.mxu0 %v2238
    %2273 = vmatpush1.msra.mxu0 %v2237
    %2274 = vmatprep.subr.mxu0 %v2235
    %2275 = vmatpush1.msra.mxu0 %v2234
    %2276 = vmatprep.subr.mxu0 %v2232
    %2277 = vmatpush1.msra.mxu0 %v2231
    %2278 = vmatprep.subr.mxu0 %v2229
    %2279 = vmatpush1.msra.mxu0 %v2228
    %2280 = vmatprep.subr.mxu0 %v2226
    %2281 = vmatpush1.msra.mxu0 %v2225
    %2282 = vmatprep.subr.mxu0 %v2223
    %2283 = vmatpush1.msra.mxu0 %v2222
    %2284 = vmatprep.subr.mxu0 %v2220
    %2285 = vmatpush1.msra.mxu0 %v2219
    %2286 = vmatprep.subr.mxu0 %v2217
    %2287 = vmatpush1.msra.mxu0 %v2216
    %2288 = vmatprep.subr.mxu0 %v2214
    %2289 = vmatpush1.msra.mxu0 %v2213
    %2290 = vmatprep.subr.mxu0 %v2211
    %2291 = vmatpush1.msra.mxu0 %v2210
    %2292 = vmatprep.subr.mxu0 %v2208
    %2293 = vmatpush1.msra.mxu0 %v2207
    %2294 = vmatprep.subr.mxu0 %v2205
    %2295 = vmatpush1.msra.mxu0 %v2204
    %2296 = vmatprep.subr.mxu0 %v2202
    %2297 = vmatpush1.msra.mxu0 %v2201
    %2298 = vmatprep.subr.mxu0 0.0
    %2299 = vmatpush2.msra.mxu0 0.0
    %2300 = vmatprep.subr.mxu0 0.0
    %2301 = vmatpush2.msra.mxu0 0.0
    %2302 = vmatprep.subr.mxu0 0.0
    %2303 = vmatpush2.msra.mxu0 0.0
    %2304 = vmatprep.subr.mxu0 0.0
    %2305 = vmatpush2.msra.mxu0 0.0
    %2306 = vmatprep.subr.mxu0 0.0
    %2307 = vmatpush2.msra.mxu0 0.0
    %2308 = vmatprep.subr.mxu0 0.0
    %2309 = vmatpush2.msra.mxu0 0.0
    %2310 = vmatprep.subr.mxu0 0.0
    %2311 = vmatpush2.msra.mxu0 0.0
    %2312 = vmatprep.subr.mxu0 0.0
    %2313 = vmatpush2.msra.mxu0 0.0
    %2314 = vmatprep.subr.mxu0 0.0
    %2315 = vmatpush2.msra.mxu0 0.0
    %2316 = vmatprep.subr.mxu0 0.0
    %2317 = vmatpush2.msra.mxu0 0.0
    %2318 = vmatprep.subr.mxu0 0.0
    %2319 = vmatpush2.msra.mxu0 0.0
    %2320 = vmatprep.subr.mxu0 0.0
    %2321 = vmatpush2.msra.mxu0 0.0
    %2322 = vmatprep.subr.mxu0 0.0
    %2323 = vmatpush2.msra.mxu0 0.0
    %2324 = vmatprep.subr.mxu0 0.0
    %2325 = vmatpush2.msra.mxu0 0.0
    %2326 = vmatprep.subr.mxu0 0.0
    %2327 = vmatpush2.msra.mxu0 0.0
    %2328 = vmatprep.subr.mxu0 0.0
    %2329 = vmatpush2.msra.mxu0 0.0
    %2330 = vmatprep.mubr.f32.mxu0 0.0
    %2331 = vmatmul.mubr.f32.gmra.mxu0 %v1932
    %v2332 = vpop.f32.mrf.mxu0
    %v2333 = vadd.f32 %v2254, %v2332
    %v2334 = vpop.f32.mrf.mxu0
    %v2335 = vadd.f32 %v2258, %v2334
    %2336 = vdwg.mxu0
    %2337 = vmatprep.subr.mxu0 0.0
    %2338 = vmatpush1.msra.mxu0 %v2248
    %2339 = vmatprep.subr.mxu0 0.0
    %2340 = vmatpush1.msra.mxu0 %v2245
    %2341 = vmatprep.subr.mxu0 0.0
    %2342 = vmatpush1.msra.mxu0 %v2242
    %2343 = vmatprep.subr.mxu0 0.0
    %2344 = vmatpush1.msra.mxu0 %v2239
    %2345 = vmatprep.subr.mxu0 0.0
    %2346 = vmatpush1.msra.mxu0 %v2236
    %2347 = vmatprep.subr.mxu0 0.0
    %2348 = vmatpush1.msra.mxu0 %v2233
    %2349 = vmatprep.subr.mxu0 0.0
    %2350 = vmatpush1.msra.mxu0 %v2230
    %2351 = vmatprep.subr.mxu0 0.0
    %2352 = vmatpush1.msra.mxu0 %v2227
    %2353 = vmatprep.subr.mxu0 0.0
    %2354 = vmatpush1.msra.mxu0 %v2224
    %2355 = vmatprep.subr.mxu0 0.0
    %2356 = vmatpush1.msra.mxu0 %v2221
    %2357 = vmatprep.subr.mxu0 0.0
    %2358 = vmatpush1.msra.mxu0 %v2218
    %2359 = vmatprep.subr.mxu0 0.0
    %2360 = vmatpush1.msra.mxu0 %v2215
    %2361 = vmatprep.subr.mxu0 0.0
    %2362 = vmatpush1.msra.mxu0 %v2212
    %2363 = vmatprep.subr.mxu0 0.0
    %2364 = vmatpush1.msra.mxu0 %v2209
    %2365 = vmatprep.subr.mxu0 0.0
    %2366 = vmatpush1.msra.mxu0 %v2206
    %2367 = vmatprep.subr.mxu0 0.0
    %2368 = vmatpush1.msra.mxu0 %v2203
    %2369 = vmatprep.subr.mxu0 0.0
    %2370 = vmatpush2.msra.mxu0 0.0
    %2371 = vmatprep.subr.mxu0 0.0
    %2372 = vmatpush2.msra.mxu0 0.0
    %2373 = vmatprep.subr.mxu0 0.0
    %2374 = vmatpush2.msra.mxu0 0.0
    %2375 = vmatprep.subr.mxu0 0.0
    %2376 = vmatpush2.msra.mxu0 0.0
    %2377 = vmatprep.subr.mxu0 0.0
    %2378 = vmatpush2.msra.mxu0 0.0
    %2379 = vmatprep.subr.mxu0 0.0
    %2380 = vmatpush2.msra.mxu0 0.0
    %2381 = vmatprep.subr.mxu0 0.0
    %2382 = vmatpush2.msra.mxu0 0.0
    %2383 = vmatprep.subr.mxu0 0.0
    %2384 = vmatpush2.msra.mxu0 0.0
    %2385 = vmatprep.subr.mxu0 0.0
    %2386 = vmatpush2.msra.mxu0 0.0
    %2387 = vmatprep.subr.mxu0 0.0
    %2388 = vmatpush2.msra.mxu0 0.0
    %2389 = vmatprep.subr.mxu0 0.0
    %2390 = vmatpush2.msra.mxu0 0.0
    %2391 = vmatprep.subr.mxu0 0.0
    %2392 = vmatpush2.msra.mxu0 0.0
    %2393 = vmatprep.subr.mxu0 0.0
    %2394 = vmatpush2.msra.mxu0 0.0
    %2395 = vmatprep.subr.mxu0 0.0
    %2396 = vmatpush2.msra.mxu0 0.0
    %2397 = vmatprep.subr.mxu0 0.0
    %2398 = vmatpush2.msra.mxu0 0.0
    %2399 = vmatprep.subr.mxu0 0.0
    %2400 = vmatpush2.msra.mxu0 0.0
    %2401 = vmatprep.mubr.f32.mxu0 0.0
    %2402 = vmatmul.mubr.f32.gmra.mxu0 %v1932
    %v2403 = vpop.f32.mrf.mxu0
    %v2404 = vadd.f32 %v2262, %v2403
    %v2405 = vpop.f32.mrf.mxu0
    %2406 = vdwg.mxu0
    %v2407 = vadd.f32 %v2127, %v2333
    %v2408 = vxor.u32 %v2407, 2147483648
    %v2409 = vmul.f32 %v2408, 1.442695
    %v2410 = vpow.pop %v2409
    %v2411 = vadd.f32 %v2410, 1.0
    %v2412 = vrcp.pop %v2411
    %v2413 = vmul.f32 1.0, %v2412
    %v2414 = vadd.f32 %v2129, %v2335
    %v2415 = vxor.u32 %v2414, 2147483648
    %v2416 = vmul.f32 %v2415, 1.442695
    %v2417 = vpow.pop %v2416
    %v2418 = vadd.f32 %v2417, 1.0
    %v2419 = vrcp.pop %v2418
    %v2420 = vmul.f32 1.0, %v2419
    %v2421 = vmul.f32 %v2413, %v2404
    %v2422 = vadd.f32 %v2198, %v2421
    %v2423 = vtanh.pop %v2422
    %v2424 = vsub.f32 1.0, %v2420
    %v2425 = vmul.f32 %v2424, %v2423
    %v2426 = vmul.f32 %v2420, %v1932
    %v2427 = vadd.f32 %v2425, %v2426
    %v2428 = vld [vmem:[%s6] sm:$0xff]
    %v2429 = vld [vmem:[%s6 + $0x8] sm:$0xff]
    %v2430 = vld [vmem:[%s6 + $0x10] sm:$0xff]
    %v2431 = vld [vmem:[%s6 + $0x18] sm:$0xff]
    %v2432 = vld [vmem:[%s6 + $0x20] sm:$0xff]
    %v2433 = vld [vmem:[%s6 + $0x28] sm:$0xff]
    %v2434 = vld [vmem:[%s6 + $0x30] sm:$0xff]
    %v2435 = vld [vmem:[%s6 + $0x38] sm:$0xff]
    %v2436 = vld [vmem:[%s6 + $0x40] sm:$0xff]
    %v2437 = vld [vmem:[%s6 + $0x48] sm:$0xff]
    %v2438 = vld [vmem:[%s6 + $0x50] sm:$0xff]
    %v2439 = vld [vmem:[%s6 + $0x58] sm:$0xff]
    %v2440 = vld [vmem:[%s6 + $0x60] sm:$0xff]
    %v2441 = vld [vmem:[%s6 + $0x68] sm:$0xff]
    %v2442 = vld [vmem:[%s6 + $0x70] sm:$0xff]
    %v2443 = vld [vmem:[%s6 + $0x78] sm:$0xff]
    %v2444 = vld [vmem:[%s7] sm:$0x1]
    %v2446 = vlaneseq
    %v2447 = vshrl.u32 %v2446, 7
    %v2448 = vsub.s32 0, %v2447
    %v2449 = vrot.slane %v2444, %v2448
    %2451 = vmatprep.subr.mxu0 0.0
    %2452 = vmatpush1.msra.mxu0 %v2443
    %2453 = vmatprep.subr.mxu0 0.0
    %2454 = vmatpush1.msra.mxu0 %v2442
    %2455 = vmatprep.subr.mxu0 0.0
    %2456 = vmatpush1.msra.mxu0 %v2441
    %2457 = vmatprep.subr.mxu0 0.0
    %2458 = vmatpush1.msra.mxu0 %v2440
    %2459 = vmatprep.subr.mxu0 0.0
    %2460 = vmatpush1.msra.mxu0 %v2439
    %2461 = vmatprep.subr.mxu0 0.0
    %2462 = vmatpush1.msra.mxu0 %v2438
    %2463 = vmatprep.subr.mxu0 0.0
    %2464 = vmatpush1.msra.mxu0 %v2437
    %2465 = vmatprep.subr.mxu0 0.0
    %2466 = vmatpush1.msra.mxu0 %v2436
    %2467 = vmatprep.subr.mxu0 0.0
    %2468 = vmatpush1.msra.mxu0 %v2435
    %2469 = vmatprep.subr.mxu0 0.0
    %2470 = vmatpush1.msra.mxu0 %v2434
    %2471 = vmatprep.subr.mxu0 0.0
    %2472 = vmatpush1.msra.mxu0 %v2433
    %2473 = vmatprep.subr.mxu0 0.0
    %2474 = vmatpush1.msra.mxu0 %v2432
    %2475 = vmatprep.subr.mxu0 0.0
    %2476 = vmatpush1.msra.mxu0 %v2431
    %2477 = vmatprep.subr.mxu0 0.0
    %2478 = vmatpush1.msra.mxu0 %v2430
    %2479 = vmatprep.subr.mxu0 0.0
    %2480 = vmatpush1.msra.mxu0 %v2429
    %2481 = vmatprep.subr.mxu0 0.0
    %2482 = vmatpush1.msra.mxu0 %v2428
    %2483 = vmatprep.subr.mxu0 0.0
    %2484 = vmatpush2.msra.mxu0 0.0
    %2485 = vmatprep.subr.mxu0 0.0
    %2486 = vmatpush2.msra.mxu0 0.0
    %2487 = vmatprep.subr.mxu0 0.0
    %2488 = vmatpush2.msra.mxu0 0.0
    %2489 = vmatprep.subr.mxu0 0.0
    %2490 = vmatpush2.msra.mxu0 0.0
    %2491 = vmatprep.subr.mxu0 0.0
    %2492 = vmatpush2.msra.mxu0 0.0
    %2493 = vmatprep.subr.mxu0 0.0
    %2494 = vmatpush2.msra.mxu0 0.0
    %2495 = vmatprep.subr.mxu0 0.0
    %2496 = vmatpush2.msra.mxu0 0.0
    %2497 = vmatprep.subr.mxu0 0.0
    %2498 = vmatpush2.msra.mxu0 0.0
    %2499 = vmatprep.subr.mxu0 0.0
    %2500 = vmatpush2.msra.mxu0 0.0
    %2501 = vmatprep.subr.mxu0 0.0
    %2502 = vmatpush2.msra.mxu0 0.0
    %2503 = vmatprep.subr.mxu0 0.0
    %2504 = vmatpush2.msra.mxu0 0.0
    %2505 = vmatprep.subr.mxu0 0.0
    %2506 = vmatpush2.msra.mxu0 0.0
    %2507 = vmatprep.subr.mxu0 0.0
    %2508 = vmatpush2.msra.mxu0 0.0
    %2509 = vmatprep.subr.mxu0 0.0
    %2510 = vmatpush2.msra.mxu0 0.0
    %2511 = vmatprep.subr.mxu0 0.0
    %2512 = vmatpush2.msra.mxu0 0.0
    %2513 = vmatprep.subr.mxu0 0.0
    %2514 = vmatpush2.msra.mxu0 0.0
    %2515 = vmatprep.mubr.f32.mxu0 0.0
    %2516 = vmatmul.mubr.f32.gmra.mxu0 %v2427
    %v2517 = vpop.f32.mrf.mxu0
    %v2518 = vadd.f32 %v2449, %v2517
    %v2519 = vpop.f32.mrf.mxu0
    %2520 = vdwg.mxu0
    %s2521 = scalar_lea.vmem [#allocation5], 6
    %2522 = vst.msk [vmem:[%s2521] sm:$0x3] %vm541, %v2518
    %v2523 = vld [vmem:[%s2] sm:$0xff]
    %v2524 = vld [vmem:[%s2 + $0x8] sm:$0xff]
    %v2525 = vld [vmem:[%s2 + $0x10] sm:$0xff]
    %v2526 = vld [vmem:[%s2 + $0x18] sm:$0xff]
    %v2527 = vld [vmem:[%s2 + $0x20] sm:$0xff]
    %v2528 = vld [vmem:[%s2 + $0x28] sm:$0xff]
    %v2529 = vld [vmem:[%s2 + $0x30] sm:$0xff]
    %v2530 = vld [vmem:[%s2 + $0x38] sm:$0xff]
    %v2531 = vld [vmem:[%s2 + $0x40] sm:$0xff]
    %v2532 = vld [vmem:[%s2 + $0x48] sm:$0xff]
    %v2533 = vld [vmem:[%s2 + $0x50] sm:$0xff]
    %v2534 = vld [vmem:[%s2 + $0x58] sm:$0xff]
    %v2535 = vld [vmem:[%s4] sm:$0x7]
    %v2537 = vlaneseq
    %v2538 = vshrl.u32 %v2537, 7
    %v2539 = vsub.s32 0, %v2538
    %v2540 = vrot.slane %v2535, %v2539
    %v2541 = vlaneseq
    %v2542 = vshrl.u32 %v2541, 7
    %v2543 = vsub.s32 1, %v2542
    %v2544 = vrot.slane %v2535, %v2543
    %v2545 = vlaneseq
    %v2546 = vshrl.u32 %v2545, 7
    %v2547 = vsub.s32 2, %v2546
    %v2548 = vrot.slane %v2535, %v2547
    %v2553 = vsel %vm75, %v2518, 0
    %2555 = vmatprep.subr.mxu0 0.0
    %2556 = vmatpush1.msra.mxu0 0.0
    %2557 = vmatprep.subr.mxu0 0.0
    %2558 = vmatpush1.msra.mxu0 0.0
    %2559 = vmatprep.subr.mxu0 0.0
    %2560 = vmatpush1.msra.mxu0 0.0
    %2561 = vmatprep.subr.mxu0 0.0
    %2562 = vmatpush1.msra.mxu0 0.0
    %2563 = vmatprep.subr.mxu0 0.0
    %2564 = vmatpush1.msra.mxu0 0.0
    %2565 = vmatprep.subr.mxu0 0.0
    %2566 = vmatpush1.msra.mxu0 0.0
    %2567 = vmatprep.subr.mxu0 0.0
    %2568 = vmatpush1.msra.mxu0 0.0
    %2569 = vmatprep.subr.mxu0 0.0
    %2570 = vmatpush1.msra.mxu0 0.0
    %2571 = vmatprep.subr.mxu0 0.0
    %2572 = vmatpush1.msra.mxu0 0.0
    %2573 = vmatprep.subr.mxu0 0.0
    %2574 = vmatpush1.msra.mxu0 0.0
    %2575 = vmatprep.subr.mxu0 0.0
    %2576 = vmatpush1.msra.mxu0 0.0
    %2577 = vmatprep.subr.mxu0 0.0
    %2578 = vmatpush1.msra.mxu0 0.0
    %2579 = vmatprep.subr.mxu0 %v2533
    %2580 = vmatpush1.msra.mxu0 %v2532
    %2581 = vmatprep.subr.mxu0 %v2530
    %2582 = vmatpush1.msra.mxu0 %v2529
    %2583 = vmatprep.subr.mxu0 %v2527
    %2584 = vmatpush1.msra.mxu0 %v2526
    %2585 = vmatprep.subr.mxu0 %v2524
    %2586 = vmatpush1.msra.mxu0 %v2523
    %2587 = vmatprep.subr.mxu0 0.0
    %2588 = vmatpush2.msra.mxu0 0.0
    %2589 = vmatprep.subr.mxu0 0.0
    %2590 = vmatpush2.msra.mxu0 0.0
    %2591 = vmatprep.subr.mxu0 0.0
    %2592 = vmatpush2.msra.mxu0 0.0
    %2593 = vmatprep.subr.mxu0 0.0
    %2594 = vmatpush2.msra.mxu0 0.0
    %2595 = vmatprep.subr.mxu0 0.0
    %2596 = vmatpush2.msra.mxu0 0.0
    %2597 = vmatprep.subr.mxu0 0.0
    %2598 = vmatpush2.msra.mxu0 0.0
    %2599 = vmatprep.subr.mxu0 0.0
    %2600 = vmatpush2.msra.mxu0 0.0
    %2601 = vmatprep.subr.mxu0 0.0
    %2602 = vmatpush2.msra.mxu0 0.0
    %2603 = vmatprep.subr.mxu0 0.0
    %2604 = vmatpush2.msra.mxu0 0.0
    %2605 = vmatprep.subr.mxu0 0.0
    %2606 = vmatpush2.msra.mxu0 0.0
    %2607 = vmatprep.subr.mxu0 0.0
    %2608 = vmatpush2.msra.mxu0 0.0
    %2609 = vmatprep.subr.mxu0 0.0
    %2610 = vmatpush2.msra.mxu0 0.0
    %2611 = vmatprep.subr.mxu0 0.0
    %2612 = vmatpush2.msra.mxu0 0.0
    %2613 = vmatprep.subr.mxu0 0.0
    %2614 = vmatpush2.msra.mxu0 0.0
    %2615 = vmatprep.subr.mxu0 0.0
    %2616 = vmatpush2.msra.mxu0 0.0
    %2617 = vmatprep.subr.mxu0 0.0
    %2618 = vmatpush2.msra.mxu0 0.0
    %2619 = vmatprep.mubr.f32.mxu0 0.0
    %2620 = vmatmul.mubr.f32.gmra.mxu0 %v2553
    %v2621 = vpop.f32.mrf.mxu0
    %v2622 = vadd.f32 %v2540, %v2621
    %v2623 = vpop.f32.mrf.mxu0
    %v2624 = vadd.f32 %v2544, %v2623
    %2625 = vdwg.mxu0
    %2626 = vmatprep.subr.mxu0 0.0
    %2627 = vmatpush1.msra.mxu0 0.0
    %2628 = vmatprep.subr.mxu0 0.0
    %2629 = vmatpush1.msra.mxu0 0.0
    %2630 = vmatprep.subr.mxu0 0.0
    %2631 = vmatpush1.msra.mxu0 0.0
    %2632 = vmatprep.subr.mxu0 0.0
    %2633 = vmatpush1.msra.mxu0 0.0
    %2634 = vmatprep.subr.mxu0 0.0
    %2635 = vmatpush1.msra.mxu0 0.0
    %2636 = vmatprep.subr.mxu0 0.0
    %2637 = vmatpush1.msra.mxu0 0.0
    %2638 = vmatprep.subr.mxu0 0.0
    %2639 = vmatpush1.msra.mxu0 0.0
    %2640 = vmatprep.subr.mxu0 0.0
    %2641 = vmatpush1.msra.mxu0 0.0
    %2642 = vmatprep.subr.mxu0 0.0
    %2643 = vmatpush1.msra.mxu0 0.0
    %2644 = vmatprep.subr.mxu0 0.0
    %2645 = vmatpush1.msra.mxu0 0.0
    %2646 = vmatprep.subr.mxu0 0.0
    %2647 = vmatpush1.msra.mxu0 0.0
    %2648 = vmatprep.subr.mxu0 0.0
    %2649 = vmatpush1.msra.mxu0 0.0
    %2650 = vmatprep.subr.mxu0 0.0
    %2651 = vmatpush1.msra.mxu0 %v2534
    %2652 = vmatprep.subr.mxu0 0.0
    %2653 = vmatpush1.msra.mxu0 %v2531
    %2654 = vmatprep.subr.mxu0 0.0
    %2655 = vmatpush1.msra.mxu0 %v2528
    %2656 = vmatprep.subr.mxu0 0.0
    %2657 = vmatpush1.msra.mxu0 %v2525
    %2658 = vmatprep.subr.mxu0 0.0
    %2659 = vmatpush2.msra.mxu0 0.0
    %2660 = vmatprep.subr.mxu0 0.0
    %2661 = vmatpush2.msra.mxu0 0.0
    %2662 = vmatprep.subr.mxu0 0.0
    %2663 = vmatpush2.msra.mxu0 0.0
    %2664 = vmatprep.subr.mxu0 0.0
    %2665 = vmatpush2.msra.mxu0 0.0
    %2666 = vmatprep.subr.mxu0 0.0
    %2667 = vmatpush2.msra.mxu0 0.0
    %2668 = vmatprep.subr.mxu0 0.0
    %2669 = vmatpush2.msra.mxu0 0.0
    %2670 = vmatprep.subr.mxu0 0.0
    %2671 = vmatpush2.msra.mxu0 0.0
    %2672 = vmatprep.subr.mxu0 0.0
    %2673 = vmatpush2.msra.mxu0 0.0
    %2674 = vmatprep.subr.mxu0 0.0
    %2675 = vmatpush2.msra.mxu0 0.0
    %2676 = vmatprep.subr.mxu0 0.0
    %2677 = vmatpush2.msra.mxu0 0.0
    %2678 = vmatprep.subr.mxu0 0.0
    %2679 = vmatpush2.msra.mxu0 0.0
    %2680 = vmatprep.subr.mxu0 0.0
    %2681 = vmatpush2.msra.mxu0 0.0
    %2682 = vmatprep.subr.mxu0 0.0
    %2683 = vmatpush2.msra.mxu0 0.0
    %2684 = vmatprep.subr.mxu0 0.0
    %2685 = vmatpush2.msra.mxu0 0.0
    %2686 = vmatprep.subr.mxu0 0.0
    %2687 = vmatpush2.msra.mxu0 0.0
    %2688 = vmatprep.subr.mxu0 0.0
    %2689 = vmatpush2.msra.mxu0 0.0
    %2690 = vmatprep.mubr.f32.mxu0 0.0
    %2691 = vmatmul.mubr.f32.gmra.mxu0 %v2553
    %v2692 = vpop.f32.mrf.mxu0
    %v2693 = vadd.f32 %v2548, %v2692
    %v2694 = vpop.f32.mrf.mxu0
    %2695 = vdwg.mxu0
    %v2696 = vld [vmem:[#allocation2] sm:$0xff]
    %v2697 = vld [vmem:[#allocation2 + $0x8] sm:$0xff]
    %v2698 = vld [vmem:[#allocation2 + $0x10] sm:$0xff]
    %v2699 = vld [vmem:[#allocation2 + $0x18] sm:$0xff]
    %v2700 = vld [vmem:[#allocation2 + $0x20] sm:$0xff]
    %v2701 = vld [vmem:[#allocation2 + $0x28] sm:$0xff]
    %v2702 = vld [vmem:[#allocation2 + $0x30] sm:$0xff]
    %v2703 = vld [vmem:[#allocation2 + $0x38] sm:$0xff]
    %v2704 = vld [vmem:[#allocation2 + $0x40] sm:$0xff]
    %v2705 = vld [vmem:[#allocation2 + $0x48] sm:$0xff]
    %v2706 = vld [vmem:[#allocation2 + $0x50] sm:$0xff]
    %v2707 = vld [vmem:[#allocation2 + $0x58] sm:$0xff]
    %v2708 = vld [vmem:[#allocation2 + $0x60] sm:$0xff]
    %v2709 = vld [vmem:[#allocation2 + $0x68] sm:$0xff]
    %v2710 = vld [vmem:[#allocation2 + $0x70] sm:$0xff]
    %v2711 = vld [vmem:[#allocation2 + $0x78] sm:$0xff]
    %v2712 = vld [vmem:[#allocation2 + $0x80] sm:$0xff]
    %v2713 = vld [vmem:[#allocation2 + $0x88] sm:$0xff]
    %v2714 = vld [vmem:[#allocation2 + $0x90] sm:$0xff]
    %v2715 = vld [vmem:[#allocation2 + $0x98] sm:$0xff]
    %v2716 = vld [vmem:[#allocation2 + $0xa0] sm:$0xff]
    %v2717 = vld [vmem:[#allocation2 + $0xa8] sm:$0xff]
    %v2718 = vld [vmem:[#allocation2 + $0xb0] sm:$0xff]
    %v2719 = vld [vmem:[#allocation2 + $0xb8] sm:$0xff]
    %v2720 = vld [vmem:[#allocation2 + $0xc0] sm:$0xff]
    %v2721 = vld [vmem:[#allocation2 + $0xc8] sm:$0xff]
    %v2722 = vld [vmem:[#allocation2 + $0xd0] sm:$0xff]
    %v2723 = vld [vmem:[#allocation2 + $0xd8] sm:$0xff]
    %v2724 = vld [vmem:[#allocation2 + $0xe0] sm:$0xff]
    %v2725 = vld [vmem:[#allocation2 + $0xe8] sm:$0xff]
    %v2726 = vld [vmem:[#allocation2 + $0xf0] sm:$0xff]
    %v2727 = vld [vmem:[#allocation2 + $0xf8] sm:$0xff]
    %v2728 = vld [vmem:[#allocation2 + $0x100] sm:$0xff]
    %v2729 = vld [vmem:[#allocation2 + $0x108] sm:$0xff]
    %v2730 = vld [vmem:[#allocation2 + $0x110] sm:$0xff]
    %v2731 = vld [vmem:[#allocation2 + $0x118] sm:$0xff]
    %v2732 = vld [vmem:[#allocation2 + $0x120] sm:$0xff]
    %v2733 = vld [vmem:[#allocation2 + $0x128] sm:$0xff]
    %v2734 = vld [vmem:[#allocation2 + $0x130] sm:$0xff]
    %v2735 = vld [vmem:[#allocation2 + $0x138] sm:$0xff]
    %v2736 = vld [vmem:[#allocation2 + $0x140] sm:$0xff]
    %v2737 = vld [vmem:[#allocation2 + $0x148] sm:$0xff]
    %v2738 = vld [vmem:[#allocation2 + $0x150] sm:$0xff]
    %v2739 = vld [vmem:[#allocation2 + $0x158] sm:$0xff]
    %v2740 = vld [vmem:[#allocation2 + $0x160] sm:$0xff]
    %v2741 = vld [vmem:[#allocation2 + $0x168] sm:$0xff]
    %v2742 = vld [vmem:[#allocation2 + $0x170] sm:$0xff]
    %v2743 = vld [vmem:[#allocation2 + $0x178] sm:$0xff]
    %v2744 = vld [vmem:[%s5] sm:$0x7]
    %v2746 = vlaneseq
    %v2747 = vshrl.u32 %v2746, 7
    %v2748 = vsub.s32 0, %v2747
    %v2749 = vrot.slane %v2744, %v2748
    %v2750 = vlaneseq
    %v2751 = vshrl.u32 %v2750, 7
    %v2752 = vsub.s32 1, %v2751
    %v2753 = vrot.slane %v2744, %v2752
    %v2754 = vlaneseq
    %v2755 = vshrl.u32 %v2754, 7
    %v2756 = vsub.s32 2, %v2755
    %v2757 = vrot.slane %v2744, %v2756
    %2761 = vmatprep.subr.mxu0 %v2742
    %2762 = vmatpush1.msra.mxu0 %v2741
    %2763 = vmatprep.subr.mxu0 %v2739
    %2764 = vmatpush1.msra.mxu0 %v2738
    %2765 = vmatprep.subr.mxu0 %v2736
    %2766 = vmatpush1.msra.mxu0 %v2735
    %2767 = vmatprep.subr.mxu0 %v2733
    %2768 = vmatpush1.msra.mxu0 %v2732
    %2769 = vmatprep.subr.mxu0 %v2730
    %2770 = vmatpush1.msra.mxu0 %v2729
    %2771 = vmatprep.subr.mxu0 %v2727
    %2772 = vmatpush1.msra.mxu0 %v2726
    %2773 = vmatprep.subr.mxu0 %v2724
    %2774 = vmatpush1.msra.mxu0 %v2723
    %2775 = vmatprep.subr.mxu0 %v2721
    %2776 = vmatpush1.msra.mxu0 %v2720
    %2777 = vmatprep.subr.mxu0 %v2718
    %2778 = vmatpush1.msra.mxu0 %v2717
    %2779 = vmatprep.subr.mxu0 %v2715
    %2780 = vmatpush1.msra.mxu0 %v2714
    %2781 = vmatprep.subr.mxu0 %v2712
    %2782 = vmatpush1.msra.mxu0 %v2711
    %2783 = vmatprep.subr.mxu0 %v2709
    %2784 = vmatpush1.msra.mxu0 %v2708
    %2785 = vmatprep.subr.mxu0 %v2706
    %2786 = vmatpush1.msra.mxu0 %v2705
    %2787 = vmatprep.subr.mxu0 %v2703
    %2788 = vmatpush1.msra.mxu0 %v2702
    %2789 = vmatprep.subr.mxu0 %v2700
    %2790 = vmatpush1.msra.mxu0 %v2699
    %2791 = vmatprep.subr.mxu0 %v2697
    %2792 = vmatpush1.msra.mxu0 %v2696
    %2793 = vmatprep.subr.mxu0 0.0
    %2794 = vmatpush2.msra.mxu0 0.0
    %2795 = vmatprep.subr.mxu0 0.0
    %2796 = vmatpush2.msra.mxu0 0.0
    %2797 = vmatprep.subr.mxu0 0.0
    %2798 = vmatpush2.msra.mxu0 0.0
    %2799 = vmatprep.subr.mxu0 0.0
    %2800 = vmatpush2.msra.mxu0 0.0
    %2801 = vmatprep.subr.mxu0 0.0
    %2802 = vmatpush2.msra.mxu0 0.0
    %2803 = vmatprep.subr.mxu0 0.0
    %2804 = vmatpush2.msra.mxu0 0.0
    %2805 = vmatprep.subr.mxu0 0.0
    %2806 = vmatpush2.msra.mxu0 0.0
    %2807 = vmatprep.subr.mxu0 0.0
    %2808 = vmatpush2.msra.mxu0 0.0
    %2809 = vmatprep.subr.mxu0 0.0
    %2810 = vmatpush2.msra.mxu0 0.0
    %2811 = vmatprep.subr.mxu0 0.0
    %2812 = vmatpush2.msra.mxu0 0.0
    %2813 = vmatprep.subr.mxu0 0.0
    %2814 = vmatpush2.msra.mxu0 0.0
    %2815 = vmatprep.subr.mxu0 0.0
    %2816 = vmatpush2.msra.mxu0 0.0
    %2817 = vmatprep.subr.mxu0 0.0
    %2818 = vmatpush2.msra.mxu0 0.0
    %2819 = vmatprep.subr.mxu0 0.0
    %2820 = vmatpush2.msra.mxu0 0.0
    %2821 = vmatprep.subr.mxu0 0.0
    %2822 = vmatpush2.msra.mxu0 0.0
    %2823 = vmatprep.subr.mxu0 0.0
    %2824 = vmatpush2.msra.mxu0 0.0
    %2825 = vmatprep.mubr.f32.mxu0 0.0
    %2826 = vmatmul.mubr.f32.gmra.mxu0 %v2427
    %v2827 = vpop.f32.mrf.mxu0
    %v2828 = vadd.f32 %v2749, %v2827
    %v2829 = vpop.f32.mrf.mxu0
    %v2830 = vadd.f32 %v2753, %v2829
    %2831 = vdwg.mxu0
    %2832 = vmatprep.subr.mxu0 0.0
    %2833 = vmatpush1.msra.mxu0 %v2743
    %2834 = vmatprep.subr.mxu0 0.0
    %2835 = vmatpush1.msra.mxu0 %v2740
    %2836 = vmatprep.subr.mxu0 0.0
    %2837 = vmatpush1.msra.mxu0 %v2737
    %2838 = vmatprep.subr.mxu0 0.0
    %2839 = vmatpush1.msra.mxu0 %v2734
    %2840 = vmatprep.subr.mxu0 0.0
    %2841 = vmatpush1.msra.mxu0 %v2731
    %2842 = vmatprep.subr.mxu0 0.0
    %2843 = vmatpush1.msra.mxu0 %v2728
    %2844 = vmatprep.subr.mxu0 0.0
    %2845 = vmatpush1.msra.mxu0 %v2725
    %2846 = vmatprep.subr.mxu0 0.0
    %2847 = vmatpush1.msra.mxu0 %v2722
    %2848 = vmatprep.subr.mxu0 0.0
    %2849 = vmatpush1.msra.mxu0 %v2719
    %2850 = vmatprep.subr.mxu0 0.0
    %2851 = vmatpush1.msra.mxu0 %v2716
    %2852 = vmatprep.subr.mxu0 0.0
    %2853 = vmatpush1.msra.mxu0 %v2713
    %2854 = vmatprep.subr.mxu0 0.0
    %2855 = vmatpush1.msra.mxu0 %v2710
    %2856 = vmatprep.subr.mxu0 0.0
    %2857 = vmatpush1.msra.mxu0 %v2707
    %2858 = vmatprep.subr.mxu0 0.0
    %2859 = vmatpush1.msra.mxu0 %v2704
    %2860 = vmatprep.subr.mxu0 0.0
    %2861 = vmatpush1.msra.mxu0 %v2701
    %2862 = vmatprep.subr.mxu0 0.0
    %2863 = vmatpush1.msra.mxu0 %v2698
    %2864 = vmatprep.subr.mxu0 0.0
    %2865 = vmatpush2.msra.mxu0 0.0
    %2866 = vmatprep.subr.mxu0 0.0
    %2867 = vmatpush2.msra.mxu0 0.0
    %2868 = vmatprep.subr.mxu0 0.0
    %2869 = vmatpush2.msra.mxu0 0.0
    %2870 = vmatprep.subr.mxu0 0.0
    %2871 = vmatpush2.msra.mxu0 0.0
    %2872 = vmatprep.subr.mxu0 0.0
    %2873 = vmatpush2.msra.mxu0 0.0
    %2874 = vmatprep.subr.mxu0 0.0
    %2875 = vmatpush2.msra.mxu0 0.0
    %2876 = vmatprep.subr.mxu0 0.0
    %2877 = vmatpush2.msra.mxu0 0.0
    %2878 = vmatprep.subr.mxu0 0.0
    %2879 = vmatpush2.msra.mxu0 0.0
    %2880 = vmatprep.subr.mxu0 0.0
    %2881 = vmatpush2.msra.mxu0 0.0
    %2882 = vmatprep.subr.mxu0 0.0
    %2883 = vmatpush2.msra.mxu0 0.0
    %2884 = vmatprep.subr.mxu0 0.0
    %2885 = vmatpush2.msra.mxu0 0.0
    %2886 = vmatprep.subr.mxu0 0.0
    %2887 = vmatpush2.msra.mxu0 0.0
    %2888 = vmatprep.subr.mxu0 0.0
    %2889 = vmatpush2.msra.mxu0 0.0
    %2890 = vmatprep.subr.mxu0 0.0
    %2891 = vmatpush2.msra.mxu0 0.0
    %2892 = vmatprep.subr.mxu0 0.0
    %2893 = vmatpush2.msra.mxu0 0.0
    %2894 = vmatprep.subr.mxu0 0.0
    %2895 = vmatpush2.msra.mxu0 0.0
    %2896 = vmatprep.mubr.f32.mxu0 0.0
    %2897 = vmatmul.mubr.f32.gmra.mxu0 %v2427
    %v2898 = vpop.f32.mrf.mxu0
    %v2899 = vadd.f32 %v2757, %v2898
    %v2900 = vpop.f32.mrf.mxu0
    %2901 = vdwg.mxu0
    %v2902 = vadd.f32 %v2622, %v2828
    %v2903 = vxor.u32 %v2902, 2147483648
    %v2904 = vmul.f32 %v2903, 1.442695
    %v2905 = vpow.pop %v2904
    %v2906 = vadd.f32 %v2905, 1.0
    %v2907 = vrcp.pop %v2906
    %v2908 = vmul.f32 1.0, %v2907
    %v2909 = vadd.f32 %v2624, %v2830
    %v2910 = vxor.u32 %v2909, 2147483648
    %v2911 = vmul.f32 %v2910, 1.442695
    %v2912 = vpow.pop %v2911
    %v2913 = vadd.f32 %v2912, 1.0
    %v2914 = vrcp.pop %v2913
    %v2915 = vmul.f32 1.0, %v2914
    %v2916 = vmul.f32 %v2908, %v2899
    %v2917 = vadd.f32 %v2693, %v2916
    %v2918 = vtanh.pop %v2917
    %v2919 = vsub.f32 1.0, %v2915
    %v2920 = vmul.f32 %v2919, %v2918
    %v2921 = vmul.f32 %v2915, %v2427
    %v2922 = vadd.f32 %v2920, %v2921
    %v2923 = vld [vmem:[%s6] sm:$0xff]
    %v2924 = vld [vmem:[%s6 + $0x8] sm:$0xff]
    %v2925 = vld [vmem:[%s6 + $0x10] sm:$0xff]
    %v2926 = vld [vmem:[%s6 + $0x18] sm:$0xff]
    %v2927 = vld [vmem:[%s6 + $0x20] sm:$0xff]
    %v2928 = vld [vmem:[%s6 + $0x28] sm:$0xff]
    %v2929 = vld [vmem:[%s6 + $0x30] sm:$0xff]
    %v2930 = vld [vmem:[%s6 + $0x38] sm:$0xff]
    %v2931 = vld [vmem:[%s6 + $0x40] sm:$0xff]
    %v2932 = vld [vmem:[%s6 + $0x48] sm:$0xff]
    %v2933 = vld [vmem:[%s6 + $0x50] sm:$0xff]
    %v2934 = vld [vmem:[%s6 + $0x58] sm:$0xff]
    %v2935 = vld [vmem:[%s6 + $0x60] sm:$0xff]
    %v2936 = vld [vmem:[%s6 + $0x68] sm:$0xff]
    %v2937 = vld [vmem:[%s6 + $0x70] sm:$0xff]
    %v2938 = vld [vmem:[%s6 + $0x78] sm:$0xff]
    %v2939 = vld [vmem:[%s7] sm:$0x1]
    %v2941 = vlaneseq
    %v2942 = vshrl.u32 %v2941, 7
    %v2943 = vsub.s32 0, %v2942
    %v2944 = vrot.slane %v2939, %v2943
    %2946 = vmatprep.subr.mxu0 0.0
    %2947 = vmatpush1.msra.mxu0 %v2938
    %2948 = vmatprep.subr.mxu0 0.0
    %2949 = vmatpush1.msra.mxu0 %v2937
    %2950 = vmatprep.subr.mxu0 0.0
    %2951 = vmatpush1.msra.mxu0 %v2936
    %2952 = vmatprep.subr.mxu0 0.0
    %2953 = vmatpush1.msra.mxu0 %v2935
    %2954 = vmatprep.subr.mxu0 0.0
    %2955 = vmatpush1.msra.mxu0 %v2934
    %2956 = vmatprep.subr.mxu0 0.0
    %2957 = vmatpush1.msra.mxu0 %v2933
    %2958 = vmatprep.subr.mxu0 0.0
    %2959 = vmatpush1.msra.mxu0 %v2932
    %2960 = vmatprep.subr.mxu0 0.0
    %2961 = vmatpush1.msra.mxu0 %v2931
    %2962 = vmatprep.subr.mxu0 0.0
    %2963 = vmatpush1.msra.mxu0 %v2930
    %2964 = vmatprep.subr.mxu0 0.0
    %2965 = vmatpush1.msra.mxu0 %v2929
    %2966 = vmatprep.subr.mxu0 0.0
    %2967 = vmatpush1.msra.mxu0 %v2928
    %2968 = vmatprep.subr.mxu0 0.0
    %2969 = vmatpush1.msra.mxu0 %v2927
    %2970 = vmatprep.subr.mxu0 0.0
    %2971 = vmatpush1.msra.mxu0 %v2926
    %2972 = vmatprep.subr.mxu0 0.0
    %2973 = vmatpush1.msra.mxu0 %v2925
    %2974 = vmatprep.subr.mxu0 0.0
    %2975 = vmatpush1.msra.mxu0 %v2924
    %2976 = vmatprep.subr.mxu0 0.0
    %2977 = vmatpush1.msra.mxu0 %v2923
    %2978 = vmatprep.subr.mxu0 0.0
    %2979 = vmatpush2.msra.mxu0 0.0
    %2980 = vmatprep.subr.mxu0 0.0
    %2981 = vmatpush2.msra.mxu0 0.0
    %2982 = vmatprep.subr.mxu0 0.0
    %2983 = vmatpush2.msra.mxu0 0.0
    %2984 = vmatprep.subr.mxu0 0.0
    %2985 = vmatpush2.msra.mxu0 0.0
    %2986 = vmatprep.subr.mxu0 0.0
    %2987 = vmatpush2.msra.mxu0 0.0
    %2988 = vmatprep.subr.mxu0 0.0
    %2989 = vmatpush2.msra.mxu0 0.0
    %2990 = vmatprep.subr.mxu0 0.0
    %2991 = vmatpush2.msra.mxu0 0.0
    %2992 = vmatprep.subr.mxu0 0.0
    %2993 = vmatpush2.msra.mxu0 0.0
    %2994 = vmatprep.subr.mxu0 0.0
    %2995 = vmatpush2.msra.mxu0 0.0
    %2996 = vmatprep.subr.mxu0 0.0
    %2997 = vmatpush2.msra.mxu0 0.0
    %2998 = vmatprep.subr.mxu0 0.0
    %2999 = vmatpush2.msra.mxu0 0.0
    %3000 = vmatprep.subr.mxu0 0.0
    %3001 = vmatpush2.msra.mxu0 0.0
    %3002 = vmatprep.subr.mxu0 0.0
    %3003 = vmatpush2.msra.mxu0 0.0
    %3004 = vmatprep.subr.mxu0 0.0
    %3005 = vmatpush2.msra.mxu0 0.0
    %3006 = vmatprep.subr.mxu0 0.0
    %3007 = vmatpush2.msra.mxu0 0.0
    %3008 = vmatprep.subr.mxu0 0.0
    %3009 = vmatpush2.msra.mxu0 0.0
    %3010 = vmatprep.mubr.f32.mxu0 0.0
    %3011 = vmatmul.mubr.f32.gmra.mxu0 %v2922
    %v3012 = vpop.f32.mrf.mxu0
    %v3013 = vadd.f32 %v2944, %v3012
    %v3014 = vpop.f32.mrf.mxu0
    %3015 = vdwg.mxu0
    %s3016 = scalar_lea.vmem [#allocation5], 4
    %3017 = vst.msk [vmem:[%s3016] sm:$0x3] %vm541, %v3013
    %v3018 = vld [vmem:[%s2] sm:$0xff]
    %v3019 = vld [vmem:[%s2 + $0x8] sm:$0xff]
    %v3020 = vld [vmem:[%s2 + $0x10] sm:$0xff]
    %v3021 = vld [vmem:[%s2 + $0x18] sm:$0xff]
    %v3022 = vld [vmem:[%s2 + $0x20] sm:$0xff]
    %v3023 = vld [vmem:[%s2 + $0x28] sm:$0xff]
    %v3024 = vld [vmem:[%s2 + $0x30] sm:$0xff]
    %v3025 = vld [vmem:[%s2 + $0x38] sm:$0xff]
    %v3026 = vld [vmem:[%s2 + $0x40] sm:$0xff]
    %v3027 = vld [vmem:[%s2 + $0x48] sm:$0xff]
    %v3028 = vld [vmem:[%s2 + $0x50] sm:$0xff]
    %v3029 = vld [vmem:[%s2 + $0x58] sm:$0xff]
    %v3030 = vld [vmem:[%s4] sm:$0x7]
    %v3032 = vlaneseq
    %v3033 = vshrl.u32 %v3032, 7
    %v3034 = vsub.s32 0, %v3033
    %v3035 = vrot.slane %v3030, %v3034
    %v3036 = vlaneseq
    %v3037 = vshrl.u32 %v3036, 7
    %v3038 = vsub.s32 1, %v3037
    %v3039 = vrot.slane %v3030, %v3038
    %v3040 = vlaneseq
    %v3041 = vshrl.u32 %v3040, 7
    %v3042 = vsub.s32 2, %v3041
    %v3043 = vrot.slane %v3030, %v3042
    %v3048 = vsel %vm75, %v3013, 0
    %3050 = vmatprep.subr.mxu0 0.0
    %3051 = vmatpush1.msra.mxu0 0.0
    %3052 = vmatprep.subr.mxu0 0.0
    %3053 = vmatpush1.msra.mxu0 0.0
    %3054 = vmatprep.subr.mxu0 0.0
    %3055 = vmatpush1.msra.mxu0 0.0
    %3056 = vmatprep.subr.mxu0 0.0
    %3057 = vmatpush1.msra.mxu0 0.0
    %3058 = vmatprep.subr.mxu0 0.0
    %3059 = vmatpush1.msra.mxu0 0.0
    %3060 = vmatprep.subr.mxu0 0.0
    %3061 = vmatpush1.msra.mxu0 0.0
    %3062 = vmatprep.subr.mxu0 0.0
    %3063 = vmatpush1.msra.mxu0 0.0
    %3064 = vmatprep.subr.mxu0 0.0
    %3065 = vmatpush1.msra.mxu0 0.0
    %3066 = vmatprep.subr.mxu0 0.0
    %3067 = vmatpush1.msra.mxu0 0.0
    %3068 = vmatprep.subr.mxu0 0.0
    %3069 = vmatpush1.msra.mxu0 0.0
    %3070 = vmatprep.subr.mxu0 0.0
    %3071 = vmatpush1.msra.mxu0 0.0
    %3072 = vmatprep.subr.mxu0 0.0
    %3073 = vmatpush1.msra.mxu0 0.0
    %3074 = vmatprep.subr.mxu0 %v3028
    %3075 = vmatpush1.msra.mxu0 %v3027
    %3076 = vmatprep.subr.mxu0 %v3025
    %3077 = vmatpush1.msra.mxu0 %v3024
    %3078 = vmatprep.subr.mxu0 %v3022
    %3079 = vmatpush1.msra.mxu0 %v3021
    %3080 = vmatprep.subr.mxu0 %v3019
    %3081 = vmatpush1.msra.mxu0 %v3018
    %3082 = vmatprep.subr.mxu0 0.0
    %3083 = vmatpush2.msra.mxu0 0.0
    %3084 = vmatprep.subr.mxu0 0.0
    %3085 = vmatpush2.msra.mxu0 0.0
    %3086 = vmatprep.subr.mxu0 0.0
    %3087 = vmatpush2.msra.mxu0 0.0
    %3088 = vmatprep.subr.mxu0 0.0
    %3089 = vmatpush2.msra.mxu0 0.0
    %3090 = vmatprep.subr.mxu0 0.0
    %3091 = vmatpush2.msra.mxu0 0.0
    %3092 = vmatprep.subr.mxu0 0.0
    %3093 = vmatpush2.msra.mxu0 0.0
    %3094 = vmatprep.subr.mxu0 0.0
    %3095 = vmatpush2.msra.mxu0 0.0
    %3096 = vmatprep.subr.mxu0 0.0
    %3097 = vmatpush2.msra.mxu0 0.0
    %3098 = vmatprep.subr.mxu0 0.0
    %3099 = vmatpush2.msra.mxu0 0.0
    %3100 = vmatprep.subr.mxu0 0.0
    %3101 = vmatpush2.msra.mxu0 0.0
    %3102 = vmatprep.subr.mxu0 0.0
    %3103 = vmatpush2.msra.mxu0 0.0
    %3104 = vmatprep.subr.mxu0 0.0
    %3105 = vmatpush2.msra.mxu0 0.0
    %3106 = vmatprep.subr.mxu0 0.0
    %3107 = vmatpush2.msra.mxu0 0.0
    %3108 = vmatprep.subr.mxu0 0.0
    %3109 = vmatpush2.msra.mxu0 0.0
    %3110 = vmatprep.subr.mxu0 0.0
    %3111 = vmatpush2.msra.mxu0 0.0
    %3112 = vmatprep.subr.mxu0 0.0
    %3113 = vmatpush2.msra.mxu0 0.0
    %3114 = vmatprep.mubr.f32.mxu0 0.0
    %3115 = vmatmul.mubr.f32.gmra.mxu0 %v3048
    %v3116 = vpop.f32.mrf.mxu0
    %v3117 = vadd.f32 %v3035, %v3116
    %v3118 = vpop.f32.mrf.mxu0
    %v3119 = vadd.f32 %v3039, %v3118
    %3120 = vdwg.mxu0
    %3121 = vmatprep.subr.mxu0 0.0
    %3122 = vmatpush1.msra.mxu0 0.0
    %3123 = vmatprep.subr.mxu0 0.0
    %3124 = vmatpush1.msra.mxu0 0.0
    %3125 = vmatprep.subr.mxu0 0.0
    %3126 = vmatpush1.msra.mxu0 0.0
    %3127 = vmatprep.subr.mxu0 0.0
    %3128 = vmatpush1.msra.mxu0 0.0
    %3129 = vmatprep.subr.mxu0 0.0
    %3130 = vmatpush1.msra.mxu0 0.0
    %3131 = vmatprep.subr.mxu0 0.0
    %3132 = vmatpush1.msra.mxu0 0.0
    %3133 = vmatprep.subr.mxu0 0.0
    %3134 = vmatpush1.msra.mxu0 0.0
    %3135 = vmatprep.subr.mxu0 0.0
    %3136 = vmatpush1.msra.mxu0 0.0
    %3137 = vmatprep.subr.mxu0 0.0
    %3138 = vmatpush1.msra.mxu0 0.0
    %3139 = vmatprep.subr.mxu0 0.0
    %3140 = vmatpush1.msra.mxu0 0.0
    %3141 = vmatprep.subr.mxu0 0.0
    %3142 = vmatpush1.msra.mxu0 0.0
    %3143 = vmatprep.subr.mxu0 0.0
    %3144 = vmatpush1.msra.mxu0 0.0
    %3145 = vmatprep.subr.mxu0 0.0
    %3146 = vmatpush1.msra.mxu0 %v3029
    %3147 = vmatprep.subr.mxu0 0.0
    %3148 = vmatpush1.msra.mxu0 %v3026
    %3149 = vmatprep.subr.mxu0 0.0
    %3150 = vmatpush1.msra.mxu0 %v3023
    %3151 = vmatprep.subr.mxu0 0.0
    %3152 = vmatpush1.msra.mxu0 %v3020
    %3153 = vmatprep.subr.mxu0 0.0
    %3154 = vmatpush2.msra.mxu0 0.0
    %3155 = vmatprep.subr.mxu0 0.0
    %3156 = vmatpush2.msra.mxu0 0.0
    %3157 = vmatprep.subr.mxu0 0.0
    %3158 = vmatpush2.msra.mxu0 0.0
    %3159 = vmatprep.subr.mxu0 0.0
    %3160 = vmatpush2.msra.mxu0 0.0
    %3161 = vmatprep.subr.mxu0 0.0
    %3162 = vmatpush2.msra.mxu0 0.0
    %3163 = vmatprep.subr.mxu0 0.0
    %3164 = vmatpush2.msra.mxu0 0.0
    %3165 = vmatprep.subr.mxu0 0.0
    %3166 = vmatpush2.msra.mxu0 0.0
    %3167 = vmatprep.subr.mxu0 0.0
    %3168 = vmatpush2.msra.mxu0 0.0
    %3169 = vmatprep.subr.mxu0 0.0
    %3170 = vmatpush2.msra.mxu0 0.0
    %3171 = vmatprep.subr.mxu0 0.0
    %3172 = vmatpush2.msra.mxu0 0.0
    %3173 = vmatprep.subr.mxu0 0.0
    %3174 = vmatpush2.msra.mxu0 0.0
    %3175 = vmatprep.subr.mxu0 0.0
    %3176 = vmatpush2.msra.mxu0 0.0
    %3177 = vmatprep.subr.mxu0 0.0
    %3178 = vmatpush2.msra.mxu0 0.0
    %3179 = vmatprep.subr.mxu0 0.0
    %3180 = vmatpush2.msra.mxu0 0.0
    %3181 = vmatprep.subr.mxu0 0.0
    %3182 = vmatpush2.msra.mxu0 0.0
    %3183 = vmatprep.subr.mxu0 0.0
    %3184 = vmatpush2.msra.mxu0 0.0
    %3185 = vmatprep.mubr.f32.mxu0 0.0
    %3186 = vmatmul.mubr.f32.gmra.mxu0 %v3048
    %v3187 = vpop.f32.mrf.mxu0
    %v3188 = vadd.f32 %v3043, %v3187
    %v3189 = vpop.f32.mrf.mxu0
    %3190 = vdwg.mxu0
    %v3191 = vld [vmem:[#allocation2] sm:$0xff]
    %v3192 = vld [vmem:[#allocation2 + $0x8] sm:$0xff]
    %v3193 = vld [vmem:[#allocation2 + $0x10] sm:$0xff]
    %v3194 = vld [vmem:[#allocation2 + $0x18] sm:$0xff]
    %v3195 = vld [vmem:[#allocation2 + $0x20] sm:$0xff]
    %v3196 = vld [vmem:[#allocation2 + $0x28] sm:$0xff]
    %v3197 = vld [vmem:[#allocation2 + $0x30] sm:$0xff]
    %v3198 = vld [vmem:[#allocation2 + $0x38] sm:$0xff]
    %v3199 = vld [vmem:[#allocation2 + $0x40] sm:$0xff]
    %v3200 = vld [vmem:[#allocation2 + $0x48] sm:$0xff]
    %v3201 = vld [vmem:[#allocation2 + $0x50] sm:$0xff]
    %v3202 = vld [vmem:[#allocation2 + $0x58] sm:$0xff]
    %v3203 = vld [vmem:[#allocation2 + $0x60] sm:$0xff]
    %v3204 = vld [vmem:[#allocation2 + $0x68] sm:$0xff]
    %v3205 = vld [vmem:[#allocation2 + $0x70] sm:$0xff]
    %v3206 = vld [vmem:[#allocation2 + $0x78] sm:$0xff]
    %v3207 = vld [vmem:[#allocation2 + $0x80] sm:$0xff]
    %v3208 = vld [vmem:[#allocation2 + $0x88] sm:$0xff]
    %v3209 = vld [vmem:[#allocation2 + $0x90] sm:$0xff]
    %v3210 = vld [vmem:[#allocation2 + $0x98] sm:$0xff]
    %v3211 = vld [vmem:[#allocation2 + $0xa0] sm:$0xff]
    %v3212 = vld [vmem:[#allocation2 + $0xa8] sm:$0xff]
    %v3213 = vld [vmem:[#allocation2 + $0xb0] sm:$0xff]
    %v3214 = vld [vmem:[#allocation2 + $0xb8] sm:$0xff]
    %v3215 = vld [vmem:[#allocation2 + $0xc0] sm:$0xff]
    %v3216 = vld [vmem:[#allocation2 + $0xc8] sm:$0xff]
    %v3217 = vld [vmem:[#allocation2 + $0xd0] sm:$0xff]
    %v3218 = vld [vmem:[#allocation2 + $0xd8] sm:$0xff]
    %v3219 = vld [vmem:[#allocation2 + $0xe0] sm:$0xff]
    %v3220 = vld [vmem:[#allocation2 + $0xe8] sm:$0xff]
    %v3221 = vld [vmem:[#allocation2 + $0xf0] sm:$0xff]
    %v3222 = vld [vmem:[#allocation2 + $0xf8] sm:$0xff]
    %v3223 = vld [vmem:[#allocation2 + $0x100] sm:$0xff]
    %v3224 = vld [vmem:[#allocation2 + $0x108] sm:$0xff]
    %v3225 = vld [vmem:[#allocation2 + $0x110] sm:$0xff]
    %v3226 = vld [vmem:[#allocation2 + $0x118] sm:$0xff]
    %v3227 = vld [vmem:[#allocation2 + $0x120] sm:$0xff]
    %v3228 = vld [vmem:[#allocation2 + $0x128] sm:$0xff]
    %v3229 = vld [vmem:[#allocation2 + $0x130] sm:$0xff]
    %v3230 = vld [vmem:[#allocation2 + $0x138] sm:$0xff]
    %v3231 = vld [vmem:[#allocation2 + $0x140] sm:$0xff]
    %v3232 = vld [vmem:[#allocation2 + $0x148] sm:$0xff]
    %v3233 = vld [vmem:[#allocation2 + $0x150] sm:$0xff]
    %v3234 = vld [vmem:[#allocation2 + $0x158] sm:$0xff]
    %v3235 = vld [vmem:[#allocation2 + $0x160] sm:$0xff]
    %v3236 = vld [vmem:[#allocation2 + $0x168] sm:$0xff]
    %v3237 = vld [vmem:[#allocation2 + $0x170] sm:$0xff]
    %v3238 = vld [vmem:[#allocation2 + $0x178] sm:$0xff]
    %v3239 = vld [vmem:[%s5] sm:$0x7]
    %v3241 = vlaneseq
    %v3242 = vshrl.u32 %v3241, 7
    %v3243 = vsub.s32 0, %v3242
    %v3244 = vrot.slane %v3239, %v3243
    %v3245 = vlaneseq
    %v3246 = vshrl.u32 %v3245, 7
    %v3247 = vsub.s32 1, %v3246
    %v3248 = vrot.slane %v3239, %v3247
    %v3249 = vlaneseq
    %v3250 = vshrl.u32 %v3249, 7
    %v3251 = vsub.s32 2, %v3250
    %v3252 = vrot.slane %v3239, %v3251
    %3256 = vmatprep.subr.mxu0 %v3237
    %3257 = vmatpush1.msra.mxu0 %v3236
    %3258 = vmatprep.subr.mxu0 %v3234
    %3259 = vmatpush1.msra.mxu0 %v3233
    %3260 = vmatprep.subr.mxu0 %v3231
    %3261 = vmatpush1.msra.mxu0 %v3230
    %3262 = vmatprep.subr.mxu0 %v3228
    %3263 = vmatpush1.msra.mxu0 %v3227
    %3264 = vmatprep.subr.mxu0 %v3225
    %3265 = vmatpush1.msra.mxu0 %v3224
    %3266 = vmatprep.subr.mxu0 %v3222
    %3267 = vmatpush1.msra.mxu0 %v3221
    %3268 = vmatprep.subr.mxu0 %v3219
    %3269 = vmatpush1.msra.mxu0 %v3218
    %3270 = vmatprep.subr.mxu0 %v3216
    %3271 = vmatpush1.msra.mxu0 %v3215
    %3272 = vmatprep.subr.mxu0 %v3213
    %3273 = vmatpush1.msra.mxu0 %v3212
    %3274 = vmatprep.subr.mxu0 %v3210
    %3275 = vmatpush1.msra.mxu0 %v3209
    %3276 = vmatprep.subr.mxu0 %v3207
    %3277 = vmatpush1.msra.mxu0 %v3206
    %3278 = vmatprep.subr.mxu0 %v3204
    %3279 = vmatpush1.msra.mxu0 %v3203
    %3280 = vmatprep.subr.mxu0 %v3201
    %3281 = vmatpush1.msra.mxu0 %v3200
    %3282 = vmatprep.subr.mxu0 %v3198
    %3283 = vmatpush1.msra.mxu0 %v3197
    %3284 = vmatprep.subr.mxu0 %v3195
    %3285 = vmatpush1.msra.mxu0 %v3194
    %3286 = vmatprep.subr.mxu0 %v3192
    %3287 = vmatpush1.msra.mxu0 %v3191
    %3288 = vmatprep.subr.mxu0 0.0
    %3289 = vmatpush2.msra.mxu0 0.0
    %3290 = vmatprep.subr.mxu0 0.0
    %3291 = vmatpush2.msra.mxu0 0.0
    %3292 = vmatprep.subr.mxu0 0.0
    %3293 = vmatpush2.msra.mxu0 0.0
    %3294 = vmatprep.subr.mxu0 0.0
    %3295 = vmatpush2.msra.mxu0 0.0
    %3296 = vmatprep.subr.mxu0 0.0
    %3297 = vmatpush2.msra.mxu0 0.0
    %3298 = vmatprep.subr.mxu0 0.0
    %3299 = vmatpush2.msra.mxu0 0.0
    %3300 = vmatprep.subr.mxu0 0.0
    %3301 = vmatpush2.msra.mxu0 0.0
    %3302 = vmatprep.subr.mxu0 0.0
    %3303 = vmatpush2.msra.mxu0 0.0
    %3304 = vmatprep.subr.mxu0 0.0
    %3305 = vmatpush2.msra.mxu0 0.0
    %3306 = vmatprep.subr.mxu0 0.0
    %3307 = vmatpush2.msra.mxu0 0.0
    %3308 = vmatprep.subr.mxu0 0.0
    %3309 = vmatpush2.msra.mxu0 0.0
    %3310 = vmatprep.subr.mxu0 0.0
    %3311 = vmatpush2.msra.mxu0 0.0
    %3312 = vmatprep.subr.mxu0 0.0
    %3313 = vmatpush2.msra.mxu0 0.0
    %3314 = vmatprep.subr.mxu0 0.0
    %3315 = vmatpush2.msra.mxu0 0.0
    %3316 = vmatprep.subr.mxu0 0.0
    %3317 = vmatpush2.msra.mxu0 0.0
    %3318 = vmatprep.subr.mxu0 0.0
    %3319 = vmatpush2.msra.mxu0 0.0
    %3320 = vmatprep.mubr.f32.mxu0 0.0
    %3321 = vmatmul.mubr.f32.gmra.mxu0 %v2922
    %v3322 = vpop.f32.mrf.mxu0
    %v3323 = vadd.f32 %v3244, %v3322
    %v3324 = vpop.f32.mrf.mxu0
    %v3325 = vadd.f32 %v3248, %v3324
    %3326 = vdwg.mxu0
    %3327 = vmatprep.subr.mxu0 0.0
    %3328 = vmatpush1.msra.mxu0 %v3238
    %3329 = vmatprep.subr.mxu0 0.0
    %3330 = vmatpush1.msra.mxu0 %v3235
    %3331 = vmatprep.subr.mxu0 0.0
    %3332 = vmatpush1.msra.mxu0 %v3232
    %3333 = vmatprep.subr.mxu0 0.0
    %3334 = vmatpush1.msra.mxu0 %v3229
    %3335 = vmatprep.subr.mxu0 0.0
    %3336 = vmatpush1.msra.mxu0 %v3226
    %3337 = vmatprep.subr.mxu0 0.0
    %3338 = vmatpush1.msra.mxu0 %v3223
    %3339 = vmatprep.subr.mxu0 0.0
    %3340 = vmatpush1.msra.mxu0 %v3220
    %3341 = vmatprep.subr.mxu0 0.0
    %3342 = vmatpush1.msra.mxu0 %v3217
    %3343 = vmatprep.subr.mxu0 0.0
    %3344 = vmatpush1.msra.mxu0 %v3214
    %3345 = vmatprep.subr.mxu0 0.0
    %3346 = vmatpush1.msra.mxu0 %v3211
    %3347 = vmatprep.subr.mxu0 0.0
    %3348 = vmatpush1.msra.mxu0 %v3208
    %3349 = vmatprep.subr.mxu0 0.0
    %3350 = vmatpush1.msra.mxu0 %v3205
    %3351 = vmatprep.subr.mxu0 0.0
    %3352 = vmatpush1.msra.mxu0 %v3202
    %3353 = vmatprep.subr.mxu0 0.0
    %3354 = vmatpush1.msra.mxu0 %v3199
    %3355 = vmatprep.subr.mxu0 0.0
    %3356 = vmatpush1.msra.mxu0 %v3196
    %3357 = vmatprep.subr.mxu0 0.0
    %3358 = vmatpush1.msra.mxu0 %v3193
    %3359 = vmatprep.subr.mxu0 0.0
    %3360 = vmatpush2.msra.mxu0 0.0
    %3361 = vmatprep.subr.mxu0 0.0
    %3362 = vmatpush2.msra.mxu0 0.0
    %3363 = vmatprep.subr.mxu0 0.0
    %3364 = vmatpush2.msra.mxu0 0.0
    %3365 = vmatprep.subr.mxu0 0.0
    %3366 = vmatpush2.msra.mxu0 0.0
    %3367 = vmatprep.subr.mxu0 0.0
    %3368 = vmatpush2.msra.mxu0 0.0
    %3369 = vmatprep.subr.mxu0 0.0
    %3370 = vmatpush2.msra.mxu0 0.0
    %3371 = vmatprep.subr.mxu0 0.0
    %3372 = vmatpush2.msra.mxu0 0.0
    %3373 = vmatprep.subr.mxu0 0.0
    %3374 = vmatpush2.msra.mxu0 0.0
    %3375 = vmatprep.subr.mxu0 0.0
    %3376 = vmatpush2.msra.mxu0 0.0
    %3377 = vmatprep.subr.mxu0 0.0
    %3378 = vmatpush2.msra.mxu0 0.0
    %3379 = vmatprep.subr.mxu0 0.0
    %3380 = vmatpush2.msra.mxu0 0.0
    %3381 = vmatprep.subr.mxu0 0.0
    %3382 = vmatpush2.msra.mxu0 0.0
    %3383 = vmatprep.subr.mxu0 0.0
    %3384 = vmatpush2.msra.mxu0 0.0
    %3385 = vmatprep.subr.mxu0 0.0
    %3386 = vmatpush2.msra.mxu0 0.0
    %3387 = vmatprep.subr.mxu0 0.0
    %3388 = vmatpush2.msra.mxu0 0.0
    %3389 = vmatprep.subr.mxu0 0.0
    %3390 = vmatpush2.msra.mxu0 0.0
    %3391 = vmatprep.mubr.f32.mxu0 0.0
    %3392 = vmatmul.mubr.f32.gmra.mxu0 %v2922
    %v3393 = vpop.f32.mrf.mxu0
    %v3394 = vadd.f32 %v3252, %v3393
    %v3395 = vpop.f32.mrf.mxu0
    %3396 = vdwg.mxu0
    %v3397 = vadd.f32 %v3117, %v3323
    %v3398 = vxor.u32 %v3397, 2147483648
    %v3399 = vmul.f32 %v3398, 1.442695
    %v3400 = vpow.pop %v3399
    %v3401 = vadd.f32 %v3400, 1.0
    %v3402 = vrcp.pop %v3401
    %v3403 = vmul.f32 1.0, %v3402
    %v3404 = vadd.f32 %v3119, %v3325
    %v3405 = vxor.u32 %v3404, 2147483648
    %v3406 = vmul.f32 %v3405, 1.442695
    %v3407 = vpow.pop %v3406
    %v3408 = vadd.f32 %v3407, 1.0
    %v3409 = vrcp.pop %v3408
    %v3410 = vmul.f32 1.0, %v3409
    %v3411 = vmul.f32 %v3403, %v3394
    %v3412 = vadd.f32 %v3188, %v3411
    %v3413 = vtanh.pop %v3412
    %v3414 = vsub.f32 1.0, %v3410
    %v3415 = vmul.f32 %v3414, %v3413
    %v3416 = vmul.f32 %v3410, %v2922
    %v3417 = vadd.f32 %v3415, %v3416
    %v3418 = vld [vmem:[%s6] sm:$0xff]
    %v3419 = vld [vmem:[%s6 + $0x8] sm:$0xff]
    %v3420 = vld [vmem:[%s6 + $0x10] sm:$0xff]
    %v3421 = vld [vmem:[%s6 + $0x18] sm:$0xff]
    %v3422 = vld [vmem:[%s6 + $0x20] sm:$0xff]
    %v3423 = vld [vmem:[%s6 + $0x28] sm:$0xff]
    %v3424 = vld [vmem:[%s6 + $0x30] sm:$0xff]
    %v3425 = vld [vmem:[%s6 + $0x38] sm:$0xff]
    %v3426 = vld [vmem:[%s6 + $0x40] sm:$0xff]
    %v3427 = vld [vmem:[%s6 + $0x48] sm:$0xff]
    %v3428 = vld [vmem:[%s6 + $0x50] sm:$0xff]
    %v3429 = vld [vmem:[%s6 + $0x58] sm:$0xff]
    %v3430 = vld [vmem:[%s6 + $0x60] sm:$0xff]
    %v3431 = vld [vmem:[%s6 + $0x68] sm:$0xff]
    %v3432 = vld [vmem:[%s6 + $0x70] sm:$0xff]
    %v3433 = vld [vmem:[%s6 + $0x78] sm:$0xff]
    %v3434 = vld [vmem:[%s7] sm:$0x1]
    %v3436 = vlaneseq
    %v3437 = vshrl.u32 %v3436, 7
    %v3438 = vsub.s32 0, %v3437
    %v3439 = vrot.slane %v3434, %v3438
    %3441 = vmatprep.subr.mxu0 0.0
    %3442 = vmatpush1.msra.mxu0 %v3433
    %3443 = vmatprep.subr.mxu0 0.0
    %3444 = vmatpush1.msra.mxu0 %v3432
    %3445 = vmatprep.subr.mxu0 0.0
    %3446 = vmatpush1.msra.mxu0 %v3431
    %3447 = vmatprep.subr.mxu0 0.0
    %3448 = vmatpush1.msra.mxu0 %v3430
    %3449 = vmatprep.subr.mxu0 0.0
    %3450 = vmatpush1.msra.mxu0 %v3429
    %3451 = vmatprep.subr.mxu0 0.0
    %3452 = vmatpush1.msra.mxu0 %v3428
    %3453 = vmatprep.subr.mxu0 0.0
    %3454 = vmatpush1.msra.mxu0 %v3427
    %3455 = vmatprep.subr.mxu0 0.0
    %3456 = vmatpush1.msra.mxu0 %v3426
    %3457 = vmatprep.subr.mxu0 0.0
    %3458 = vmatpush1.msra.mxu0 %v3425
    %3459 = vmatprep.subr.mxu0 0.0
    %3460 = vmatpush1.msra.mxu0 %v3424
    %3461 = vmatprep.subr.mxu0 0.0
    %3462 = vmatpush1.msra.mxu0 %v3423
    %3463 = vmatprep.subr.mxu0 0.0
    %3464 = vmatpush1.msra.mxu0 %v3422
    %3465 = vmatprep.subr.mxu0 0.0
    %3466 = vmatpush1.msra.mxu0 %v3421
    %3467 = vmatprep.subr.mxu0 0.0
    %3468 = vmatpush1.msra.mxu0 %v3420
    %3469 = vmatprep.subr.mxu0 0.0
    %3470 = vmatpush1.msra.mxu0 %v3419
    %3471 = vmatprep.subr.mxu0 0.0
    %3472 = vmatpush1.msra.mxu0 %v3418
    %3473 = vmatprep.subr.mxu0 0.0
    %3474 = vmatpush2.msra.mxu0 0.0
    %3475 = vmatprep.subr.mxu0 0.0
    %3476 = vmatpush2.msra.mxu0 0.0
    %3477 = vmatprep.subr.mxu0 0.0
    %3478 = vmatpush2.msra.mxu0 0.0
    %3479 = vmatprep.subr.mxu0 0.0
    %3480 = vmatpush2.msra.mxu0 0.0
    %3481 = vmatprep.subr.mxu0 0.0
    %3482 = vmatpush2.msra.mxu0 0.0
    %3483 = vmatprep.subr.mxu0 0.0
    %3484 = vmatpush2.msra.mxu0 0.0
    %3485 = vmatprep.subr.mxu0 0.0
    %3486 = vmatpush2.msra.mxu0 0.0
    %3487 = vmatprep.subr.mxu0 0.0
    %3488 = vmatpush2.msra.mxu0 0.0
    %3489 = vmatprep.subr.mxu0 0.0
    %3490 = vmatpush2.msra.mxu0 0.0
    %3491 = vmatprep.subr.mxu0 0.0
    %3492 = vmatpush2.msra.mxu0 0.0
    %3493 = vmatprep.subr.mxu0 0.0
    %3494 = vmatpush2.msra.mxu0 0.0
    %3495 = vmatprep.subr.mxu0 0.0
    %3496 = vmatpush2.msra.mxu0 0.0
    %3497 = vmatprep.subr.mxu0 0.0
    %3498 = vmatpush2.msra.mxu0 0.0
    %3499 = vmatprep.subr.mxu0 0.0
    %3500 = vmatpush2.msra.mxu0 0.0
    %3501 = vmatprep.subr.mxu0 0.0
    %3502 = vmatpush2.msra.mxu0 0.0
    %3503 = vmatprep.subr.mxu0 0.0
    %3504 = vmatpush2.msra.mxu0 0.0
    %3505 = vmatprep.mubr.f32.mxu0 0.0
    %3506 = vmatmul.mubr.f32.gmra.mxu0 %v3417
    %v3507 = vpop.f32.mrf.mxu0
    %v3508 = vadd.f32 %v3439, %v3507
    %v3509 = vpop.f32.mrf.mxu0
    %3510 = vdwg.mxu0
    %s3511 = scalar_lea.vmem [#allocation5], 2
    %3512 = vst.msk [vmem:[%s3511] sm:$0x3] %vm541, %v3508
    %v3513 = vld [vmem:[%s2] sm:$0xff]
    %v3514 = vld [vmem:[%s2 + $0x8] sm:$0xff]
    %v3515 = vld [vmem:[%s2 + $0x10] sm:$0xff]
    %v3516 = vld [vmem:[%s2 + $0x18] sm:$0xff]
    %v3517 = vld [vmem:[%s2 + $0x20] sm:$0xff]
    %v3518 = vld [vmem:[%s2 + $0x28] sm:$0xff]
    %v3519 = vld [vmem:[%s2 + $0x30] sm:$0xff]
    %v3520 = vld [vmem:[%s2 + $0x38] sm:$0xff]
    %v3521 = vld [vmem:[%s2 + $0x40] sm:$0xff]
    %v3522 = vld [vmem:[%s2 + $0x48] sm:$0xff]
    %v3523 = vld [vmem:[%s2 + $0x50] sm:$0xff]
    %v3524 = vld [vmem:[%s2 + $0x58] sm:$0xff]
    %v3525 = vld [vmem:[%s4] sm:$0x7]
    %v3527 = vlaneseq
    %v3528 = vshrl.u32 %v3527, 7
    %v3529 = vsub.s32 0, %v3528
    %v3530 = vrot.slane %v3525, %v3529
    %v3531 = vlaneseq
    %v3532 = vshrl.u32 %v3531, 7
    %v3533 = vsub.s32 1, %v3532
    %v3534 = vrot.slane %v3525, %v3533
    %v3535 = vlaneseq
    %v3536 = vshrl.u32 %v3535, 7
    %v3537 = vsub.s32 2, %v3536
    %v3538 = vrot.slane %v3525, %v3537
    %v3543 = vsel %vm75, %v3508, 0
    %3545 = vmatprep.subr.mxu0 0.0
    %3546 = vmatpush1.msra.mxu0 0.0
    %3547 = vmatprep.subr.mxu0 0.0
    %3548 = vmatpush1.msra.mxu0 0.0
    %3549 = vmatprep.subr.mxu0 0.0
    %3550 = vmatpush1.msra.mxu0 0.0
    %3551 = vmatprep.subr.mxu0 0.0
    %3552 = vmatpush1.msra.mxu0 0.0
    %3553 = vmatprep.subr.mxu0 0.0
    %3554 = vmatpush1.msra.mxu0 0.0
    %3555 = vmatprep.subr.mxu0 0.0
    %3556 = vmatpush1.msra.mxu0 0.0
    %3557 = vmatprep.subr.mxu0 0.0
    %3558 = vmatpush1.msra.mxu0 0.0
    %3559 = vmatprep.subr.mxu0 0.0
    %3560 = vmatpush1.msra.mxu0 0.0
    %3561 = vmatprep.subr.mxu0 0.0
    %3562 = vmatpush1.msra.mxu0 0.0
    %3563 = vmatprep.subr.mxu0 0.0
    %3564 = vmatpush1.msra.mxu0 0.0
    %3565 = vmatprep.subr.mxu0 0.0
    %3566 = vmatpush1.msra.mxu0 0.0
    %3567 = vmatprep.subr.mxu0 0.0
    %3568 = vmatpush1.msra.mxu0 0.0
    %3569 = vmatprep.subr.mxu0 %v3523
    %3570 = vmatpush1.msra.mxu0 %v3522
    %3571 = vmatprep.subr.mxu0 %v3520
    %3572 = vmatpush1.msra.mxu0 %v3519
    %3573 = vmatprep.subr.mxu0 %v3517
    %3574 = vmatpush1.msra.mxu0 %v3516
    %3575 = vmatprep.subr.mxu0 %v3514
    %3576 = vmatpush1.msra.mxu0 %v3513
    %3577 = vmatprep.subr.mxu0 0.0
    %3578 = vmatpush2.msra.mxu0 0.0
    %3579 = vmatprep.subr.mxu0 0.0
    %3580 = vmatpush2.msra.mxu0 0.0
    %3581 = vmatprep.subr.mxu0 0.0
    %3582 = vmatpush2.msra.mxu0 0.0
    %3583 = vmatprep.subr.mxu0 0.0
    %3584 = vmatpush2.msra.mxu0 0.0
    %3585 = vmatprep.subr.mxu0 0.0
    %3586 = vmatpush2.msra.mxu0 0.0
    %3587 = vmatprep.subr.mxu0 0.0
    %3588 = vmatpush2.msra.mxu0 0.0
    %3589 = vmatprep.subr.mxu0 0.0
    %3590 = vmatpush2.msra.mxu0 0.0
    %3591 = vmatprep.subr.mxu0 0.0
    %3592 = vmatpush2.msra.mxu0 0.0
    %3593 = vmatprep.subr.mxu0 0.0
    %3594 = vmatpush2.msra.mxu0 0.0
    %3595 = vmatprep.subr.mxu0 0.0
    %3596 = vmatpush2.msra.mxu0 0.0
    %3597 = vmatprep.subr.mxu0 0.0
    %3598 = vmatpush2.msra.mxu0 0.0
    %3599 = vmatprep.subr.mxu0 0.0
    %3600 = vmatpush2.msra.mxu0 0.0
    %3601 = vmatprep.subr.mxu0 0.0
    %3602 = vmatpush2.msra.mxu0 0.0
    %3603 = vmatprep.subr.mxu0 0.0
    %3604 = vmatpush2.msra.mxu0 0.0
    %3605 = vmatprep.subr.mxu0 0.0
    %3606 = vmatpush2.msra.mxu0 0.0
    %3607 = vmatprep.subr.mxu0 0.0
    %3608 = vmatpush2.msra.mxu0 0.0
    %3609 = vmatprep.mubr.f32.mxu0 0.0
    %3610 = vmatmul.mubr.f32.gmra.mxu0 %v3543
    %v3611 = vpop.f32.mrf.mxu0
    %v3612 = vadd.f32 %v3530, %v3611
    %v3613 = vpop.f32.mrf.mxu0
    %v3614 = vadd.f32 %v3534, %v3613
    %3615 = vdwg.mxu0
    %3616 = vmatprep.subr.mxu0 0.0
    %3617 = vmatpush1.msra.mxu0 0.0
    %3618 = vmatprep.subr.mxu0 0.0
    %3619 = vmatpush1.msra.mxu0 0.0
    %3620 = vmatprep.subr.mxu0 0.0
    %3621 = vmatpush1.msra.mxu0 0.0
    %3622 = vmatprep.subr.mxu0 0.0
    %3623 = vmatpush1.msra.mxu0 0.0
    %3624 = vmatprep.subr.mxu0 0.0
    %3625 = vmatpush1.msra.mxu0 0.0
    %3626 = vmatprep.subr.mxu0 0.0
    %3627 = vmatpush1.msra.mxu0 0.0
    %3628 = vmatprep.subr.mxu0 0.0
    %3629 = vmatpush1.msra.mxu0 0.0
    %3630 = vmatprep.subr.mxu0 0.0
    %3631 = vmatpush1.msra.mxu0 0.0
    %3632 = vmatprep.subr.mxu0 0.0
    %3633 = vmatpush1.msra.mxu0 0.0
    %3634 = vmatprep.subr.mxu0 0.0
    %3635 = vmatpush1.msra.mxu0 0.0
    %3636 = vmatprep.subr.mxu0 0.0
    %3637 = vmatpush1.msra.mxu0 0.0
    %3638 = vmatprep.subr.mxu0 0.0
    %3639 = vmatpush1.msra.mxu0 0.0
    %3640 = vmatprep.subr.mxu0 0.0
    %3641 = vmatpush1.msra.mxu0 %v3524
    %3642 = vmatprep.subr.mxu0 0.0
    %3643 = vmatpush1.msra.mxu0 %v3521
    %3644 = vmatprep.subr.mxu0 0.0
    %3645 = vmatpush1.msra.mxu0 %v3518
    %3646 = vmatprep.subr.mxu0 0.0
    %3647 = vmatpush1.msra.mxu0 %v3515
    %3648 = vmatprep.subr.mxu0 0.0
    %3649 = vmatpush2.msra.mxu0 0.0
    %3650 = vmatprep.subr.mxu0 0.0
    %3651 = vmatpush2.msra.mxu0 0.0
    %3652 = vmatprep.subr.mxu0 0.0
    %3653 = vmatpush2.msra.mxu0 0.0
    %3654 = vmatprep.subr.mxu0 0.0
    %3655 = vmatpush2.msra.mxu0 0.0
    %3656 = vmatprep.subr.mxu0 0.0
    %3657 = vmatpush2.msra.mxu0 0.0
    %3658 = vmatprep.subr.mxu0 0.0
    %3659 = vmatpush2.msra.mxu0 0.0
    %3660 = vmatprep.subr.mxu0 0.0
    %3661 = vmatpush2.msra.mxu0 0.0
    %3662 = vmatprep.subr.mxu0 0.0
    %3663 = vmatpush2.msra.mxu0 0.0
    %3664 = vmatprep.subr.mxu0 0.0
    %3665 = vmatpush2.msra.mxu0 0.0
    %3666 = vmatprep.subr.mxu0 0.0
    %3667 = vmatpush2.msra.mxu0 0.0
    %3668 = vmatprep.subr.mxu0 0.0
    %3669 = vmatpush2.msra.mxu0 0.0
    %3670 = vmatprep.subr.mxu0 0.0
    %3671 = vmatpush2.msra.mxu0 0.0
    %3672 = vmatprep.subr.mxu0 0.0
    %3673 = vmatpush2.msra.mxu0 0.0
    %3674 = vmatprep.subr.mxu0 0.0
    %3675 = vmatpush2.msra.mxu0 0.0
    %3676 = vmatprep.subr.mxu0 0.0
    %3677 = vmatpush2.msra.mxu0 0.0
    %3678 = vmatprep.subr.mxu0 0.0
    %3679 = vmatpush2.msra.mxu0 0.0
    %3680 = vmatprep.mubr.f32.mxu0 0.0
    %3681 = vmatmul.mubr.f32.gmra.mxu0 %v3543
    %v3682 = vpop.f32.mrf.mxu0
    %v3683 = vadd.f32 %v3538, %v3682
    %v3684 = vpop.f32.mrf.mxu0
    %3685 = vdwg.mxu0
    %v3686 = vld [vmem:[#allocation2] sm:$0xff]
    %v3687 = vld [vmem:[#allocation2 + $0x8] sm:$0xff]
    %v3688 = vld [vmem:[#allocation2 + $0x10] sm:$0xff]
    %v3689 = vld [vmem:[#allocation2 + $0x18] sm:$0xff]
    %v3690 = vld [vmem:[#allocation2 + $0x20] sm:$0xff]
    %v3691 = vld [vmem:[#allocation2 + $0x28] sm:$0xff]
    %v3692 = vld [vmem:[#allocation2 + $0x30] sm:$0xff]
    %v3693 = vld [vmem:[#allocation2 + $0x38] sm:$0xff]
    %v3694 = vld [vmem:[#allocation2 + $0x40] sm:$0xff]
    %v3695 = vld [vmem:[#allocation2 + $0x48] sm:$0xff]
    %v3696 = vld [vmem:[#allocation2 + $0x50] sm:$0xff]
    %v3697 = vld [vmem:[#allocation2 + $0x58] sm:$0xff]
    %v3698 = vld [vmem:[#allocation2 + $0x60] sm:$0xff]
    %v3699 = vld [vmem:[#allocation2 + $0x68] sm:$0xff]
    %v3700 = vld [vmem:[#allocation2 + $0x70] sm:$0xff]
    %v3701 = vld [vmem:[#allocation2 + $0x78] sm:$0xff]
    %v3702 = vld [vmem:[#allocation2 + $0x80] sm:$0xff]
    %v3703 = vld [vmem:[#allocation2 + $0x88] sm:$0xff]
    %v3704 = vld [vmem:[#allocation2 + $0x90] sm:$0xff]
    %v3705 = vld [vmem:[#allocation2 + $0x98] sm:$0xff]
    %v3706 = vld [vmem:[#allocation2 + $0xa0] sm:$0xff]
    %v3707 = vld [vmem:[#allocation2 + $0xa8] sm:$0xff]
    %v3708 = vld [vmem:[#allocation2 + $0xb0] sm:$0xff]
    %v3709 = vld [vmem:[#allocation2 + $0xb8] sm:$0xff]
    %v3710 = vld [vmem:[#allocation2 + $0xc0] sm:$0xff]
    %v3711 = vld [vmem:[#allocation2 + $0xc8] sm:$0xff]
    %v3712 = vld [vmem:[#allocation2 + $0xd0] sm:$0xff]
    %v3713 = vld [vmem:[#allocation2 + $0xd8] sm:$0xff]
    %v3714 = vld [vmem:[#allocation2 + $0xe0] sm:$0xff]
    %v3715 = vld [vmem:[#allocation2 + $0xe8] sm:$0xff]
    %v3716 = vld [vmem:[#allocation2 + $0xf0] sm:$0xff]
    %v3717 = vld [vmem:[#allocation2 + $0xf8] sm:$0xff]
    %v3718 = vld [vmem:[#allocation2 + $0x100] sm:$0xff]
    %v3719 = vld [vmem:[#allocation2 + $0x108] sm:$0xff]
    %v3720 = vld [vmem:[#allocation2 + $0x110] sm:$0xff]
    %v3721 = vld [vmem:[#allocation2 + $0x118] sm:$0xff]
    %v3722 = vld [vmem:[#allocation2 + $0x120] sm:$0xff]
    %v3723 = vld [vmem:[#allocation2 + $0x128] sm:$0xff]
    %v3724 = vld [vmem:[#allocation2 + $0x130] sm:$0xff]
    %v3725 = vld [vmem:[#allocation2 + $0x138] sm:$0xff]
    %v3726 = vld [vmem:[#allocation2 + $0x140] sm:$0xff]
    %v3727 = vld [vmem:[#allocation2 + $0x148] sm:$0xff]
    %v3728 = vld [vmem:[#allocation2 + $0x150] sm:$0xff]
    %v3729 = vld [vmem:[#allocation2 + $0x158] sm:$0xff]
    %v3730 = vld [vmem:[#allocation2 + $0x160] sm:$0xff]
    %v3731 = vld [vmem:[#allocation2 + $0x168] sm:$0xff]
    %v3732 = vld [vmem:[#allocation2 + $0x170] sm:$0xff]
    %v3733 = vld [vmem:[#allocation2 + $0x178] sm:$0xff]
    %v3734 = vld [vmem:[%s5] sm:$0x7]
    %v3736 = vlaneseq
    %v3737 = vshrl.u32 %v3736, 7
    %v3738 = vsub.s32 0, %v3737
    %v3739 = vrot.slane %v3734, %v3738
    %v3740 = vlaneseq
    %v3741 = vshrl.u32 %v3740, 7
    %v3742 = vsub.s32 1, %v3741
    %v3743 = vrot.slane %v3734, %v3742
    %v3744 = vlaneseq
    %v3745 = vshrl.u32 %v3744, 7
    %v3746 = vsub.s32 2, %v3745
    %v3747 = vrot.slane %v3734, %v3746
    %3751 = vmatprep.subr.mxu0 %v3732
    %3752 = vmatpush1.msra.mxu0 %v3731
    %3753 = vmatprep.subr.mxu0 %v3729
    %3754 = vmatpush1.msra.mxu0 %v3728
    %3755 = vmatprep.subr.mxu0 %v3726
    %3756 = vmatpush1.msra.mxu0 %v3725
    %3757 = vmatprep.subr.mxu0 %v3723
    %3758 = vmatpush1.msra.mxu0 %v3722
    %3759 = vmatprep.subr.mxu0 %v3720
    %3760 = vmatpush1.msra.mxu0 %v3719
    %3761 = vmatprep.subr.mxu0 %v3717
    %3762 = vmatpush1.msra.mxu0 %v3716
    %3763 = vmatprep.subr.mxu0 %v3714
    %3764 = vmatpush1.msra.mxu0 %v3713
    %3765 = vmatprep.subr.mxu0 %v3711
    %3766 = vmatpush1.msra.mxu0 %v3710
    %3767 = vmatprep.subr.mxu0 %v3708
    %3768 = vmatpush1.msra.mxu0 %v3707
    %3769 = vmatprep.subr.mxu0 %v3705
    %3770 = vmatpush1.msra.mxu0 %v3704
    %3771 = vmatprep.subr.mxu0 %v3702
    %3772 = vmatpush1.msra.mxu0 %v3701
    %3773 = vmatprep.subr.mxu0 %v3699
    %3774 = vmatpush1.msra.mxu0 %v3698
    %3775 = vmatprep.subr.mxu0 %v3696
    %3776 = vmatpush1.msra.mxu0 %v3695
    %3777 = vmatprep.subr.mxu0 %v3693
    %3778 = vmatpush1.msra.mxu0 %v3692
    %3779 = vmatprep.subr.mxu0 %v3690
    %3780 = vmatpush1.msra.mxu0 %v3689
    %3781 = vmatprep.subr.mxu0 %v3687
    %3782 = vmatpush1.msra.mxu0 %v3686
    %3783 = vmatprep.subr.mxu0 0.0
    %3784 = vmatpush2.msra.mxu0 0.0
    %3785 = vmatprep.subr.mxu0 0.0
    %3786 = vmatpush2.msra.mxu0 0.0
    %3787 = vmatprep.subr.mxu0 0.0
    %3788 = vmatpush2.msra.mxu0 0.0
    %3789 = vmatprep.subr.mxu0 0.0
    %3790 = vmatpush2.msra.mxu0 0.0
    %3791 = vmatprep.subr.mxu0 0.0
    %3792 = vmatpush2.msra.mxu0 0.0
    %3793 = vmatprep.subr.mxu0 0.0
    %3794 = vmatpush2.msra.mxu0 0.0
    %3795 = vmatprep.subr.mxu0 0.0
    %3796 = vmatpush2.msra.mxu0 0.0
    %3797 = vmatprep.subr.mxu0 0.0
    %3798 = vmatpush2.msra.mxu0 0.0
    %3799 = vmatprep.subr.mxu0 0.0
    %3800 = vmatpush2.msra.mxu0 0.0
    %3801 = vmatprep.subr.mxu0 0.0
    %3802 = vmatpush2.msra.mxu0 0.0
    %3803 = vmatprep.subr.mxu0 0.0
    %3804 = vmatpush2.msra.mxu0 0.0
    %3805 = vmatprep.subr.mxu0 0.0
    %3806 = vmatpush2.msra.mxu0 0.0
    %3807 = vmatprep.subr.mxu0 0.0
    %3808 = vmatpush2.msra.mxu0 0.0
    %3809 = vmatprep.subr.mxu0 0.0
    %3810 = vmatpush2.msra.mxu0 0.0
    %3811 = vmatprep.subr.mxu0 0.0
    %3812 = vmatpush2.msra.mxu0 0.0
    %3813 = vmatprep.subr.mxu0 0.0
    %3814 = vmatpush2.msra.mxu0 0.0
    %3815 = vmatprep.mubr.f32.mxu0 0.0
    %3816 = vmatmul.mubr.f32.gmra.mxu0 %v3417
    %v3817 = vpop.f32.mrf.mxu0
    %v3818 = vadd.f32 %v3739, %v3817
    %v3819 = vpop.f32.mrf.mxu0
    %v3820 = vadd.f32 %v3743, %v3819
    %3821 = vdwg.mxu0
    %3822 = vmatprep.subr.mxu0 0.0
    %3823 = vmatpush1.msra.mxu0 %v3733
    %3824 = vmatprep.subr.mxu0 0.0
    %3825 = vmatpush1.msra.mxu0 %v3730
    %3826 = vmatprep.subr.mxu0 0.0
    %3827 = vmatpush1.msra.mxu0 %v3727
    %3828 = vmatprep.subr.mxu0 0.0
    %3829 = vmatpush1.msra.mxu0 %v3724
    %3830 = vmatprep.subr.mxu0 0.0
    %3831 = vmatpush1.msra.mxu0 %v3721
    %3832 = vmatprep.subr.mxu0 0.0
    %3833 = vmatpush1.msra.mxu0 %v3718
    %3834 = vmatprep.subr.mxu0 0.0
    %3835 = vmatpush1.msra.mxu0 %v3715
    %3836 = vmatprep.subr.mxu0 0.0
    %3837 = vmatpush1.msra.mxu0 %v3712
    %3838 = vmatprep.subr.mxu0 0.0
    %3839 = vmatpush1.msra.mxu0 %v3709
    %3840 = vmatprep.subr.mxu0 0.0
    %3841 = vmatpush1.msra.mxu0 %v3706
    %3842 = vmatprep.subr.mxu0 0.0
    %3843 = vmatpush1.msra.mxu0 %v3703
    %3844 = vmatprep.subr.mxu0 0.0
    %3845 = vmatpush1.msra.mxu0 %v3700
    %3846 = vmatprep.subr.mxu0 0.0
    %3847 = vmatpush1.msra.mxu0 %v3697
    %3848 = vmatprep.subr.mxu0 0.0
    %3849 = vmatpush1.msra.mxu0 %v3694
    %3850 = vmatprep.subr.mxu0 0.0
    %3851 = vmatpush1.msra.mxu0 %v3691
    %3852 = vmatprep.subr.mxu0 0.0
    %3853 = vmatpush1.msra.mxu0 %v3688
    %3854 = vmatprep.subr.mxu0 0.0
    %3855 = vmatpush2.msra.mxu0 0.0
    %3856 = vmatprep.subr.mxu0 0.0
    %3857 = vmatpush2.msra.mxu0 0.0
    %3858 = vmatprep.subr.mxu0 0.0
    %3859 = vmatpush2.msra.mxu0 0.0
    %3860 = vmatprep.subr.mxu0 0.0
    %3861 = vmatpush2.msra.mxu0 0.0
    %3862 = vmatprep.subr.mxu0 0.0
    %3863 = vmatpush2.msra.mxu0 0.0
    %3864 = vmatprep.subr.mxu0 0.0
    %3865 = vmatpush2.msra.mxu0 0.0
    %3866 = vmatprep.subr.mxu0 0.0
    %3867 = vmatpush2.msra.mxu0 0.0
    %3868 = vmatprep.subr.mxu0 0.0
    %3869 = vmatpush2.msra.mxu0 0.0
    %3870 = vmatprep.subr.mxu0 0.0
    %3871 = vmatpush2.msra.mxu0 0.0
    %3872 = vmatprep.subr.mxu0 0.0
    %3873 = vmatpush2.msra.mxu0 0.0
    %3874 = vmatprep.subr.mxu0 0.0
    %3875 = vmatpush2.msra.mxu0 0.0
    %3876 = vmatprep.subr.mxu0 0.0
    %3877 = vmatpush2.msra.mxu0 0.0
    %3878 = vmatprep.subr.mxu0 0.0
    %3879 = vmatpush2.msra.mxu0 0.0
    %3880 = vmatprep.subr.mxu0 0.0
    %3881 = vmatpush2.msra.mxu0 0.0
    %3882 = vmatprep.subr.mxu0 0.0
    %3883 = vmatpush2.msra.mxu0 0.0
    %3884 = vmatprep.subr.mxu0 0.0
    %3885 = vmatpush2.msra.mxu0 0.0
    %3886 = vmatprep.mubr.f32.mxu0 0.0
    %3887 = vmatmul.mubr.f32.gmra.mxu0 %v3417
    %v3888 = vpop.f32.mrf.mxu0
    %v3889 = vadd.f32 %v3747, %v3888
    %v3890 = vpop.f32.mrf.mxu0
    %3891 = vdwg.mxu0
    %v3892 = vadd.f32 %v3612, %v3818
    %v3893 = vxor.u32 %v3892, 2147483648
    %v3894 = vmul.f32 %v3893, 1.442695
    %v3895 = vpow.pop %v3894
    %v3896 = vadd.f32 %v3895, 1.0
    %v3897 = vrcp.pop %v3896
    %v3898 = vmul.f32 1.0, %v3897
    %v3899 = vadd.f32 %v3614, %v3820
    %v3900 = vxor.u32 %v3899, 2147483648
    %v3901 = vmul.f32 %v3900, 1.442695
    %v3902 = vpow.pop %v3901
    %v3903 = vadd.f32 %v3902, 1.0
    %v3904 = vrcp.pop %v3903
    %v3905 = vmul.f32 1.0, %v3904
    %v3906 = vmul.f32 %v3898, %v3889
    %v3907 = vadd.f32 %v3683, %v3906
    %v3908 = vtanh.pop %v3907
    %v3909 = vsub.f32 1.0, %v3905
    %v3910 = vmul.f32 %v3909, %v3908
    %v3911 = vmul.f32 %v3905, %v3417
    %v3912 = vadd.f32 %v3910, %v3911
    %v3913 = vld [vmem:[%s6] sm:$0xff]
    %v3914 = vld [vmem:[%s6 + $0x8] sm:$0xff]
    %v3915 = vld [vmem:[%s6 + $0x10] sm:$0xff]
    %v3916 = vld [vmem:[%s6 + $0x18] sm:$0xff]
    %v3917 = vld [vmem:[%s6 + $0x20] sm:$0xff]
    %v3918 = vld [vmem:[%s6 + $0x28] sm:$0xff]
    %v3919 = vld [vmem:[%s6 + $0x30] sm:$0xff]
    %v3920 = vld [vmem:[%s6 + $0x38] sm:$0xff]
    %v3921 = vld [vmem:[%s6 + $0x40] sm:$0xff]
    %v3922 = vld [vmem:[%s6 + $0x48] sm:$0xff]
    %v3923 = vld [vmem:[%s6 + $0x50] sm:$0xff]
    %v3924 = vld [vmem:[%s6 + $0x58] sm:$0xff]
    %v3925 = vld [vmem:[%s6 + $0x60] sm:$0xff]
    %v3926 = vld [vmem:[%s6 + $0x68] sm:$0xff]
    %v3927 = vld [vmem:[%s6 + $0x70] sm:$0xff]
    %v3928 = vld [vmem:[%s6 + $0x78] sm:$0xff]
    %v3929 = vld [vmem:[%s7] sm:$0x1]
    %v3931 = vlaneseq
    %v3932 = vshrl.u32 %v3931, 7
    %v3933 = vsub.s32 0, %v3932
    %v3934 = vrot.slane %v3929, %v3933
    %3936 = vmatprep.subr.mxu0 0.0
    %3937 = vmatpush1.msra.mxu0 %v3928
    %3938 = vmatprep.subr.mxu0 0.0
    %3939 = vmatpush1.msra.mxu0 %v3927
    %3940 = vmatprep.subr.mxu0 0.0
    %3941 = vmatpush1.msra.mxu0 %v3926
    %3942 = vmatprep.subr.mxu0 0.0
    %3943 = vmatpush1.msra.mxu0 %v3925
    %3944 = vmatprep.subr.mxu0 0.0
    %3945 = vmatpush1.msra.mxu0 %v3924
    %3946 = vmatprep.subr.mxu0 0.0
    %3947 = vmatpush1.msra.mxu0 %v3923
    %3948 = vmatprep.subr.mxu0 0.0
    %3949 = vmatpush1.msra.mxu0 %v3922
    %3950 = vmatprep.subr.mxu0 0.0
    %3951 = vmatpush1.msra.mxu0 %v3921
    %3952 = vmatprep.subr.mxu0 0.0
    %3953 = vmatpush1.msra.mxu0 %v3920
    %3954 = vmatprep.subr.mxu0 0.0
    %3955 = vmatpush1.msra.mxu0 %v3919
    %3956 = vmatprep.subr.mxu0 0.0
    %3957 = vmatpush1.msra.mxu0 %v3918
    %3958 = vmatprep.subr.mxu0 0.0
    %3959 = vmatpush1.msra.mxu0 %v3917
    %3960 = vmatprep.subr.mxu0 0.0
    %3961 = vmatpush1.msra.mxu0 %v3916
    %3962 = vmatprep.subr.mxu0 0.0
    %3963 = vmatpush1.msra.mxu0 %v3915
    %3964 = vmatprep.subr.mxu0 0.0
    %3965 = vmatpush1.msra.mxu0 %v3914
    %3966 = vmatprep.subr.mxu0 0.0
    %3967 = vmatpush1.msra.mxu0 %v3913
    %3968 = vmatprep.subr.mxu0 0.0
    %3969 = vmatpush2.msra.mxu0 0.0
    %3970 = vmatprep.subr.mxu0 0.0
    %3971 = vmatpush2.msra.mxu0 0.0
    %3972 = vmatprep.subr.mxu0 0.0
    %3973 = vmatpush2.msra.mxu0 0.0
    %3974 = vmatprep.subr.mxu0 0.0
    %3975 = vmatpush2.msra.mxu0 0.0
    %3976 = vmatprep.subr.mxu0 0.0
    %3977 = vmatpush2.msra.mxu0 0.0
    %3978 = vmatprep.subr.mxu0 0.0
    %3979 = vmatpush2.msra.mxu0 0.0
    %3980 = vmatprep.subr.mxu0 0.0
    %3981 = vmatpush2.msra.mxu0 0.0
    %3982 = vmatprep.subr.mxu0 0.0
    %3983 = vmatpush2.msra.mxu0 0.0
    %3984 = vmatprep.subr.mxu0 0.0
    %3985 = vmatpush2.msra.mxu0 0.0
    %3986 = vmatprep.subr.mxu0 0.0
    %3987 = vmatpush2.msra.mxu0 0.0
    %3988 = vmatprep.subr.mxu0 0.0
    %3989 = vmatpush2.msra.mxu0 0.0
    %3990 = vmatprep.subr.mxu0 0.0
    %3991 = vmatpush2.msra.mxu0 0.0
    %3992 = vmatprep.subr.mxu0 0.0
    %3993 = vmatpush2.msra.mxu0 0.0
    %3994 = vmatprep.subr.mxu0 0.0
    %3995 = vmatpush2.msra.mxu0 0.0
    %3996 = vmatprep.subr.mxu0 0.0
    %3997 = vmatpush2.msra.mxu0 0.0
    %3998 = vmatprep.subr.mxu0 0.0
    %3999 = vmatpush2.msra.mxu0 0.0
    %4000 = vmatprep.mubr.f32.mxu0 0.0
    %4001 = vmatmul.mubr.f32.gmra.mxu0 %v3912
    %v4002 = vpop.f32.mrf.mxu0
    %v4003 = vadd.f32 %v3934, %v4002
    %v4004 = vpop.f32.mrf.mxu0
    %4005 = vdwg.mxu0
    %4006 = vst.msk [vmem:[#allocation5] sm:$0x3] %vm541, %v4003
    // Predicated region
    $region38: #{tpu_custom_call.1} parent=1 // pred_check
      _
    $region39: #{tpu_custom_call.1} parent=1 // pred_check_branch
      %4008 = sbr.rel (0) target = $region41
    $region40: #{tpu_custom_call.1} parent=1 // pred_region
      %s4010 = ssub.s32 256, 256
      %4011 = vsyncadd [#allocation4], %s4010
      %s4012 = sshll.u32 [#allocation5], 4
      %s4013 = int_to_ptr.vmem [resolvable:$true] %s4012
      %4018 = dma.vmem_to_hbm [thread:$0]  %s4013, 256, %s8, [#allocation4], 32, 32, 2
    $region41: #{tpu_custom_call.1} parent=1 // pred_fallthru
      _
    // Predicated region
    $region42: #{tpu_custom_call.1} parent=1 // pred_check
      _
    $region43: #{tpu_custom_call.1} parent=1 // pred_check_branch
      %4020 = sbr.rel (0) target = $region45
    $region44: #{tpu_custom_call.1} parent=1 // pred_region
      %4021 = dma.done [#allocation4], 256
    $region45: #{tpu_custom_call.1} parent=1 // pred_fallthru
      _
    %4022 = vsyncpa [#allocation3], 1
    %4023 = vsyncpa [#allocation4], 1

</llo_original>
